<compile_context>
chip_gen: v6e
topology: v6e:2x2x1
jax: 0.10.0
libtpu: 0.0.40
codegen_flags: <defaults>
</compile_context>

<pallas_src>
import functools
import math

import jax
import jax.numpy as jnp
from jax.experimental import pallas as pl
from jax.experimental.pallas import tpu as pltpu


MATMUL_DTYPE = jnp.bfloat16            # MXU input dtype (f32 accumulation)


@functools.lru_cache(maxsize=None)
def _vmem_limit():
    """Generation-aware VMEM budget: ~3/4 of physical VMEM, capped at 100 MiB
    (v5e/v6e have 128 MiB, v7x has 64 MiB per TensorCore)."""
    try:
        cap = int(pltpu.get_tpu_info().vmem_capacity_bytes)
        return max(32 * 1024 * 1024, min((cap * 3) // 4, 100 * 1024 * 1024))
    except Exception:
        return 64 * 1024 * 1024


def _pick_tile(dim, target, align):
    """Largest tile <= target that is a multiple of `align` and divides dim,
    falling back to the full dimension (always legal per the (8,128) rule)."""
    if dim <= target:
        return dim
    t = (target // align) * align
    while t >= align:
        if dim % t == 0:
            return t
        t -= align
    return dim


# ----------------------------- Pallas kernels ------------------------------

def _layernorm_f32(x, g, b):
    mu = jnp.mean(x, axis=-1, keepdims=True)
    var = jnp.mean((x - mu) ** 2, axis=-1, keepdims=True)
    return (x - mu) * jax.lax.rsqrt(var + 1e-5) * g + b


def _gelu_tanh_f32(x):
    # GELU(tanh) kept in f32 for cross-generation safety (v5e has no bf16 VPU/EUP).
    c = 0.7978845608028654  # sqrt(2/pi)
    return 0.5 * x * (1.0 + jnp.tanh(c * (x + 0.044715 * x * x * x)))


def _ln_qkv_kernel(x_ref, g_ref, b_ref, wq_ref, wk_ref, wv_ref,
                   bq_ref, bk_ref, bv_ref, q_ref, k_ref, v_ref):
    # q/k/v = LayerNorm(x) @ W{q,k,v} + b{q,k,v}; LN in f32, bf16 MXU, bf16 out.
    h = _layernorm_f32(x_ref[...], g_ref[...], b_ref[...]).astype(MATMUL_DTYPE)
    q_ref[...] = (jnp.dot(h, wq_ref[...], preferred_element_type=jnp.float32)
                  + bq_ref[...]).astype(q_ref.dtype)
    k_ref[...] = (jnp.dot(h, wk_ref[...], preferred_element_type=jnp.float32)
                  + bk_ref[...]).astype(k_ref.dtype)
    v_ref[...] = (jnp.dot(h, wv_ref[...], preferred_element_type=jnp.float32)
                  + bv_ref[...]).astype(v_ref.dtype)


def _flash_attn_kernel(q_ref, k_ref, v_ref, o_ref, m_sc, l_sc, acc_sc,
                       *, scale, n_head, head_dim, tq, tk):
    # grid axes: (batch, q-tile, kv-tile); kv-tile is the reduction axis.
    # q/k/v/o blocks are (tile, C) in the (B*T, C) layout; heads are unrolled.
    i = pl.program_id(1)
    j = pl.program_id(2)

    @pl.when(j == 0)
    def _():
        m_sc[...] = jnp.full(m_sc.shape, -1e30, jnp.float32)
        l_sc[...] = jnp.zeros(l_sc.shape, jnp.float32)
        acc_sc[...] = jnp.zeros(acc_sc.shape, jnp.float32)

    def attend(masked):
        if masked:
            # tq == tk and j == i => in-tile lower-triangular mask.
            row = jax.lax.broadcasted_iota(jnp.int32, (tq, tk), 0)
            col = jax.lax.broadcasted_iota(jnp.int32, (tq, tk), 1)
            keep = col <= row
        for h in range(n_head):
            lo, hi = h * head_dim, (h + 1) * head_dim
            s = jax.lax.dot_general(
                q_ref[:, lo:hi], k_ref[:, lo:hi],
                dimension_numbers=(((1,), (1,)), ((), ())),
                preferred_element_type=jnp.float32) * scale
            if masked:
                s = jnp.where(keep, s, -1e30)
            m_prev = m_sc[h]
            m_new = jnp.maximum(m_prev, jnp.max(s, axis=-1, keepdims=True))
            alpha = jnp.exp(m_prev - m_new)
            p = jnp.exp(s - m_new)
            l_sc[h] = alpha * l_sc[h] + jnp.sum(p, axis=-1, keepdims=True)
            acc_sc[h] = alpha * acc_sc[h] + jnp.dot(
                p.astype(MATMUL_DTYPE), v_ref[:, lo:hi],
                preferred_element_type=jnp.float32)
            m_sc[h] = m_new

    # Fully below the diagonal: no mask work (saves iota + select VALU work).
    @pl.when(j < i)
    def _():
        attend(masked=False)

    # Diagonal-crossing tile: apply the triangular mask.
    @pl.when(j == i)
    def _():
        attend(masked=True)

    # Tiles with j > i are entirely in the causal future and are skipped.

    @pl.when(j == pl.num_programs(2) - 1)
    def _():
        parts = [acc_sc[h] * pl.reciprocal(l_sc[h], approx=True)
                 for h in range(n_head)]
        # One lane-dense full-width store of the merged heads in (B*T, C) layout.
        o_ref[...] = jnp.concatenate(parts, axis=-1).astype(o_ref.dtype)


def _proj_residual_kernel(y_ref, w_ref, bias_ref, res_ref, o_ref):
    # o = res + y @ W + bias  (y, W already bf16; f32 accumulation)
    o_ref[...] = (jnp.dot(y_ref[...], w_ref[...],
                          preferred_element_type=jnp.float32)
                  + bias_ref[...] + res_ref[...])


def _ln_mlp_residual_kernel(x_ref, g_ref, b_ref, w1_ref, b1_ref,
                            w2_ref, b2_ref, o_ref, ln_sc, acc_sc):
    # grid axes: (token-tile, hidden-tile); hidden is the reduction axis.
    # o = x + GELU_tanh(LayerNorm(x) @ W1 + b1) @ W2 + b2, hidden-dim tiled.
    kstep = pl.program_id(1)

    @pl.when(kstep == 0)
    def _():
        ln_sc[...] = _layernorm_f32(
            x_ref[...], g_ref[...], b_ref[...]).astype(MATMUL_DTYPE)
        acc_sc[...] = jnp.zeros(acc_sc.shape, jnp.float32)

    h1 = (jnp.dot(ln_sc[...], w1_ref[...], preferred_element_type=jnp.float32)
          + b1_ref[...])
    h1 = _gelu_tanh_f32(h1)
    acc_sc[...] += jnp.dot(h1.astype(MATMUL_DTYPE), w2_ref[...],
                           preferred_element_type=jnp.float32)

    @pl.when(kstep == pl.num_programs(1) - 1)
    def _():
        o_ref[...] = x_ref[...] + acc_sc[...] + b2_ref[...]


def _ln_lmhead_kernel(x_ref, g_ref, b_ref, wte_ref, o_ref, ln_sc):
    # o = LayerNorm(x) @ wte.T; LN(x) cached across the vocab-tile sweep.
    @pl.when(pl.program_id(1) == 0)
    def _():
        ln_sc[...] = _layernorm_f32(
            x_ref[...], g_ref[...], b_ref[...]).astype(MATMUL_DTYPE)
    o_ref[...] = jax.lax.dot_general(
        ln_sc[...], wte_ref[...],
        dimension_numbers=(((1,), (1,)), ((), ())),
        preferred_element_type=jnp.float32)


# ----------------------------- kernel wrappers ------------------------------

def ln_qkv(x, g, b, wq, wk, wv, bq, bk, bv):
    m, c = x.shape
    tm = _pick_tile(m, 512, 8)
    vec_spec = pl.BlockSpec((1, c), lambda i: (0, 0))
    w_spec = pl.BlockSpec((c, c), lambda i: (0, 0))
    row_spec = pl.BlockSpec((tm, c), lambda i: (i, 0))
    cost = pl.CostEstimate(flops=2 * m * c * 3 * c, transcendentals=m,
                           bytes_accessed=4 * m * c + 2 * 3 * c * c + 2 * 3 * m * c)
    return pl.pallas_call(
        _ln_qkv_kernel,
        out_shape=(jax.ShapeDtypeStruct((m, c), MATMUL_DTYPE),) * 3,
        grid=(m // tm,),
        in_specs=[row_spec, vec_spec, vec_spec, w_spec, w_spec, w_spec,
                  vec_spec, vec_spec, vec_spec],
        out_specs=(row_spec, row_spec, row_spec),
        compiler_params=pltpu.CompilerParams(
            dimension_semantics=("parallel",),
            vmem_limit_bytes=_vmem_limit()),
        cost_estimate=cost,
    )(x, g.reshape(1, c), b.reshape(1, c), wq, wk, wv,
      bq.reshape(1, c), bk.reshape(1, c), bv.reshape(1, c))


def causal_flash_attention(q, k, v, *, batch, seq, n_head):
    m, c = q.shape                       # m == batch * seq
    hd = c // n_head
    tq = _pick_tile(seq, 512, 8)
    tk = tq                              # equal tiles => diagonal tile is j == i
    qb = seq // tq
    scale = 1.0 / math.sqrt(hd)
    kern = functools.partial(_flash_attn_kernel, scale=scale, n_head=n_head,
                             head_dim=hd, tq=tq, tk=tk)
    cost = pl.CostEstimate(flops=2 * m * seq * c,          # causal ~halves 4*m*T*C
                           transcendentals=m * seq,
                           bytes_accessed=2 * 4 * m * c)
    q_spec = pl.BlockSpec((tq, c), lambda b, i, j: (b * qb + i, 0))
    kv_spec = pl.BlockSpec((tk, c), lambda b, i, j: (b * qb + j, 0))
    return pl.pallas_call(
        kern,
        out_shape=jax.ShapeDtypeStruct((m, c), MATMUL_DTYPE),
        grid=(batch, seq // tq, seq // tk),
        in_specs=[q_spec, kv_spec, kv_spec],
        out_specs=pl.BlockSpec((tq, c), lambda b, i, j: (b * qb + i, 0)),
        scratch_shapes=[
            pltpu.VMEM((n_head, tq, 1), jnp.float32),    # running max
            pltpu.VMEM((n_head, tq, 1), jnp.float32),    # running denom
            pltpu.VMEM((n_head, tq, hd), jnp.float32),   # output accumulator
        ],
        compiler_params=pltpu.CompilerParams(
            dimension_semantics=("parallel", "parallel", "arbitrary"),
            vmem_limit_bytes=_vmem_limit()),
        cost_estimate=cost,
    )(q, k, v)


def matmul_bias_residual(y, w, bias, res):
    m, kdim = y.shape
    n = w.shape[1]
    tm = _pick_tile(m, 512, 8)
    cost = pl.CostEstimate(flops=2 * m * kdim * n, transcendentals=0,
                           bytes_accessed=2 * m * kdim + 2 * kdim * n + 8 * m * n)
    return pl.pallas_call(
        _proj_residual_kernel,
        out_shape=jax.ShapeDtypeStruct((m, n), jnp.float32),
        grid=(m // tm,),
        in_specs=[
            pl.BlockSpec((tm, kdim), lambda i: (i, 0)),
            pl.BlockSpec((kdim, n), lambda i: (0, 0)),
            pl.BlockSpec((1, n), lambda i: (0, 0)),
            pl.BlockSpec((tm, n), lambda i: (i, 0)),
        ],
        out_specs=pl.BlockSpec((tm, n), lambda i: (i, 0)),
        compiler_params=pltpu.CompilerParams(
            dimension_semantics=("parallel",),
            vmem_limit_bytes=_vmem_limit()),
        cost_estimate=cost,
        input_output_aliases={3: 0},     # write residual stream in place
    )(y, w, bias.reshape(1, n), res)


def ln_mlp_residual(x, g, b, w1, b1, w2, b2):
    m, c = x.shape
    hdim = w1.shape[1]
    tm = _pick_tile(m, 512, 8)
    th = _pick_tile(hdim, 512, 128)      # hidden-dim tiling bounds VMEM on v7x
    cost = pl.CostEstimate(flops=4 * m * c * hdim, transcendentals=m * hdim,
                           bytes_accessed=8 * m * c + 4 * c * hdim)
    return pl.pallas_call(
        _ln_mlp_residual_kernel,
        out_shape=jax.ShapeDtypeStruct((m, c), jnp.float32),
        grid=(m // tm, hdim // th),
        in_specs=[
            pl.BlockSpec((tm, c), lambda i, k: (i, 0)),
            pl.BlockSpec((1, c), lambda i, k: (0, 0)),
            pl.BlockSpec((1, c), lambda i, k: (0, 0)),
            pl.BlockSpec((c, th), lambda i, k: (0, k)),
            pl.BlockSpec((1, th), lambda i, k: (0, k)),
            pl.BlockSpec((th, c), lambda i, k: (k, 0)),
            pl.BlockSpec((1, c), lambda i, k: (0, 0)),
        ],
        out_specs=pl.BlockSpec((tm, c), lambda i, k: (i, 0)),
        scratch_shapes=[pltpu.VMEM((tm, c), MATMUL_DTYPE),   # cached LN(x)
                        pltpu.VMEM((tm, c), jnp.float32)],   # f32 accumulator
        compiler_params=pltpu.CompilerParams(
            dimension_semantics=("parallel", "arbitrary"),
            vmem_limit_bytes=_vmem_limit()),
        cost_estimate=cost,
    )(x, g.reshape(1, c), b.reshape(1, c), w1, b1.reshape(1, hdim), w2,
      b2.reshape(1, c))


def ln_lmhead(x, g, b, wte_lm):
    # wte_lm: (vocab_padded, C) bf16, vocab already padded to a multiple of 128.
    m, c = x.shape
    v_pad = wte_lm.shape[0]
    tm = _pick_tile(m, 512, 8)
    tn = _pick_tile(v_pad, 512, 128)
    cost = pl.CostEstimate(flops=2 * m * c * v_pad, transcendentals=m,
                           bytes_accessed=4 * m * c + 2 * c * v_pad + 4 * m * v_pad)
    return pl.pallas_call(
        _ln_lmhead_kernel,
        out_shape=jax.ShapeDtypeStruct((m, v_pad), jnp.float32),
        grid=(m // tm, v_pad // tn),
        in_specs=[
            pl.BlockSpec((tm, c), lambda i, j: (i, 0)),
            pl.BlockSpec((1, c), lambda i, j: (0, 0)),
            pl.BlockSpec((1, c), lambda i, j: (0, 0)),
            pl.BlockSpec((tn, c), lambda i, j: (j, 0)),   # tied wte, untransposed
        ],
        out_specs=pl.BlockSpec((tm, tn), lambda i, j: (i, j)),
        scratch_shapes=[pltpu.VMEM((tm, c), MATMUL_DTYPE)],  # cached LN(x)
        compiler_params=pltpu.CompilerParams(
            dimension_semantics=("parallel", "arbitrary"),
            vmem_limit_bytes=_vmem_limit()),
        cost_estimate=cost,
    )(x, g.reshape(1, c), b.reshape(1, c), wte_lm)


# ------------------------------- GPT model ----------------------------------

class GPTConfig:
    def __init__(self, block_size=16, vocab_size=256, n_layer=2, n_head=2,
                 n_embd=32):
        self.block_size = block_size
        self.vocab_size = vocab_size
        self.n_layer = n_layer
        self.n_head = n_head
        self.n_embd = n_embd


def init_params(cfg, key):
    """f32 'master' parameters, matching the PyTorch module's init scheme."""
    std = 0.02
    proj_std = 0.02 * (2 * cfg.n_layer) ** -0.5
    keys = iter(jax.random.split(key, 8 + 8 * cfg.n_layer))

    def nrm(shape, s):
        return (s * jax.random.normal(next(keys), shape)).astype(jnp.float32)

    params = {
        # tied embedding / lm_head weight, stored once as (vocab, n_embd)
        "wte": nrm((cfg.vocab_size, cfg.n_embd), std),
        "wpe": nrm((cfg.block_size, cfg.n_embd), std),
        "ln_f_g": jnp.ones((cfg.n_embd,), jnp.float32),
        "ln_f_b": jnp.zeros((cfg.n_embd,), jnp.float32),
        "blocks": [],
    }
    for _ in range(cfg.n_layer):
        blk = {
            "ln1_g": jnp.ones((cfg.n_embd,), jnp.float32),
            "ln1_b": jnp.zeros((cfg.n_embd,), jnp.float32),
            "ln2_g": jnp.ones((cfg.n_embd,), jnp.float32),
            "ln2_b": jnp.zeros((cfg.n_embd,), jnp.float32),
            # stored as (in, out) so kernels compute x @ W + b
            "attn_w": nrm((cfg.n_embd, 3 * cfg.n_embd), std),
            "attn_b": jnp.zeros((3 * cfg.n_embd,), jnp.float32),
            "attn_proj_w": nrm((cfg.n_embd, cfg.n_embd), proj_std),
            "attn_proj_b": jnp.zeros((cfg.n_embd,), jnp.float32),
            "fc_w": nrm((cfg.n_embd, 4 * cfg.n_embd), std),
            "fc_b": jnp.zeros((4 * cfg.n_embd,), jnp.float32),
            "mlp_proj_w": nrm((4 * cfg.n_embd, cfg.n_embd), proj_std),
            "mlp_proj_b": jnp.zeros((cfg.n_embd,), jnp.float32),
        }
        params["blocks"].append(blk)
    return params


def prepare_params(params, cfg):
    """One-time conversion to the kernel-friendly layout: bf16 matmul weights,
    QKV weight/bias pre-split, tied lm_head weight vocab-padded to /128."""
    c = cfg.n_embd
    v = cfg.vocab_size
    v_pad = ((v + 127) // 128) * 128
    wte_lm = params["wte"].astype(MATMUL_DTYPE)
    if v_pad != v:
        wte_lm = jnp.pad(wte_lm, ((0, v_pad - v), (0, 0)))
    out = {
        "wte": params["wte"],            # f32 embedding table (gather)
        "wpe": params["wpe"],
        "ln_f_g": params["ln_f_g"],
        "ln_f_b": params["ln_f_b"],
        "wte_lm": wte_lm,                # bf16, vocab padded to multiple of 128
        "blocks": [],
    }
    for blk in params["blocks"]:
        aw = blk["attn_w"].astype(MATMUL_DTYPE)
        ab = blk["attn_b"]
        out["blocks"].append({
            "ln1_g": blk["ln1_g"], "ln1_b": blk["ln1_b"],
            "ln2_g": blk["ln2_g"], "ln2_b": blk["ln2_b"],
            "wq": aw[:, :c], "wk": aw[:, c:2 * c], "wv": aw[:, 2 * c:],
            "bq": ab[:c], "bk": ab[c:2 * c], "bv": ab[2 * c:],
            "attn_proj_w": blk["attn_proj_w"].astype(MATMUL_DTYPE),
            "attn_proj_b": blk["attn_proj_b"],
            "fc_w": blk["fc_w"].astype(MATMUL_DTYPE),
            "fc_b": blk["fc_b"],
            "mlp_proj_w": blk["mlp_proj_w"].astype(MATMUL_DTYPE),
            "mlp_proj_b": blk["mlp_proj_b"],
        })
    return out


def gpt_forward(params, idx, cfg):
    B, T = idx.shape
    C, nH = cfg.n_embd, cfg.n_head

    # embeddings (gather glue stays in plain JAX)
    tok_emb = params["wte"][idx]                     # (B, T, C)
    pos_emb = params["wpe"][:T]                      # (T, C)
    x = (tok_emb + pos_emb[None]).reshape(B * T, C)  # residual stream, f32

    for blk in params["blocks"]:
        # ---- attention sub-block: fused LN1 + QKV (bf16 q/k/v in (B*T,C)) ----
        q, k, v = ln_qkv(x, blk["ln1_g"], blk["ln1_b"],
                         blk["wq"], blk["wk"], blk["wv"],
                         blk["bq"], blk["bk"], blk["bv"])
        y = causal_flash_attention(q, k, v, batch=B, seq=T, n_head=nH)
        # fused output projection + residual add (in-place on x)
        x = matmul_bias_residual(y, blk["attn_proj_w"], blk["attn_proj_b"], x)

        # ---- MLP sub-block: fused LN2 + fc + GELU + proj + residual ----
        x = ln_mlp_residual(x, blk["ln2_g"], blk["ln2_b"],
                            blk["fc_w"], blk["fc_b"],
                            blk["mlp_proj_w"], blk["mlp_proj_b"])

    # fused final LN + tied lm_head (contracts against padded wte, no transpose)
    logits = ln_lmhead(x, params["ln_f_g"], params["ln_f_b"], params["wte_lm"])
    logits = logits[:, :cfg.vocab_size]              # drop vocab padding
    return logits.reshape(B, T, cfg.vocab_size)
    # TODO(synk): cross-entropy loss branch (targets != None path) omitted.


# --------------------------- pure-JAX reference ------------------------------

def gpt_reference(params, idx, cfg, matmul_dtype=jnp.float32):
    """Reference forward; matmul_dtype selects the MXU input precision so the
    Pallas kernels (bf16 inputs, f32 accumulation) can be checked tightly."""
    B, T = idx.shape
    C, nH = cfg.n_embd, cfg.n_head
    hd = C // nH
    md = matmul_dtype

    def mm(a, b):
        return jnp.dot(a.astype(md), b.astype(md),
                       preferred_element_type=jnp.float32)

    def ln(x, g, b):
        mu = jnp.mean(x, -1, keepdims=True)
        var = jnp.mean((x - mu) ** 2, -1, keepdims=True)
        return (x - mu) * jax.lax.rsqrt(var + 1e-5) * g + b

    def gelu(x):
        c = 0.7978845608028654
        return 0.5 * x * (1.0 + jnp.tanh(c * (x + 0.044715 * x ** 3)))

    x = params["wte"][idx] + params["wpe"][:T][None]
    for blk in params["blocks"]:
        h = ln(x, blk["ln1_g"], blk["ln1_b"])
        qkv = mm(h, blk["attn_w"]) + blk["attn_b"]
        q, k, v = jnp.split(qkv, 3, axis=-1)
        q = q.reshape(B, T, nH, hd).transpose(0, 2, 1, 3)
        k = k.reshape(B, T, nH, hd).transpose(0, 2, 1, 3)
        v = v.reshape(B, T, nH, hd).transpose(0, 2, 1, 3)
        s = jnp.einsum("bhqd,bhkd->bhqk", q.astype(md), k.astype(md),
                       preferred_element_type=jnp.float32) / math.sqrt(hd)
        mask = jnp.tril(jnp.ones((T, T), bool))
        s = jnp.where(mask, s, -1e30)
        p = jax.nn.softmax(s, axis=-1)
        y = jnp.einsum("bhqk,bhkd->bhqd", p.astype(md), v.astype(md),
                       preferred_element_type=jnp.float32)
        y = y.transpose(0, 2, 1, 3).reshape(B, T, C)
        x = x + mm(y, blk["attn_proj_w"]) + blk["attn_proj_b"]
        h = gelu(mm(ln(x, blk["ln2_g"], blk["ln2_b"]), blk["fc_w"])
                 + blk["fc_b"])
        x = x + mm(h, blk["mlp_proj_w"]) + blk["mlp_proj_b"]
    x = ln(x, params["ln_f_g"], params["ln_f_b"])
    return mm(x, params["wte"].T)


# ----------------------------------- main ------------------------------------

if __name__ == "__main__":
    cfg = GPTConfig(block_size=16, vocab_size=256, n_layer=2, n_head=2,
                    n_embd=32)
    B, T = 2, 8

    key = jax.random.PRNGKey(0)
    pkey, ikey = jax.random.split(key)
    params = init_params(cfg, pkey)
    idx = jax.random.randint(ikey, (B, T), 0, cfg.vocab_size, dtype=jnp.int32)

    kernel_params = prepare_params(params, cfg)
    fwd = jax.jit(functools.partial(gpt_forward, cfg=cfg))
    logits = jax.block_until_ready(fwd(kernel_params, idx))

    # Check against a reference that uses the same bf16-matmul / f32-accumulate
    # precision as the kernels (kernel logic check, precision-matched).
    ref = gpt_reference(params, idx, cfg, matmul_dtype=MATMUL_DTYPE)
    assert logits.shape == (B, T, cfg.vocab_size)
    max_err = float(jnp.max(jnp.abs(logits - ref)))
    assert jnp.allclose(logits, ref, rtol=2e-2, atol=2e-2), max_err

    print("KERNEL_OK")
</pallas_src>

<mosaic_0001>
module attributes {stable_mosaic.version = 11 : i64} {
  func.func @_ln_qkv_kernel(%arg0: i32, %arg1: memref<16x32xf32, #tpu.memory_space<vmem>>, %arg2: memref<1x32xf32, #tpu.memory_space<vmem>>, %arg3: memref<1x32xf32, #tpu.memory_space<vmem>>, %arg4: memref<32x32xbf16, #tpu.memory_space<vmem>>, %arg5: memref<32x32xbf16, #tpu.memory_space<vmem>>, %arg6: memref<32x32xbf16, #tpu.memory_space<vmem>>, %arg7: memref<1x32xf32, #tpu.memory_space<vmem>>, %arg8: memref<1x32xf32, #tpu.memory_space<vmem>>, %arg9: memref<1x32xf32, #tpu.memory_space<vmem>>, %arg10: memref<16x32xbf16, #tpu.memory_space<vmem>>, %arg11: memref<16x32xbf16, #tpu.memory_space<vmem>>, %arg12: memref<16x32xbf16, #tpu.memory_space<vmem>>) attributes {dimension_semantics = [#tpu.dimension_semantics<parallel>], iteration_bounds = array<i64: 1>, scalar_prefetch = 0 : i64, scratch_operands = 0 : i64, tpu.core_type = #tpu.core_type<tc>, window_params = [{transform_indices = @transform_0, window_bounds = array<i64: 16, 32>}, {pipeline_mode = #tpu.pipeline_mode<synchronous>, transform_indices = @transform_1, window_bounds = array<i64: 1, 32>}, {pipeline_mode = #tpu.pipeline_mode<synchronous>, transform_indices = @transform_2, window_bounds = array<i64: 1, 32>}, {pipeline_mode = #tpu.pipeline_mode<synchronous>, transform_indices = @transform_3, window_bounds = array<i64: 32, 32>}, {pipeline_mode = #tpu.pipeline_mode<synchronous>, transform_indices = @transform_4, window_bounds = array<i64: 32, 32>}, {pipeline_mode = #tpu.pipeline_mode<synchronous>, transform_indices = @transform_5, window_bounds = array<i64: 32, 32>}, {pipeline_mode = #tpu.pipeline_mode<synchronous>, transform_indices = @transform_6, window_bounds = array<i64: 1, 32>}, {pipeline_mode = #tpu.pipeline_mode<synchronous>, transform_indices = @transform_7, window_bounds = array<i64: 1, 32>}, {pipeline_mode = #tpu.pipeline_mode<synchronous>, transform_indices = @transform_8, window_bounds = array<i64: 1, 32>}, {transform_indices = @transform_9, window_bounds = array<i64: 16, 32>}, {transform_indices = @transform_10, window_bounds = array<i64: 16, 32>}, {transform_indices = @transform_11, window_bounds = array<i64: 16, 32>}]} {
    %c0 = arith.constant 0 : index
    %c0_0 = arith.constant 0 : index
    %0 = vector.load %arg1[%c0, %c0_0] : memref<16x32xf32, #tpu.memory_space<vmem>>, vector<16x32xf32>
    %c0_1 = arith.constant 0 : index
    %c0_2 = arith.constant 0 : index
    %1 = vector.load %arg2[%c0_1, %c0_2] : memref<1x32xf32, #tpu.memory_space<vmem>>, vector<1x32xf32>
    %c0_3 = arith.constant 0 : index
    %c0_4 = arith.constant 0 : index
    %2 = vector.load %arg3[%c0_3, %c0_4] : memref<1x32xf32, #tpu.memory_space<vmem>>, vector<1x32xf32>
    %cst = arith.constant dense<0.000000e+00> : vector<16xf32>
    %3 = vector.multi_reduction <add>, %0, %cst [1] : vector<16x32xf32> to vector<16xf32>
    %4 = vector.shape_cast %3 : vector<16xf32> to vector<16x1xf32>
    %cst_5 = arith.constant 3.200000e+01 : f32
    %5 = vector.broadcast %cst_5 : f32 to vector<16x1xf32>
    %6 = arith.divf %4, %5 : vector<16x1xf32>
    %7 = vector.broadcast %6 : vector<16x1xf32> to vector<16x32xf32>
    %8 = arith.subf %0, %7 : vector<16x32xf32>
    %9 = arith.mulf %8, %8 : vector<16x32xf32>
    %cst_6 = arith.constant dense<0.000000e+00> : vector<16xf32>
    %10 = vector.multi_reduction <add>, %9, %cst_6 [1] : vector<16x32xf32> to vector<16xf32>
    %11 = vector.shape_cast %10 : vector<16xf32> to vector<16x1xf32>
    %cst_7 = arith.constant 3.200000e+01 : f32
    %12 = vector.broadcast %cst_7 : f32 to vector<16x1xf32>
    %13 = arith.divf %11, %12 : vector<16x1xf32>
    %14 = vector.broadcast %6 : vector<16x1xf32> to vector<16x32xf32>
    %15 = arith.subf %0, %14 : vector<16x32xf32>
    %cst_8 = arith.constant 9.99999974E-6 : f32
    %16 = vector.broadcast %cst_8 : f32 to vector<16x1xf32>
    %17 = arith.addf %13, %16 : vector<16x1xf32>
    %18 = math.rsqrt %17 : vector<16x1xf32>
    %19 = vector.broadcast %18 : vector<16x1xf32> to vector<16x32xf32>
    %20 = arith.mulf %15, %19 : vector<16x32xf32>
    %21 = vector.broadcast %1 : vector<1x32xf32> to vector<16x32xf32>
    %22 = arith.mulf %20, %21 : vector<16x32xf32>
    %23 = vector.broadcast %2 : vector<1x32xf32> to vector<16x32xf32>
    %24 = arith.addf %22, %23 : vector<16x32xf32>
    %25 = arith.truncf %24 : vector<16x32xf32> to vector<16x32xbf16>
    %c0_9 = arith.constant 0 : index
    %c0_10 = arith.constant 0 : index
    %26 = vector.load %arg4[%c0_9, %c0_10] : memref<32x32xbf16, #tpu.memory_space<vmem>>, vector<32x32xbf16>
    %cst_11 = arith.constant dense<0.000000e+00> : vector<16x32xf32>
    %27 = tpu.matmul %25, %26, %cst_11 {dimension_numbers = #tpu.dot_dimension_numbers<[1], [0], [0], [1], [0, 0, 1, 1], [], []>} : vector<16x32xbf16>, vector<32x32xbf16>, vector<16x32xf32> -> vector<16x32xf32>
    %c0_12 = arith.constant 0 : index
    %c0_13 = arith.constant 0 : index
    %28 = vector.load %arg7[%c0_12, %c0_13] : memref<1x32xf32, #tpu.memory_space<vmem>>, vector<1x32xf32>
    %29 = vector.broadcast %28 : vector<1x32xf32> to vector<16x32xf32>
    %30 = arith.addf %27, %29 : vector<16x32xf32>
    %31 = arith.truncf %30 : vector<16x32xf32> to vector<16x32xbf16>
    %c0_14 = arith.constant 0 : index
    %c0_15 = arith.constant 0 : index
    %32 = vector.load %arg10[%c0_14, %c0_15] : memref<16x32xbf16, #tpu.memory_space<vmem>>, vector<16x32xbf16>
    tpu.vector_store %arg10[%c0_14, %c0_15], %31 {strides = array<i32>} : memref<16x32xbf16, #tpu.memory_space<vmem>>, vector<16x32xbf16>,
    %c0_16 = arith.constant 0 : index
    %c0_17 = arith.constant 0 : index
    %33 = vector.load %arg5[%c0_16, %c0_17] : memref<32x32xbf16, #tpu.memory_space<vmem>>, vector<32x32xbf16>
    %cst_18 = arith.constant dense<0.000000e+00> : vector<16x32xf32>
    %34 = tpu.matmul %25, %33, %cst_18 {dimension_numbers = #tpu.dot_dimension_numbers<[1], [0], [0], [1], [0, 0, 1, 1], [], []>} : vector<16x32xbf16>, vector<32x32xbf16>, vector<16x32xf32> -> vector<16x32xf32>
    %c0_19 = arith.constant 0 : index
    %c0_20 = arith.constant 0 : index
    %35 = vector.load %arg8[%c0_19, %c0_20] : memref<1x32xf32, #tpu.memory_space<vmem>>, vector<1x32xf32>
    %36 = vector.broadcast %35 : vector<1x32xf32> to vector<16x32xf32>
    %37 = arith.addf %34, %36 : vector<16x32xf32>
    %38 = arith.truncf %37 : vector<16x32xf32> to vector<16x32xbf16>
    %c0_21 = arith.constant 0 : index
    %c0_22 = arith.constant 0 : index
    %39 = vector.load %arg11[%c0_21, %c0_22] : memref<16x32xbf16, #tpu.memory_space<vmem>>, vector<16x32xbf16>
    tpu.vector_store %arg11[%c0_21, %c0_22], %38 {strides = array<i32>} : memref<16x32xbf16, #tpu.memory_space<vmem>>, vector<16x32xbf16>,
    %c0_23 = arith.constant 0 : index
    %c0_24 = arith.constant 0 : index
    %40 = vector.load %arg6[%c0_23, %c0_24] : memref<32x32xbf16, #tpu.memory_space<vmem>>, vector<32x32xbf16>
    %cst_25 = arith.constant dense<0.000000e+00> : vector<16x32xf32>
    %41 = tpu.matmul %25, %40, %cst_25 {dimension_numbers = #tpu.dot_dimension_numbers<[1], [0], [0], [1], [0, 0, 1, 1], [], []>} : vector<16x32xbf16>, vector<32x32xbf16>, vector<16x32xf32> -> vector<16x32xf32>
    %c0_26 = arith.constant 0 : index
    %c0_27 = arith.constant 0 : index
    %42 = vector.load %arg9[%c0_26, %c0_27] : memref<1x32xf32, #tpu.memory_space<vmem>>, vector<1x32xf32>
    %43 = vector.broadcast %42 : vector<1x32xf32> to vector<16x32xf32>
    %44 = arith.addf %41, %43 : vector<16x32xf32>
    %45 = arith.truncf %44 : vector<16x32xf32> to vector<16x32xbf16>
    %c0_28 = arith.constant 0 : index
    %c0_29 = arith.constant 0 : index
    %46 = vector.load %arg12[%c0_28, %c0_29] : memref<16x32xbf16, #tpu.memory_space<vmem>>, vector<16x32xbf16>
    tpu.vector_store %arg12[%c0_28, %c0_29], %45 {strides = array<i32>} : memref<16x32xbf16, #tpu.memory_space<vmem>>, vector<16x32xbf16>,
    return
  }
  func.func @transform_0(%arg0: i32) -> (i32, i32) {
    %c0_i32 = arith.constant 0 : i32
    %c0_i32_0 = arith.constant 0 : i32
    return %arg0, %c0_i32 : i32, i32
  }
  func.func @transform_1(%arg0: i32) -> (i32, i32) {
    %c0_i32 = arith.constant 0 : i32
    %c0_i32_0 = arith.constant 0 : i32
    %c0_i32_1 = arith.constant 0 : i32
    return %c0_i32, %c0_i32_0 : i32, i32
  }
  func.func @transform_2(%arg0: i32) -> (i32, i32) {
    %c0_i32 = arith.constant 0 : i32
    %c0_i32_0 = arith.constant 0 : i32
    %c0_i32_1 = arith.constant 0 : i32
    return %c0_i32, %c0_i32_0 : i32, i32
  }
  func.func @transform_3(%arg0: i32) -> (i32, i32) {
    %c0_i32 = arith.constant 0 : i32
    %c0_i32_0 = arith.constant 0 : i32
    %c0_i32_1 = arith.constant 0 : i32
    return %c0_i32, %c0_i32_0 : i32, i32
  }
  func.func @transform_4(%arg0: i32) -> (i32, i32) {
    %c0_i32 = arith.constant 0 : i32
    %c0_i32_0 = arith.constant 0 : i32
    %c0_i32_1 = arith.constant 0 : i32
    return %c0_i32, %c0_i32_0 : i32, i32
  }
  func.func @transform_5(%arg0: i32) -> (i32, i32) {
    %c0_i32 = arith.constant 0 : i32
    %c0_i32_0 = arith.constant 0 : i32
    %c0_i32_1 = arith.constant 0 : i32
    return %c0_i32, %c0_i32_0 : i32, i32
  }
  func.func @transform_6(%arg0: i32) -> (i32, i32) {
    %c0_i32 = arith.constant 0 : i32
    %c0_i32_0 = arith.constant 0 : i32
    %c0_i32_1 = arith.constant 0 : i32
    return %c0_i32, %c0_i32_0 : i32, i32
  }
  func.func @transform_7(%arg0: i32) -> (i32, i32) {
    %c0_i32 = arith.constant 0 : i32
    %c0_i32_0 = arith.constant 0 : i32
    %c0_i32_1 = arith.constant 0 : i32
    return %c0_i32, %c0_i32_0 : i32, i32
  }
  func.func @transform_8(%arg0: i32) -> (i32, i32) {
    %c0_i32 = arith.constant 0 : i32
    %c0_i32_0 = arith.constant 0 : i32
    %c0_i32_1 = arith.constant 0 : i32
    return %c0_i32, %c0_i32_0 : i32, i32
  }
  func.func @transform_9(%arg0: i32) -> (i32, i32) {
    %c0_i32 = arith.constant 0 : i32
    %c0_i32_0 = arith.constant 0 : i32
    return %arg0, %c0_i32 : i32, i32
  }
  func.func @transform_10(%arg0: i32) -> (i32, i32) {
    %c0_i32 = arith.constant 0 : i32
    %c0_i32_0 = arith.constant 0 : i32
    return %arg0, %c0_i32 : i32, i32
  }
  func.func @transform_11(%arg0: i32) -> (i32, i32) {
    %c0_i32 = arith.constant 0 : i32
    %c0_i32_0 = arith.constant 0 : i32
    return %arg0, %c0_i32 : i32, i32
  }
}

module attributes {stable_mosaic.version = 11 : i64} {
  func.func @_proj_residual_kernel(%arg0: i32, %arg1: memref<16x32xbf16, #tpu.memory_space<vmem>>, %arg2: memref<32x32xbf16, #tpu.memory_space<vmem>>, %arg3: memref<1x32xf32, #tpu.memory_space<vmem>>, %arg4: memref<16x32xf32, #tpu.memory_space<vmem>>, %arg5: memref<16x32xf32, #tpu.memory_space<vmem>>) attributes {dimension_semantics = [#tpu.dimension_semantics<parallel>], iteration_bounds = array<i64: 1>, scalar_prefetch = 0 : i64, scratch_operands = 0 : i64, tpu.core_type = #tpu.core_type<tc>, window_params = [{transform_indices = @transform_0, window_bounds = array<i64: 16, 32>}, {pipeline_mode = #tpu.pipeline_mode<synchronous>, transform_indices = @transform_1, window_bounds = array<i64: 32, 32>}, {pipeline_mode = #tpu.pipeline_mode<synchronous>, transform_indices = @transform_2, window_bounds = array<i64: 1, 32>}, {transform_indices = @transform_3, window_bounds = array<i64: 16, 32>}, {transform_indices = @transform_4, window_bounds = array<i64: 16, 32>}]} {
    %c0 = arith.constant 0 : index
    %c0_0 = arith.constant 0 : index
    %0 = vector.load %arg1[%c0, %c0_0] : memref<16x32xbf16, #tpu.memory_space<vmem>>, vector<16x32xbf16>
    %c0_1 = arith.constant 0 : index
    %c0_2 = arith.constant 0 : index
    %1 = vector.load %arg2[%c0_1, %c0_2] : memref<32x32xbf16, #tpu.memory_space<vmem>>, vector<32x32xbf16>
    %cst = arith.constant dense<0.000000e+00> : vector<16x32xf32>
    %2 = tpu.matmul %0, %1, %cst {dimension_numbers = #tpu.dot_dimension_numbers<[1], [0], [0], [1], [0, 0, 1, 1], [], []>} : vector<16x32xbf16>, vector<32x32xbf16>, vector<16x32xf32> -> vector<16x32xf32>
    %c0_3 = arith.constant 0 : index
    %c0_4 = arith.constant 0 : index
    %3 = vector.load %arg3[%c0_3, %c0_4] : memref<1x32xf32, #tpu.memory_space<vmem>>, vector<1x32xf32>
    %4 = vector.broadcast %3 : vector<1x32xf32> to vector<16x32xf32>
    %5 = arith.addf %2, %4 : vector<16x32xf32>
    %c0_5 = arith.constant 0 : index
    %c0_6 = arith.constant 0 : index
    %6 = vector.load %arg4[%c0_5, %c0_6] : memref<16x32xf32, #tpu.memory_space<vmem>>, vector<16x32xf32>
    %7 = arith.addf %5, %6 : vector<16x32xf32>
    %c0_7 = arith.constant 0 : index
    %c0_8 = arith.constant 0 : index
    %8 = vector.load %arg5[%c0_7, %c0_8] : memref<16x32xf32, #tpu.memory_space<vmem>>, vector<16x32xf32>
    tpu.vector_store %arg5[%c0_7, %c0_8], %7 {strides = array<i32>} : memref<16x32xf32, #tpu.memory_space<vmem>>, vector<16x32xf32>,
    return
  }
  func.func @transform_0(%arg0: i32) -> (i32, i32) {
    %c0_i32 = arith.constant 0 : i32
    %c0_i32_0 = arith.constant 0 : i32
    return %arg0, %c0_i32 : i32, i32
  }
  func.func @transform_1(%arg0: i32) -> (i32, i32) {
    %c0_i32 = arith.constant 0 : i32
    %c0_i32_0 = arith.constant 0 : i32
    %c0_i32_1 = arith.constant 0 : i32
    return %c0_i32, %c0_i32_0 : i32, i32
  }
  func.func @transform_2(%arg0: i32) -> (i32, i32) {
    %c0_i32 = arith.constant 0 : i32
    %c0_i32_0 = arith.constant 0 : i32
    %c0_i32_1 = arith.constant 0 : i32
    return %c0_i32, %c0_i32_0 : i32, i32
  }
  func.func @transform_3(%arg0: i32) -> (i32, i32) {
    %c0_i32 = arith.constant 0 : i32
    %c0_i32_0 = arith.constant 0 : i32
    return %arg0, %c0_i32 : i32, i32
  }
  func.func @transform_4(%arg0: i32) -> (i32, i32) {
    %c0_i32 = arith.constant 0 : i32
    %c0_i32_0 = arith.constant 0 : i32
    return %arg0, %c0_i32 : i32, i32
  }
}

module attributes {stable_mosaic.version = 11 : i64} {
  func.func @_flash_attn_kernel(%arg0: i32, %arg1: i32, %arg2: i32, %arg3: memref<8x32xbf16, #tpu.memory_space<vmem>>, %arg4: memref<8x32xbf16, #tpu.memory_space<vmem>>, %arg5: memref<8x32xbf16, #tpu.memory_space<vmem>>, %arg6: memref<8x32xbf16, #tpu.memory_space<vmem>>, %arg7: memref<2x8x1xf32, #tpu.memory_space<vmem>>, %arg8: memref<2x8x1xf32, #tpu.memory_space<vmem>>, %arg9: memref<2x8x16xf32, #tpu.memory_space<vmem>>) attributes {dimension_semantics = [#tpu.dimension_semantics<parallel>, #tpu.dimension_semantics<parallel>, #tpu.dimension_semantics<arbitrary>], iteration_bounds = array<i64: 2, 1, 1>, scalar_prefetch = 0 : i64, scratch_operands = 3 : i64, tpu.core_type = #tpu.core_type<tc>, window_params = [{transform_indices = @transform_0, window_bounds = array<i64: 8, 32>}, {transform_indices = @transform_1, window_bounds = array<i64: 8, 32>}, {transform_indices = @transform_2, window_bounds = array<i64: 8, 32>}, {transform_indices = @transform_3, window_bounds = array<i64: 8, 32>}]} {
    %c0_i32 = arith.constant 0 : i32
    %0 = arith.cmpi eq, %arg2, %c0_i32 : i32
    %1 = arith.extui %0 : i1 to i32
    %c0_i32_0 = arith.constant 0 : i32
    %2 = arith.cmpi ne, %1, %c0_i32_0 : i32
    scf.if %2 {
      %cst = arith.constant -1.000000e+30 : f32
      %12 = vector.broadcast %cst : f32 to vector<2x8x1xf32>
      %c0 = arith.constant 0 : index
      %c0_5 = arith.constant 0 : index
      %c0_6 = arith.constant 0 : index
      %13 = vector.load %arg7[%c0, %c0_5, %c0_6] : memref<2x8x1xf32, #tpu.memory_space<vmem>>, vector<2x8x1xf32>
      tpu.vector_store %arg7[%c0, %c0_5, %c0_6], %12 {strides = array<i32>} : memref<2x8x1xf32, #tpu.memory_space<vmem>>, vector<2x8x1xf32>,
      %cst_7 = arith.constant 0.000000e+00 : f32
      %14 = vector.broadcast %cst_7 : f32 to vector<2x8x1xf32>
      %c0_8 = arith.constant 0 : index
      %c0_9 = arith.constant 0 : index
      %c0_10 = arith.constant 0 : index
      %15 = vector.load %arg8[%c0_8, %c0_9, %c0_10] : memref<2x8x1xf32, #tpu.memory_space<vmem>>, vector<2x8x1xf32>
      tpu.vector_store %arg8[%c0_8, %c0_9, %c0_10], %14 {strides = array<i32>} : memref<2x8x1xf32, #tpu.memory_space<vmem>>, vector<2x8x1xf32>,
      %cst_11 = arith.constant 0.000000e+00 : f32
      %16 = vector.broadcast %cst_11 : f32 to vector<2x8x16xf32>
      %c0_12 = arith.constant 0 : index
      %c0_13 = arith.constant 0 : index
      %c0_14 = arith.constant 0 : index
      %17 = vector.load %arg9[%c0_12, %c0_13, %c0_14] : memref<2x8x16xf32, #tpu.memory_space<vmem>>, vector<2x8x16xf32>
      tpu.vector_store %arg9[%c0_12, %c0_13, %c0_14], %16 {strides = array<i32>} : memref<2x8x16xf32, #tpu.memory_space<vmem>>, vector<2x8x16xf32>,
    } else {
    }
    %3 = arith.cmpi slt, %arg2, %arg1 : i32
    %4 = arith.extui %3 : i1 to i32
    %c0_i32_1 = arith.constant 0 : i32
    %5 = arith.cmpi ne, %4, %c0_i32_1 : i32
    scf.if %5 {
      %c0 = arith.constant 0 : index
      %c0_5 = arith.constant 0 : index
      %12 = vector.load %arg3[%c0, %c0_5] : memref<8x32xbf16, #tpu.memory_space<vmem>>, vector<8x16xbf16>
      %c0_6 = arith.constant 0 : index
      %c0_7 = arith.constant 0 : index
      %13 = vector.load %arg4[%c0_6, %c0_7] : memref<8x32xbf16, #tpu.memory_space<vmem>>, vector<8x16xbf16>
      %cst = arith.constant dense<0.000000e+00> : vector<8x8xf32>
      %14 = tpu.matmul %12, %13, %cst {dimension_numbers = #tpu.dot_dimension_numbers<[1], [1], [0], [0], [0, 0, 1, 0], [], []>} : vector<8x16xbf16>, vector<8x16xbf16>, vector<8x8xf32> -> vector<8x8xf32>
      %cst_8 = arith.constant 2.500000e-01 : f32
      %15 = vector.broadcast %cst_8 : f32 to vector<8x8xf32>
      %16 = arith.mulf %14, %15 : vector<8x8xf32>
      %c0_9 = arith.constant 0 : index
      %c0_10 = arith.constant 0 : index
      %c0_11 = arith.constant 0 : index
      %17 = vector.load %arg7[%c0_9, %c0_10, %c0_11] : memref<2x8x1xf32, #tpu.memory_space<vmem>>, vector<1x8x1xf32>
      %18 = vector.shape_cast %17 : vector<1x8x1xf32> to vector<8x1xf32>
      %cst_12 = arith.constant dense<0xFF800000> : vector<8xf32>
      %19 = vector.multi_reduction <maximumf>, %16, %cst_12 [1] : vector<8x8xf32> to vector<8xf32>
      %20 = vector.shape_cast %19 : vector<8xf32> to vector<8x1xf32>
      %21 = arith.maximumf %18, %20 : vector<8x1xf32>
      %22 = arith.subf %18, %21 : vector<8x1xf32>
      %23 = math.exp %22 : vector<8x1xf32>
      %24 = vector.broadcast %21 : vector<8x1xf32> to vector<8x8xf32>
      %25 = arith.subf %16, %24 : vector<8x8xf32>
      %26 = math.exp %25 : vector<8x8xf32>
      %c0_13 = arith.constant 0 : index
      %c0_14 = arith.constant 0 : index
      %c0_15 = arith.constant 0 : index
      %27 = vector.load %arg8[%c0_13, %c0_14, %c0_15] : memref<2x8x1xf32, #tpu.memory_space<vmem>>, vector<1x8x1xf32>
      %28 = vector.shape_cast %27 : vector<1x8x1xf32> to vector<8x1xf32>
      %29 = arith.mulf %23, %28 : vector<8x1xf32>
      %cst_16 = arith.constant dense<0.000000e+00> : vector<8xf32>
      %30 = vector.multi_reduction <add>, %26, %cst_16 [1] : vector<8x8xf32> to vector<8xf32>
      %31 = vector.shape_cast %30 : vector<8xf32> to vector<8x1xf32>
      %32 = arith.addf %29, %31 : vector<8x1xf32>
      %c0_17 = arith.constant 0 : index
      %c0_18 = arith.constant 0 : index
      %c0_19 = arith.constant 0 : index
      %33 = vector.load %arg8[%c0_17, %c0_18, %c0_19] : memref<2x8x1xf32, #tpu.memory_space<vmem>>, vector<1x8x1xf32>
      %34 = vector.shape_cast %33 : vector<1x8x1xf32> to vector<8x1xf32>
      %35 = vector.shape_cast %32 : vector<8x1xf32> to vector<1x8x1xf32>
      tpu.vector_store %arg8[%c0_17, %c0_18, %c0_19], %35 {strides = array<i32>} : memref<2x8x1xf32, #tpu.memory_space<vmem>>, vector<1x8x1xf32>,
      %c0_20 = arith.constant 0 : index
      %c0_21 = arith.constant 0 : index
      %c0_22 = arith.constant 0 : index
      %36 = vector.load %arg9[%c0_20, %c0_21, %c0_22] : memref<2x8x16xf32, #tpu.memory_space<vmem>>, vector<1x8x16xf32>
      %37 = vector.shape_cast %36 : vector<1x8x16xf32> to vector<8x16xf32>
      %38 = vector.broadcast %23 : vector<8x1xf32> to vector<8x16xf32>
      %39 = arith.mulf %38, %37 : vector<8x16xf32>
      %40 = arith.truncf %26 : vector<8x8xf32> to vector<8x8xbf16>
      %c0_23 = arith.constant 0 : index
      %c0_24 = arith.constant 0 : index
      %41 = vector.load %arg5[%c0_23, %c0_24] : memref<8x32xbf16, #tpu.memory_space<vmem>>, vector<8x16xbf16>
      %cst_25 = arith.constant dense<0.000000e+00> : vector<8x16xf32>
      %42 = tpu.matmul %40, %41, %cst_25 {dimension_numbers = #tpu.dot_dimension_numbers<[1], [0], [0], [1], [0, 0, 1, 1], [], []>} : vector<8x8xbf16>, vector<8x16xbf16>, vector<8x16xf32> -> vector<8x16xf32>
      %43 = arith.addf %39, %42 : vector<8x16xf32>
      %c0_26 = arith.constant 0 : index
      %c0_27 = arith.constant 0 : index
      %c0_28 = arith.constant 0 : index
      %44 = vector.load %arg9[%c0_26, %c0_27, %c0_28] : memref<2x8x16xf32, #tpu.memory_space<vmem>>, vector<1x8x16xf32>
      %45 = vector.shape_cast %44 : vector<1x8x16xf32> to vector<8x16xf32>
      %46 = vector.shape_cast %43 : vector<8x16xf32> to vector<1x8x16xf32>
      tpu.vector_store %arg9[%c0_26, %c0_27, %c0_28], %46 {strides = array<i32>} : memref<2x8x16xf32, #tpu.memory_space<vmem>>, vector<1x8x16xf32>,
      %c0_29 = arith.constant 0 : index
      %c0_30 = arith.constant 0 : index
      %c0_31 = arith.constant 0 : index
      %47 = vector.load %arg7[%c0_29, %c0_30, %c0_31] : memref<2x8x1xf32, #tpu.memory_space<vmem>>, vector<1x8x1xf32>
      %48 = vector.shape_cast %47 : vector<1x8x1xf32> to vector<8x1xf32>
      %49 = vector.shape_cast %21 : vector<8x1xf32> to vector<1x8x1xf32>
      tpu.vector_store %arg7[%c0_29, %c0_30, %c0_31], %49 {strides = array<i32>} : memref<2x8x1xf32, #tpu.memory_space<vmem>>, vector<1x8x1xf32>,
      %c0_32 = arith.constant 0 : index
      %c16 = arith.constant 16 : index
      %50 = vector.load %arg3[%c0_32, %c16] : memref<8x32xbf16, #tpu.memory_space<vmem>>, vector<8x16xbf16>
      %c0_33 = arith.constant 0 : index
      %c16_34 = arith.constant 16 : index
      %51 = vector.load %arg4[%c0_33, %c16_34] : memref<8x32xbf16, #tpu.memory_space<vmem>>, vector<8x16xbf16>
      %cst_35 = arith.constant dense<0.000000e+00> : vector<8x8xf32>
      %52 = tpu.matmul %50, %51, %cst_35 {dimension_numbers = #tpu.dot_dimension_numbers<[1], [1], [0], [0], [0, 0, 1, 0], [], []>} : vector<8x16xbf16>, vector<8x16xbf16>, vector<8x8xf32> -> vector<8x8xf32>
      %cst_36 = arith.constant 2.500000e-01 : f32
      %53 = vector.broadcast %cst_36 : f32 to vector<8x8xf32>
      %54 = arith.mulf %52, %53 : vector<8x8xf32>
      %c1 = arith.constant 1 : index
      %c0_37 = arith.constant 0 : index
      %c0_38 = arith.constant 0 : index
      %55 = vector.load %arg7[%c1, %c0_37, %c0_38] : memref<2x8x1xf32, #tpu.memory_space<vmem>>, vector<1x8x1xf32>
      %56 = vector.shape_cast %55 : vector<1x8x1xf32> to vector<8x1xf32>
      %cst_39 = arith.constant dense<0xFF800000> : vector<8xf32>
      %57 = vector.multi_reduction <maximumf>, %54, %cst_39 [1] : vector<8x8xf32> to vector<8xf32>
      %58 = vector.shape_cast %57 : vector<8xf32> to vector<8x1xf32>
      %59 = arith.maximumf %56, %58 : vector<8x1xf32>
      %60 = arith.subf %56, %59 : vector<8x1xf32>
      %61 = math.exp %60 : vector<8x1xf32>
      %62 = vector.broadcast %59 : vector<8x1xf32> to vector<8x8xf32>
      %63 = arith.subf %54, %62 : vector<8x8xf32>
      %64 = math.exp %63 : vector<8x8xf32>
      %c1_40 = arith.constant 1 : index
      %c0_41 = arith.constant 0 : index
      %c0_42 = arith.constant 0 : index
      %65 = vector.load %arg8[%c1_40, %c0_41, %c0_42] : memref<2x8x1xf32, #tpu.memory_space<vmem>>, vector<1x8x1xf32>
      %66 = vector.shape_cast %65 : vector<1x8x1xf32> to vector<8x1xf32>
      %67 = arith.mulf %61, %66 : vector<8x1xf32>
      %cst_43 = arith.constant dense<0.000000e+00> : vector<8xf32>
      %68 = vector.multi_reduction <add>, %64, %cst_43 [1] : vector<8x8xf32> to vector<8xf32>
      %69 = vector.shape_cast %68 : vector<8xf32> to vector<8x1xf32>
      %70 = arith.addf %67, %69 : vector<8x1xf32>
      %c1_44 = arith.constant 1 : index
      %c0_45 = arith.constant 0 : index
      %c0_46 = arith.constant 0 : index
      %71 = vector.load %arg8[%c1_44, %c0_45, %c0_46] : memref<2x8x1xf32, #tpu.memory_space<vmem>>, vector<1x8x1xf32>
      %72 = vector.shape_cast %71 : vector<1x8x1xf32> to vector<8x1xf32>
      %73 = vector.shape_cast %70 : vector<8x1xf32> to vector<1x8x1xf32>
      tpu.vector_store %arg8[%c1_44, %c0_45, %c0_46], %73 {strides = array<i32>} : memref<2x8x1xf32, #tpu.memory_space<vmem>>, vector<1x8x1xf32>,
      %c1_47 = arith.constant 1 : index
      %c0_48 = arith.constant 0 : index
      %c0_49 = arith.constant 0 : index
      %74 = vector.load %arg9[%c1_47, %c0_48, %c0_49] : memref<2x8x16xf32, #tpu.memory_space<vmem>>, vector<1x8x16xf32>
      %75 = vector.shape_cast %74 : vector<1x8x16xf32> to vector<8x16xf32>
      %76 = vector.broadcast %61 : vector<8x1xf32> to vector<8x16xf32>
      %77 = arith.mulf %76, %75 : vector<8x16xf32>
      %78 = arith.truncf %64 : vector<8x8xf32> to vector<8x8xbf16>
      %c0_50 = arith.constant 0 : index
      %c16_51 = arith.constant 16 : index
      %79 = vector.load %arg5[%c0_50, %c16_51] : memref<8x32xbf16, #tpu.memory_space<vmem>>, vector<8x16xbf16>
      %cst_52 = arith.constant dense<0.000000e+00> : vector<8x16xf32>
      %80 = tpu.matmul %78, %79, %cst_52 {dimension_numbers = #tpu.dot_dimension_numbers<[1], [0], [0], [1], [0, 0, 1, 1], [], []>} : vector<8x8xbf16>, vector<8x16xbf16>, vector<8x16xf32> -> vector<8x16xf32>
      %81 = arith.addf %77, %80 : vector<8x16xf32>
      %c1_53 = arith.constant 1 : index
      %c0_54 = arith.constant 0 : index
      %c0_55 = arith.constant 0 : index
      %82 = vector.load %arg9[%c1_53, %c0_54, %c0_55] : memref<2x8x16xf32, #tpu.memory_space<vmem>>, vector<1x8x16xf32>
      %83 = vector.shape_cast %82 : vector<1x8x16xf32> to vector<8x16xf32>
      %84 = vector.shape_cast %81 : vector<8x16xf32> to vector<1x8x16xf32>
      tpu.vector_store %arg9[%c1_53, %c0_54, %c0_55], %84 {strides = array<i32>} : memref<2x8x16xf32, #tpu.memory_space<vmem>>, vector<1x8x16xf32>,
      %c1_56 = arith.constant 1 : index
      %c0_57 = arith.constant 0 : index
      %c0_58 = arith.constant 0 : index
      %85 = vector.load %arg7[%c1_56, %c0_57, %c0_58] : memref<2x8x1xf32, #tpu.memory_space<vmem>>, vector<1x8x1xf32>
      %86 = vector.shape_cast %85 : vector<1x8x1xf32> to vector<8x1xf32>
      %87 = vector.shape_cast %59 : vector<8x1xf32> to vector<1x8x1xf32>
      tpu.vector_store %arg7[%c1_56, %c0_57, %c0_58], %87 {strides = array<i32>} : memref<2x8x1xf32, #tpu.memory_space<vmem>>, vector<1x8x1xf32>,
    } else {
    }
    %6 = arith.cmpi eq, %arg2, %arg1 : i32
    %7 = arith.extui %6 : i1 to i32
    %c0_i32_2 = arith.constant 0 : i32
    %8 = arith.cmpi ne, %7, %c0_i32_2 : i32
    scf.if %8 {
      %12 = tpu.iota {dimensions = array<i32: 0>} : vector<8x8xi32>
      %13 = tpu.iota {dimensions = array<i32: 1>} : vector<8x8xi32>
      %14 = arith.cmpi sle, %13, %12 : vector<8x8xi32>
      %c0 = arith.constant 0 : index
      %c0_5 = arith.constant 0 : index
      %15 = vector.load %arg3[%c0, %c0_5] : memref<8x32xbf16, #tpu.memory_space<vmem>>, vector<8x16xbf16>
      %c0_6 = arith.constant 0 : index
      %c0_7 = arith.constant 0 : index
      %16 = vector.load %arg4[%c0_6, %c0_7] : memref<8x32xbf16, #tpu.memory_space<vmem>>, vector<8x16xbf16>
      %cst = arith.constant dense<0.000000e+00> : vector<8x8xf32>
      %17 = tpu.matmul %15, %16, %cst {dimension_numbers = #tpu.dot_dimension_numbers<[1], [1], [0], [0], [0, 0, 1, 0], [], []>} : vector<8x16xbf16>, vector<8x16xbf16>, vector<8x8xf32> -> vector<8x8xf32>
      %cst_8 = arith.constant 2.500000e-01 : f32
      %18 = vector.broadcast %cst_8 : f32 to vector<8x8xf32>
      %19 = arith.mulf %17, %18 : vector<8x8xf32>
      %cst_9 = arith.constant -1.000000e+30 : f32
      %20 = vector.broadcast %cst_9 : f32 to vector<8x8xf32>
      %21 = arith.select %14, %19, %20 : vector<8x8xi1>, vector<8x8xf32>
      %c0_10 = arith.constant 0 : index
      %c0_11 = arith.constant 0 : index
      %c0_12 = arith.constant 0 : index
      %22 = vector.load %arg7[%c0_10, %c0_11, %c0_12] : memref<2x8x1xf32, #tpu.memory_space<vmem>>, vector<1x8x1xf32>
      %23 = vector.shape_cast %22 : vector<1x8x1xf32> to vector<8x1xf32>
      %cst_13 = arith.constant dense<0xFF800000> : vector<8xf32>
      %24 = vector.multi_reduction <maximumf>, %21, %cst_13 [1] : vector<8x8xf32> to vector<8xf32>
      %25 = vector.shape_cast %24 : vector<8xf32> to vector<8x1xf32>
      %26 = arith.maximumf %23, %25 : vector<8x1xf32>
      %27 = arith.subf %23, %26 : vector<8x1xf32>
      %28 = math.exp %27 : vector<8x1xf32>
      %29 = vector.broadcast %26 : vector<8x1xf32> to vector<8x8xf32>
      %30 = arith.subf %21, %29 : vector<8x8xf32>
      %31 = math.exp %30 : vector<8x8xf32>
      %c0_14 = arith.constant 0 : index
      %c0_15 = arith.constant 0 : index
      %c0_16 = arith.constant 0 : index
      %32 = vector.load %arg8[%c0_14, %c0_15, %c0_16] : memref<2x8x1xf32, #tpu.memory_space<vmem>>, vector<1x8x1xf32>
      %33 = vector.shape_cast %32 : vector<1x8x1xf32> to vector<8x1xf32>
      %34 = arith.mulf %28, %33 : vector<8x1xf32>
      %cst_17 = arith.constant dense<0.000000e+00> : vector<8xf32>
      %35 = vector.multi_reduction <add>, %31, %cst_17 [1] : vector<8x8xf32> to vector<8xf32>
      %36 = vector.shape_cast %35 : vector<8xf32> to vector<8x1xf32>
      %37 = arith.addf %34, %36 : vector<8x1xf32>
      %c0_18 = arith.constant 0 : index
      %c0_19 = arith.constant 0 : index
      %c0_20 = arith.constant 0 : index
      %38 = vector.load %arg8[%c0_18, %c0_19, %c0_20] : memref<2x8x1xf32, #tpu.memory_space<vmem>>, vector<1x8x1xf32>
      %39 = vector.shape_cast %38 : vector<1x8x1xf32> to vector<8x1xf32>
      %40 = vector.shape_cast %37 : vector<8x1xf32> to vector<1x8x1xf32>
      tpu.vector_store %arg8[%c0_18, %c0_19, %c0_20], %40 {strides = array<i32>} : memref<2x8x1xf32, #tpu.memory_space<vmem>>, vector<1x8x1xf32>,
      %c0_21 = arith.constant 0 : index
      %c0_22 = arith.constant 0 : index
      %c0_23 = arith.constant 0 : index
      %41 = vector.load %arg9[%c0_21, %c0_22, %c0_23] : memref<2x8x16xf32, #tpu.memory_space<vmem>>, vector<1x8x16xf32>
      %42 = vector.shape_cast %41 : vector<1x8x16xf32> to vector<8x16xf32>
      %43 = vector.broadcast %28 : vector<8x1xf32> to vector<8x16xf32>
      %44 = arith.mulf %43, %42 : vector<8x16xf32>
      %45 = arith.truncf %31 : vector<8x8xf32> to vector<8x8xbf16>
      %c0_24 = arith.constant 0 : index
      %c0_25 = arith.constant 0 : index
      %46 = vector.load %arg5[%c0_24, %c0_25] : memref<8x32xbf16, #tpu.memory_space<vmem>>, vector<8x16xbf16>
      %cst_26 = arith.constant dense<0.000000e+00> : vector<8x16xf32>
      %47 = tpu.matmul %45, %46, %cst_26 {dimension_numbers = #tpu.dot_dimension_numbers<[1], [0], [0], [1], [0, 0, 1, 1], [], []>} : vector<8x8xbf16>, vector<8x16xbf16>, vector<8x16xf32> -> vector<8x16xf32>
      %48 = arith.addf %44, %47 : vector<8x16xf32>
      %c0_27 = arith.constant 0 : index
      %c0_28 = arith.constant 0 : index
      %c0_29 = arith.constant 0 : index
      %49 = vector.load %arg9[%c0_27, %c0_28, %c0_29] : memref<2x8x16xf32, #tpu.memory_space<vmem>>, vector<1x8x16xf32>
      %50 = vector.shape_cast %49 : vector<1x8x16xf32> to vector<8x16xf32>
      %51 = vector.shape_cast %48 : vector<8x16xf32> to vector<1x8x16xf32>
      tpu.vector_store %arg9[%c0_27, %c0_28, %c0_29], %51 {strides = array<i32>} : memref<2x8x16xf32, #tpu.memory_space<vmem>>, vector<1x8x16xf32>,
      %c0_30 = arith.constant 0 : index
      %c0_31 = arith.constant 0 : index
      %c0_32 = arith.constant 0 : index
      %52 = vector.load %arg7[%c0_30, %c0_31, %c0_32] : memref<2x8x1xf32, #tpu.memory_space<vmem>>, vector<1x8x1xf32>
      %53 = vector.shape_cast %52 : vector<1x8x1xf32> to vector<8x1xf32>
      %54 = vector.shape_cast %26 : vector<8x1xf32> to vector<1x8x1xf32>
      tpu.vector_store %arg7[%c0_30, %c0_31, %c0_32], %54 {strides = array<i32>} : memref<2x8x1xf32, #tpu.memory_space<vmem>>, vector<1x8x1xf32>,
      %c0_33 = arith.constant 0 : index
      %c16 = arith.constant 16 : index
      %55 = vector.load %arg3[%c0_33, %c16] : memref<8x32xbf16, #tpu.memory_space<vmem>>, vector<8x16xbf16>
      %c0_34 = arith.constant 0 : index
      %c16_35 = arith.constant 16 : index
      %56 = vector.load %arg4[%c0_34, %c16_35] : memref<8x32xbf16, #tpu.memory_space<vmem>>, vector<8x16xbf16>
      %cst_36 = arith.constant dense<0.000000e+00> : vector<8x8xf32>
      %57 = tpu.matmul %55, %56, %cst_36 {dimension_numbers = #tpu.dot_dimension_numbers<[1], [1], [0], [0], [0, 0, 1, 0], [], []>} : vector<8x16xbf16>, vector<8x16xbf16>, vector<8x8xf32> -> vector<8x8xf32>
      %cst_37 = arith.constant 2.500000e-01 : f32
      %58 = vector.broadcast %cst_37 : f32 to vector<8x8xf32>
      %59 = arith.mulf %57, %58 : vector<8x8xf32>
      %cst_38 = arith.constant -1.000000e+30 : f32
      %60 = vector.broadcast %cst_38 : f32 to vector<8x8xf32>
      %61 = arith.select %14, %59, %60 : vector<8x8xi1>, vector<8x8xf32>
      %c1 = arith.constant 1 : index
      %c0_39 = arith.constant 0 : index
      %c0_40 = arith.constant 0 : index
      %62 = vector.load %arg7[%c1, %c0_39, %c0_40] : memref<2x8x1xf32, #tpu.memory_space<vmem>>, vector<1x8x1xf32>
      %63 = vector.shape_cast %62 : vector<1x8x1xf32> to vector<8x1xf32>
      %cst_41 = arith.constant dense<0xFF800000> : vector<8xf32>
      %64 = vector.multi_reduction <maximumf>, %61, %cst_41 [1] : vector<8x8xf32> to vector<8xf32>
      %65 = vector.shape_cast %64 : vector<8xf32> to vector<8x1xf32>
      %66 = arith.maximumf %63, %65 : vector<8x1xf32>
      %67 = arith.subf %63, %66 : vector<8x1xf32>
      %68 = math.exp %67 : vector<8x1xf32>
      %69 = vector.broadcast %66 : vector<8x1xf32> to vector<8x8xf32>
      %70 = arith.subf %61, %69 : vector<8x8xf32>
      %71 = math.exp %70 : vector<8x8xf32>
      %c1_42 = arith.constant 1 : index
      %c0_43 = arith.constant 0 : index
      %c0_44 = arith.constant 0 : index
      %72 = vector.load %arg8[%c1_42, %c0_43, %c0_44] : memref<2x8x1xf32, #tpu.memory_space<vmem>>, vector<1x8x1xf32>
      %73 = vector.shape_cast %72 : vector<1x8x1xf32> to vector<8x1xf32>
      %74 = arith.mulf %68, %73 : vector<8x1xf32>
      %cst_45 = arith.constant dense<0.000000e+00> : vector<8xf32>
      %75 = vector.multi_reduction <add>, %71, %cst_45 [1] : vector<8x8xf32> to vector<8xf32>
      %76 = vector.shape_cast %75 : vector<8xf32> to vector<8x1xf32>
      %77 = arith.addf %74, %76 : vector<8x1xf32>
      %c1_46 = arith.constant 1 : index
      %c0_47 = arith.constant 0 : index
      %c0_48 = arith.constant 0 : index
      %78 = vector.load %arg8[%c1_46, %c0_47, %c0_48] : memref<2x8x1xf32, #tpu.memory_space<vmem>>, vector<1x8x1xf32>
      %79 = vector.shape_cast %78 : vector<1x8x1xf32> to vector<8x1xf32>
      %80 = vector.shape_cast %77 : vector<8x1xf32> to vector<1x8x1xf32>
      tpu.vector_store %arg8[%c1_46, %c0_47, %c0_48], %80 {strides = array<i32>} : memref<2x8x1xf32, #tpu.memory_space<vmem>>, vector<1x8x1xf32>,
      %c1_49 = arith.constant 1 : index
      %c0_50 = arith.constant 0 : index
      %c0_51 = arith.constant 0 : index
      %81 = vector.load %arg9[%c1_49, %c0_50, %c0_51] : memref<2x8x16xf32, #tpu.memory_space<vmem>>, vector<1x8x16xf32>
      %82 = vector.shape_cast %81 : vector<1x8x16xf32> to vector<8x16xf32>
      %83 = vector.broadcast %68 : vector<8x1xf32> to vector<8x16xf32>
      %84 = arith.mulf %83, %82 : vector<8x16xf32>
      %85 = arith.truncf %71 : vector<8x8xf32> to vector<8x8xbf16>
      %c0_52 = arith.constant 0 : index
      %c16_53 = arith.constant 16 : index
      %86 = vector.load %arg5[%c0_52, %c16_53] : memref<8x32xbf16, #tpu.memory_space<vmem>>, vector<8x16xbf16>
      %cst_54 = arith.constant dense<0.000000e+00> : vector<8x16xf32>
      %87 = tpu.matmul %85, %86, %cst_54 {dimension_numbers = #tpu.dot_dimension_numbers<[1], [0], [0], [1], [0, 0, 1, 1], [], []>} : vector<8x8xbf16>, vector<8x16xbf16>, vector<8x16xf32> -> vector<8x16xf32>
      %88 = arith.addf %84, %87 : vector<8x16xf32>
      %c1_55 = arith.constant 1 : index
      %c0_56 = arith.constant 0 : index
      %c0_57 = arith.constant 0 : index
      %89 = vector.load %arg9[%c1_55, %c0_56, %c0_57] : memref<2x8x16xf32, #tpu.memory_space<vmem>>, vector<1x8x16xf32>
      %90 = vector.shape_cast %89 : vector<1x8x16xf32> to vector<8x16xf32>
      %91 = vector.shape_cast %88 : vector<8x16xf32> to vector<1x8x16xf32>
      tpu.vector_store %arg9[%c1_55, %c0_56, %c0_57], %91 {strides = array<i32>} : memref<2x8x16xf32, #tpu.memory_space<vmem>>, vector<1x8x16xf32>,
      %c1_58 = arith.constant 1 : index
      %c0_59 = arith.constant 0 : index
      %c0_60 = arith.constant 0 : index
      %92 = vector.load %arg7[%c1_58, %c0_59, %c0_60] : memref<2x8x1xf32, #tpu.memory_space<vmem>>, vector<1x8x1xf32>
      %93 = vector.shape_cast %92 : vector<1x8x1xf32> to vector<8x1xf32>
      %94 = vector.shape_cast %66 : vector<8x1xf32> to vector<1x8x1xf32>
      tpu.vector_store %arg7[%c1_58, %c0_59, %c0_60], %94 {strides = array<i32>} : memref<2x8x1xf32, #tpu.memory_space<vmem>>, vector<1x8x1xf32>,
    } else {
    }
    %c0_i32_3 = arith.constant 0 : i32
    %9 = arith.cmpi eq, %arg2, %c0_i32_3 : i32
    %10 = arith.extui %9 : i1 to i32
    %c0_i32_4 = arith.constant 0 : i32
    %11 = arith.cmpi ne, %10, %c0_i32_4 : i32
    scf.if %11 {
      %c0 = arith.constant 0 : index
      %c0_5 = arith.constant 0 : index
      %c0_6 = arith.constant 0 : index
      %12 = vector.load %arg9[%c0, %c0_5, %c0_6] : memref<2x8x16xf32, #tpu.memory_space<vmem>>, vector<1x8x16xf32>
      %13 = vector.shape_cast %12 : vector<1x8x16xf32> to vector<8x16xf32>
      %c0_7 = arith.constant 0 : index
      %c0_8 = arith.constant 0 : index
      %c0_9 = arith.constant 0 : index
      %14 = vector.load %arg8[%c0_7, %c0_8, %c0_9] : memref<2x8x1xf32, #tpu.memory_space<vmem>>, vector<1x8x1xf32>
      %15 = vector.shape_cast %14 : vector<1x8x1xf32> to vector<8x1xf32>
      %16 = tpu.reciprocal %15 {approx = true} : vector<8x1xf32> -> vector<8x1xf32>
      %17 = vector.broadcast %16 : vector<8x1xf32> to vector<8x16xf32>
      %18 = arith.mulf %13, %17 : vector<8x16xf32>
      %c1 = arith.constant 1 : index
      %c0_10 = arith.constant 0 : index
      %c0_11 = arith.constant 0 : index
      %19 = vector.load %arg9[%c1, %c0_10, %c0_11] : memref<2x8x16xf32, #tpu.memory_space<vmem>>, vector<1x8x16xf32>
      %20 = vector.shape_cast %19 : vector<1x8x16xf32> to vector<8x16xf32>
      %c1_12 = arith.constant 1 : index
      %c0_13 = arith.constant 0 : index
      %c0_14 = arith.constant 0 : index
      %21 = vector.load %arg8[%c1_12, %c0_13, %c0_14] : memref<2x8x1xf32, #tpu.memory_space<vmem>>, vector<1x8x1xf32>
      %22 = vector.shape_cast %21 : vector<1x8x1xf32> to vector<8x1xf32>
      %23 = tpu.reciprocal %22 {approx = true} : vector<8x1xf32> -> vector<8x1xf32>
      %24 = vector.broadcast %23 : vector<8x1xf32> to vector<8x16xf32>
      %25 = arith.mulf %20, %24 : vector<8x16xf32>
      %26 = tpu.concatenate %18, %25 in 1 : vector<8x16xf32>, vector<8x16xf32> -> vector<8x32xf32>
      %27 = arith.truncf %26 : vector<8x32xf32> to vector<8x32xbf16>
      %c0_15 = arith.constant 0 : index
      %c0_16 = arith.constant 0 : index
      %28 = vector.load %arg6[%c0_15, %c0_16] : memref<8x32xbf16, #tpu.memory_space<vmem>>, vector<8x32xbf16>
      tpu.vector_store %arg6[%c0_15, %c0_16], %27 {strides = array<i32>} : memref<8x32xbf16, #tpu.memory_space<vmem>>, vector<8x32xbf16>,
    } else {
    }
    return
  }
  func.func @transform_0(%arg0: i32, %arg1: i32, %arg2: i32) -> (i32, i32) {
    %c1_i32 = arith.constant 1 : i32
    %0 = arith.muli %arg0, %c1_i32 : i32
    %1 = arith.addi %0, %arg1 : i32
    %c0_i32 = arith.constant 0 : i32
    %c0_i32_0 = arith.constant 0 : i32
    return %1, %c0_i32 : i32, i32
  }
  func.func @transform_1(%arg0: i32, %arg1: i32, %arg2: i32) -> (i32, i32) {
    %c1_i32 = arith.constant 1 : i32
    %0 = arith.muli %arg0, %c1_i32 : i32
    %1 = arith.addi %0, %arg2 : i32
    %c0_i32 = arith.constant 0 : i32
    %c0_i32_0 = arith.constant 0 : i32
    return %1, %c0_i32 : i32, i32
  }
  func.func @transform_2(%arg0: i32, %arg1: i32, %arg2: i32) -> (i32, i32) {
    %c1_i32 = arith.constant 1 : i32
    %0 = arith.muli %arg0, %c1_i32 : i32
    %1 = arith.addi %0, %arg2 : i32
    %c0_i32 = arith.constant 0 : i32
    %c0_i32_0 = arith.constant 0 : i32
    return %1, %c0_i32 : i32, i32
  }
  func.func @transform_3(%arg0: i32, %arg1: i32, %arg2: i32) -> (i32, i32) {
    %c1_i32 = arith.constant 1 : i32
    %0 = arith.muli %arg0, %c1_i32 : i32
    %1 = arith.addi %0, %arg1 : i32
    %c0_i32 = arith.constant 0 : i32
    %c0_i32_0 = arith.constant 0 : i32
    return %1, %c0_i32 : i32, i32
  }
}

module attributes {stable_mosaic.version = 11 : i64} {
  func.func @_ln_mlp_residual_kernel(%arg0: i32, %arg1: i32, %arg2: memref<16x32xf32, #tpu.memory_space<vmem>>, %arg3: memref<1x32xf32, #tpu.memory_space<vmem>>, %arg4: memref<1x32xf32, #tpu.memory_space<vmem>>, %arg5: memref<32x128xbf16, #tpu.memory_space<vmem>>, %arg6: memref<1x128xf32, #tpu.memory_space<vmem>>, %arg7: memref<128x32xbf16, #tpu.memory_space<vmem>>, %arg8: memref<1x32xf32, #tpu.memory_space<vmem>>, %arg9: memref<16x32xf32, #tpu.memory_space<vmem>>, %arg10: memref<16x32xbf16, #tpu.memory_space<vmem>>, %arg11: memref<16x32xf32, #tpu.memory_space<vmem>>) attributes {dimension_semantics = [#tpu.dimension_semantics<parallel>, #tpu.dimension_semantics<arbitrary>], iteration_bounds = array<i64: 1, 1>, scalar_prefetch = 0 : i64, scratch_operands = 2 : i64, tpu.core_type = #tpu.core_type<tc>, window_params = [{transform_indices = @transform_0, window_bounds = array<i64: 16, 32>}, {pipeline_mode = #tpu.pipeline_mode<synchronous>, transform_indices = @transform_1, window_bounds = array<i64: 1, 32>}, {pipeline_mode = #tpu.pipeline_mode<synchronous>, transform_indices = @transform_2, window_bounds = array<i64: 1, 32>}, {transform_indices = @transform_3, window_bounds = array<i64: 32, 128>}, {transform_indices = @transform_4, window_bounds = array<i64: 1, 128>}, {transform_indices = @transform_5, window_bounds = array<i64: 128, 32>}, {pipeline_mode = #tpu.pipeline_mode<synchronous>, transform_indices = @transform_6, window_bounds = array<i64: 1, 32>}, {transform_indices = @transform_7, window_bounds = array<i64: 16, 32>}]} {
    %c0_i32 = arith.constant 0 : i32
    %0 = arith.cmpi eq, %arg1, %c0_i32 : i32
    %1 = arith.extui %0 : i1 to i32
    %c0_i32_0 = arith.constant 0 : i32
    %2 = arith.cmpi ne, %1, %c0_i32_0 : i32
    scf.if %2 {
      %c0_19 = arith.constant 0 : index
      %c0_20 = arith.constant 0 : index
      %31 = vector.load %arg2[%c0_19, %c0_20] : memref<16x32xf32, #tpu.memory_space<vmem>>, vector<16x32xf32>
      %c0_21 = arith.constant 0 : index
      %c0_22 = arith.constant 0 : index
      %32 = vector.load %arg3[%c0_21, %c0_22] : memref<1x32xf32, #tpu.memory_space<vmem>>, vector<1x32xf32>
      %c0_23 = arith.constant 0 : index
      %c0_24 = arith.constant 0 : index
      %33 = vector.load %arg4[%c0_23, %c0_24] : memref<1x32xf32, #tpu.memory_space<vmem>>, vector<1x32xf32>
      %cst_25 = arith.constant dense<0.000000e+00> : vector<16xf32>
      %34 = vector.multi_reduction <add>, %31, %cst_25 [1] : vector<16x32xf32> to vector<16xf32>
      %35 = vector.shape_cast %34 : vector<16xf32> to vector<16x1xf32>
      %cst_26 = arith.constant 3.200000e+01 : f32
      %36 = vector.broadcast %cst_26 : f32 to vector<16x1xf32>
      %37 = arith.divf %35, %36 : vector<16x1xf32>
      %38 = vector.broadcast %37 : vector<16x1xf32> to vector<16x32xf32>
      %39 = arith.subf %31, %38 : vector<16x32xf32>
      %40 = arith.mulf %39, %39 : vector<16x32xf32>
      %cst_27 = arith.constant dense<0.000000e+00> : vector<16xf32>
      %41 = vector.multi_reduction <add>, %40, %cst_27 [1] : vector<16x32xf32> to vector<16xf32>
      %42 = vector.shape_cast %41 : vector<16xf32> to vector<16x1xf32>
      %cst_28 = arith.constant 3.200000e+01 : f32
      %43 = vector.broadcast %cst_28 : f32 to vector<16x1xf32>
      %44 = arith.divf %42, %43 : vector<16x1xf32>
      %45 = vector.broadcast %37 : vector<16x1xf32> to vector<16x32xf32>
      %46 = arith.subf %31, %45 : vector<16x32xf32>
      %cst_29 = arith.constant 9.99999974E-6 : f32
      %47 = vector.broadcast %cst_29 : f32 to vector<16x1xf32>
      %48 = arith.addf %44, %47 : vector<16x1xf32>
      %49 = math.rsqrt %48 : vector<16x1xf32>
      %50 = vector.broadcast %49 : vector<16x1xf32> to vector<16x32xf32>
      %51 = arith.mulf %46, %50 : vector<16x32xf32>
      %52 = vector.broadcast %32 : vector<1x32xf32> to vector<16x32xf32>
      %53 = arith.mulf %51, %52 : vector<16x32xf32>
      %54 = vector.broadcast %33 : vector<1x32xf32> to vector<16x32xf32>
      %55 = arith.addf %53, %54 : vector<16x32xf32>
      %56 = arith.truncf %55 : vector<16x32xf32> to vector<16x32xbf16>
      %c0_30 = arith.constant 0 : index
      %c0_31 = arith.constant 0 : index
      %57 = vector.load %arg10[%c0_30, %c0_31] : memref<16x32xbf16, #tpu.memory_space<vmem>>, vector<16x32xbf16>
      tpu.vector_store %arg10[%c0_30, %c0_31], %56 {strides = array<i32>} : memref<16x32xbf16, #tpu.memory_space<vmem>>, vector<16x32xbf16>,
      %cst_32 = arith.constant 0.000000e+00 : f32
      %58 = vector.broadcast %cst_32 : f32 to vector<16x32xf32>
      %c0_33 = arith.constant 0 : index
      %c0_34 = arith.constant 0 : index
      %59 = vector.load %arg11[%c0_33, %c0_34] : memref<16x32xf32, #tpu.memory_space<vmem>>, vector<16x32xf32>
      tpu.vector_store %arg11[%c0_33, %c0_34], %58 {strides = array<i32>} : memref<16x32xf32, #tpu.memory_space<vmem>>, vector<16x32xf32>,
    } else {
    }
    %c0 = arith.constant 0 : index
    %c0_1 = arith.constant 0 : index
    %3 = vector.load %arg10[%c0, %c0_1] : memref<16x32xbf16, #tpu.memory_space<vmem>>, vector<16x32xbf16>
    %c0_2 = arith.constant 0 : index
    %c0_3 = arith.constant 0 : index
    %4 = vector.load %arg5[%c0_2, %c0_3] : memref<32x128xbf16, #tpu.memory_space<vmem>>, vector<32x128xbf16>
    %cst = arith.constant dense<0.000000e+00> : vector<16x128xf32>
    %5 = tpu.matmul %3, %4, %cst {dimension_numbers = #tpu.dot_dimension_numbers<[1], [0], [0], [1], [0, 0, 1, 1], [], []>} : vector<16x32xbf16>, vector<32x128xbf16>, vector<16x128xf32> -> vector<16x128xf32>
    %c0_4 = arith.constant 0 : index
    %c0_5 = arith.constant 0 : index
    %6 = vector.load %arg6[%c0_4, %c0_5] : memref<1x128xf32, #tpu.memory_space<vmem>>, vector<1x128xf32>
    %7 = vector.broadcast %6 : vector<1x128xf32> to vector<16x128xf32>
    %8 = arith.addf %5, %7 : vector<16x128xf32>
    %cst_6 = arith.constant 5.000000e-01 : f32
    %9 = vector.broadcast %cst_6 : f32 to vector<16x128xf32>
    %10 = arith.mulf %9, %8 : vector<16x128xf32>
    %cst_7 = arith.constant 4.471500e-02 : f32
    %11 = vector.broadcast %cst_7 : f32 to vector<16x128xf32>
    %12 = arith.mulf %11, %8 : vector<16x128xf32>
    %13 = arith.mulf %12, %8 : vector<16x128xf32>
    %14 = arith.mulf %13, %8 : vector<16x128xf32>
    %15 = arith.addf %8, %14 : vector<16x128xf32>
    %cst_8 = arith.constant 0.797884583 : f32
    %16 = vector.broadcast %cst_8 : f32 to vector<16x128xf32>
    %17 = arith.mulf %16, %15 : vector<16x128xf32>
    %18 = math.tanh %17 : vector<16x128xf32>
    %cst_9 = arith.constant 1.000000e+00 : f32
    %19 = vector.broadcast %cst_9 : f32 to vector<16x128xf32>
    %20 = arith.addf %19, %18 : vector<16x128xf32>
    %21 = arith.mulf %10, %20 : vector<16x128xf32>
    %c0_10 = arith.constant 0 : index
    %c0_11 = arith.constant 0 : index
    %22 = vector.load %arg11[%c0_10, %c0_11] : memref<16x32xf32, #tpu.memory_space<vmem>>, vector<16x32xf32>
    %23 = arith.truncf %21 : vector<16x128xf32> to vector<16x128xbf16>
    %c0_12 = arith.constant 0 : index
    %c0_13 = arith.constant 0 : index
    %24 = vector.load %arg7[%c0_12, %c0_13] : memref<128x32xbf16, #tpu.memory_space<vmem>>, vector<128x32xbf16>
    %cst_14 = arith.constant dense<0.000000e+00> : vector<16x32xf32>
    %25 = tpu.matmul %23, %24, %cst_14 {dimension_numbers = #tpu.dot_dimension_numbers<[1], [0], [0], [1], [0, 0, 1, 1], [], []>} : vector<16x128xbf16>, vector<128x32xbf16>, vector<16x32xf32> -> vector<16x32xf32>
    %26 = arith.addf %22, %25 : vector<16x32xf32>
    %c0_15 = arith.constant 0 : index
    %c0_16 = arith.constant 0 : index
    %27 = vector.load %arg11[%c0_15, %c0_16] : memref<16x32xf32, #tpu.memory_space<vmem>>, vector<16x32xf32>
    tpu.vector_store %arg11[%c0_15, %c0_16], %26 {strides = array<i32>} : memref<16x32xf32, #tpu.memory_space<vmem>>, vector<16x32xf32>,
    %c0_i32_17 = arith.constant 0 : i32
    %28 = arith.cmpi eq, %arg1, %c0_i32_17 : i32
    %29 = arith.extui %28 : i1 to i32
    %c0_i32_18 = arith.constant 0 : i32
    %30 = arith.cmpi ne, %29, %c0_i32_18 : i32
    scf.if %30 {
      %c0_19 = arith.constant 0 : index
      %c0_20 = arith.constant 0 : index
      %31 = vector.load %arg2[%c0_19, %c0_20] : memref<16x32xf32, #tpu.memory_space<vmem>>, vector<16x32xf32>
      %c0_21 = arith.constant 0 : index
      %c0_22 = arith.constant 0 : index
      %32 = vector.load %arg11[%c0_21, %c0_22] : memref<16x32xf32, #tpu.memory_space<vmem>>, vector<16x32xf32>
      %33 = arith.addf %31, %32 : vector<16x32xf32>
      %c0_23 = arith.constant 0 : index
      %c0_24 = arith.constant 0 : index
      %34 = vector.load %arg8[%c0_23, %c0_24] : memref<1x32xf32, #tpu.memory_space<vmem>>, vector<1x32xf32>
      %35 = vector.broadcast %34 : vector<1x32xf32> to vector<16x32xf32>
      %36 = arith.addf %33, %35 : vector<16x32xf32>
      %c0_25 = arith.constant 0 : index
      %c0_26 = arith.constant 0 : index
      %37 = vector.load %arg9[%c0_25, %c0_26] : memref<16x32xf32, #tpu.memory_space<vmem>>, vector<16x32xf32>
      tpu.vector_store %arg9[%c0_25, %c0_26], %36 {strides = array<i32>} : memref<16x32xf32, #tpu.memory_space<vmem>>, vector<16x32xf32>,
    } else {
    }
    return
  }
  func.func @transform_0(%arg0: i32, %arg1: i32) -> (i32, i32) {
    %c0_i32 = arith.constant 0 : i32
    %c0_i32_0 = arith.constant 0 : i32
    return %arg0, %c0_i32 : i32, i32
  }
  func.func @transform_1(%arg0: i32, %arg1: i32) -> (i32, i32) {
    %c0_i32 = arith.constant 0 : i32
    %c0_i32_0 = arith.constant 0 : i32
    %c0_i32_1 = arith.constant 0 : i32
    return %c0_i32, %c0_i32_0 : i32, i32
  }
  func.func @transform_2(%arg0: i32, %arg1: i32) -> (i32, i32) {
    %c0_i32 = arith.constant 0 : i32
    %c0_i32_0 = arith.constant 0 : i32
    %c0_i32_1 = arith.constant 0 : i32
    return %c0_i32, %c0_i32_0 : i32, i32
  }
  func.func @transform_3(%arg0: i32, %arg1: i32) -> (i32, i32) {
    %c0_i32 = arith.constant 0 : i32
    %c0_i32_0 = arith.constant 0 : i32
    return %c0_i32, %arg1 : i32, i32
  }
  func.func @transform_4(%arg0: i32, %arg1: i32) -> (i32, i32) {
    %c0_i32 = arith.constant 0 : i32
    %c0_i32_0 = arith.constant 0 : i32
    return %c0_i32, %arg1 : i32, i32
  }
  func.func @transform_5(%arg0: i32, %arg1: i32) -> (i32, i32) {
    %c0_i32 = arith.constant 0 : i32
    %c0_i32_0 = arith.constant 0 : i32
    return %arg1, %c0_i32 : i32, i32
  }
  func.func @transform_6(%arg0: i32, %arg1: i32) -> (i32, i32) {
    %c0_i32 = arith.constant 0 : i32
    %c0_i32_0 = arith.constant 0 : i32
    %c0_i32_1 = arith.constant 0 : i32
    return %c0_i32, %c0_i32_0 : i32, i32
  }
  func.func @transform_7(%arg0: i32, %arg1: i32) -> (i32, i32) {
    %c0_i32 = arith.constant 0 : i32
    %c0_i32_0 = arith.constant 0 : i32
    return %arg0, %c0_i32 : i32, i32
  }
}

module attributes {stable_mosaic.version = 11 : i64} {
  func.func @_ln_lmhead_kernel(%arg0: i32, %arg1: i32, %arg2: memref<16x32xf32, #tpu.memory_space<vmem>>, %arg3: memref<1x32xf32, #tpu.memory_space<vmem>>, %arg4: memref<1x32xf32, #tpu.memory_space<vmem>>, %arg5: memref<256x32xbf16, #tpu.memory_space<vmem>>, %arg6: memref<16x256xf32, #tpu.memory_space<vmem>>, %arg7: memref<16x32xbf16, #tpu.memory_space<vmem>>) attributes {dimension_semantics = [#tpu.dimension_semantics<parallel>, #tpu.dimension_semantics<arbitrary>], iteration_bounds = array<i64: 1, 1>, scalar_prefetch = 0 : i64, scratch_operands = 1 : i64, tpu.core_type = #tpu.core_type<tc>, window_params = [{transform_indices = @transform_0, window_bounds = array<i64: 16, 32>}, {pipeline_mode = #tpu.pipeline_mode<synchronous>, transform_indices = @transform_1, window_bounds = array<i64: 1, 32>}, {pipeline_mode = #tpu.pipeline_mode<synchronous>, transform_indices = @transform_2, window_bounds = array<i64: 1, 32>}, {transform_indices = @transform_3, window_bounds = array<i64: 256, 32>}, {transform_indices = @transform_4, window_bounds = array<i64: 16, 256>}]} {
    %c0_i32 = arith.constant 0 : i32
    %0 = arith.cmpi eq, %arg1, %c0_i32 : i32
    %1 = arith.extui %0 : i1 to i32
    %c0_i32_0 = arith.constant 0 : i32
    %2 = arith.cmpi ne, %1, %c0_i32_0 : i32
    scf.if %2 {
      %c0_6 = arith.constant 0 : index
      %c0_7 = arith.constant 0 : index
      %7 = vector.load %arg2[%c0_6, %c0_7] : memref<16x32xf32, #tpu.memory_space<vmem>>, vector<16x32xf32>
      %c0_8 = arith.constant 0 : index
      %c0_9 = arith.constant 0 : index
      %8 = vector.load %arg3[%c0_8, %c0_9] : memref<1x32xf32, #tpu.memory_space<vmem>>, vector<1x32xf32>
      %c0_10 = arith.constant 0 : index
      %c0_11 = arith.constant 0 : index
      %9 = vector.load %arg4[%c0_10, %c0_11] : memref<1x32xf32, #tpu.memory_space<vmem>>, vector<1x32xf32>
      %cst_12 = arith.constant dense<0.000000e+00> : vector<16xf32>
      %10 = vector.multi_reduction <add>, %7, %cst_12 [1] : vector<16x32xf32> to vector<16xf32>
      %11 = vector.shape_cast %10 : vector<16xf32> to vector<16x1xf32>
      %cst_13 = arith.constant 3.200000e+01 : f32
      %12 = vector.broadcast %cst_13 : f32 to vector<16x1xf32>
      %13 = arith.divf %11, %12 : vector<16x1xf32>
      %14 = vector.broadcast %13 : vector<16x1xf32> to vector<16x32xf32>
      %15 = arith.subf %7, %14 : vector<16x32xf32>
      %16 = arith.mulf %15, %15 : vector<16x32xf32>
      %cst_14 = arith.constant dense<0.000000e+00> : vector<16xf32>
      %17 = vector.multi_reduction <add>, %16, %cst_14 [1] : vector<16x32xf32> to vector<16xf32>
      %18 = vector.shape_cast %17 : vector<16xf32> to vector<16x1xf32>
      %cst_15 = arith.constant 3.200000e+01 : f32
      %19 = vector.broadcast %cst_15 : f32 to vector<16x1xf32>
      %20 = arith.divf %18, %19 : vector<16x1xf32>
      %21 = vector.broadcast %13 : vector<16x1xf32> to vector<16x32xf32>
      %22 = arith.subf %7, %21 : vector<16x32xf32>
      %cst_16 = arith.constant 9.99999974E-6 : f32
      %23 = vector.broadcast %cst_16 : f32 to vector<16x1xf32>
      %24 = arith.addf %20, %23 : vector<16x1xf32>
      %25 = math.rsqrt %24 : vector<16x1xf32>
      %26 = vector.broadcast %25 : vector<16x1xf32> to vector<16x32xf32>
      %27 = arith.mulf %22, %26 : vector<16x32xf32>
      %28 = vector.broadcast %8 : vector<1x32xf32> to vector<16x32xf32>
      %29 = arith.mulf %27, %28 : vector<16x32xf32>
      %30 = vector.broadcast %9 : vector<1x32xf32> to vector<16x32xf32>
      %31 = arith.addf %29, %30 : vector<16x32xf32>
      %32 = arith.truncf %31 : vector<16x32xf32> to vector<16x32xbf16>
      %c0_17 = arith.constant 0 : index
      %c0_18 = arith.constant 0 : index
      %33 = vector.load %arg7[%c0_17, %c0_18] : memref<16x32xbf16, #tpu.memory_space<vmem>>, vector<16x32xbf16>
      tpu.vector_store %arg7[%c0_17, %c0_18], %32 {strides = array<i32>} : memref<16x32xbf16, #tpu.memory_space<vmem>>, vector<16x32xbf16>,
    } else {
    }
    %c0 = arith.constant 0 : index
    %c0_1 = arith.constant 0 : index
    %3 = vector.load %arg7[%c0, %c0_1] : memref<16x32xbf16, #tpu.memory_space<vmem>>, vector<16x32xbf16>
    %c0_2 = arith.constant 0 : index
    %c0_3 = arith.constant 0 : index
    %4 = vector.load %arg5[%c0_2, %c0_3] : memref<256x32xbf16, #tpu.memory_space<vmem>>, vector<256x32xbf16>
    %cst = arith.constant dense<0.000000e+00> : vector<16x256xf32>
    %5 = tpu.matmul %3, %4, %cst {dimension_numbers = #tpu.dot_dimension_numbers<[1], [1], [0], [0], [0, 0, 1, 0], [], []>} : vector<16x32xbf16>, vector<256x32xbf16>, vector<16x256xf32> -> vector<16x256xf32>
    %c0_4 = arith.constant 0 : index
    %c0_5 = arith.constant 0 : index
    %6 = vector.load %arg6[%c0_4, %c0_5] : memref<16x256xf32, #tpu.memory_space<vmem>>, vector<16x256xf32>
    tpu.vector_store %arg6[%c0_4, %c0_5], %5 {strides = array<i32>} : memref<16x256xf32, #tpu.memory_space<vmem>>, vector<16x256xf32>,
    return
  }
  func.func @transform_0(%arg0: i32, %arg1: i32) -> (i32, i32) {
    %c0_i32 = arith.constant 0 : i32
    %c0_i32_0 = arith.constant 0 : i32
    return %arg0, %c0_i32 : i32, i32
  }
  func.func @transform_1(%arg0: i32, %arg1: i32) -> (i32, i32) {
    %c0_i32 = arith.constant 0 : i32
    %c0_i32_0 = arith.constant 0 : i32
    %c0_i32_1 = arith.constant 0 : i32
    return %c0_i32, %c0_i32_0 : i32, i32
  }
  func.func @transform_2(%arg0: i32, %arg1: i32) -> (i32, i32) {
    %c0_i32 = arith.constant 0 : i32
    %c0_i32_0 = arith.constant 0 : i32
    %c0_i32_1 = arith.constant 0 : i32
    return %c0_i32, %c0_i32_0 : i32, i32
  }
  func.func @transform_3(%arg0: i32, %arg1: i32) -> (i32, i32) {
    %c0_i32 = arith.constant 0 : i32
    %c0_i32_0 = arith.constant 0 : i32
    return %arg1, %c0_i32 : i32, i32
  }
  func.func @transform_4(%arg0: i32, %arg1: i32) -> (i32, i32) {
    %c0_i32 = arith.constant 0 : i32
    return %arg0, %arg1 : i32, i32
  }
}

</mosaic_0001>

<llo_original>
// kernel: gpt_forward.11
$region0: #{gpt_forward.11}
  #allocation0 [shape = 'u32[]', space=smem, size = 0x4, offset = 0x4, fixed_abs, tag = 'smem constant byte address 0x4 - core index']
  #allocation1 [shape = 'u32[144,128]{1,0:T(1,128)}', space=vmem, size = 0x12000, scoped, tag = 'internal scratch']
  %s0 = inlined_call_operand.vmem [shape: bf16[16,32], index: 0, kind: input, shape index: {}]
  %s1 = inlined_call_operand.vmem [shape: bf16[32,32], index: 1, kind: input, shape index: {}]
  %s2 = inlined_call_operand.vmem [shape: f32[1,32], index: 2, kind: input, shape index: {}]
  %s3 = inlined_call_operand.vmem [shape: f32[16,32], index: 3, kind: input, shape index: {}, may-alias: {3,4}]
  %s4 = inlined_call_operand.vmem [shape: f32[16,32], index: 4, kind: output, shape index: {}, may-alias: {3,4}]
  %s5 = sld [smem:[#allocation0]]
  $region26: #{gpt_forward.11} parent=0
    _
  %s7 = ssub.s32 1, %s5
  %s8 = scalar_select 0, %s7, %s5
  // Predicated region
  $region2: #{gpt_forward.11} parent=0 // pred_check
    _
  $region3: #{gpt_forward.11} parent=0 // pred_check_branch
    %10 = sbr.rel (0) target = $region5
  $region4: #{gpt_forward.11} parent=0 // pred_region
    _
  $region5: #{gpt_forward.11} parent=0 // pred_fallthru
    _
  // Predicated region
  $region6: #{gpt_forward.11} parent=0 // pred_check
    _
  $region7: #{gpt_forward.11} parent=0 // pred_check_branch
    %12 = sbr.rel (0) target = $region9
  $region8: #{gpt_forward.11} parent=0 // pred_region
    _
  $region9: #{gpt_forward.11} parent=0 // pred_fallthru
    _
  // Predicated region
  $region10: #{gpt_forward.11} parent=0 // pred_check
    _
  $region11: #{gpt_forward.11} parent=0 // pred_check_branch
    %14 = sbr.rel (0) target = $region13
  $region12: #{gpt_forward.11} parent=0 // pred_region
    _
  $region13: #{gpt_forward.11} parent=0 // pred_fallthru
    _
  // Predicated region
  $region14: #{gpt_forward.11} parent=0 // pred_check
    _
  $region15: #{gpt_forward.11} parent=0 // pred_check_branch
    %16 = sbr.rel (0) target = $region17
  $region16: #{gpt_forward.11} parent=0 // pred_region
    _
  $region17: #{gpt_forward.11} parent=0 // pred_fallthru
    _
  %v18 = vld [vmem:[%s0] sm:$0xf]
  %v19 = vld [vmem:[%s0 + $0x4] sm:$0xf]
  %v20 = vld [vmem:[%s1] sm:$0xf]
  %v21 = vld [vmem:[%s1 + $0x4] sm:$0xf]
  %v22 = vld [vmem:[%s1 + $0x8] sm:$0xf]
  %v23 = vld [vmem:[%s1 + $0xc] sm:$0xf]
  %v24 = vld [vmem:[%s2] sm:$0x1]
  %v26 = vlaneseq
  %v27 = vshrl.u32 %v26, 7
  %v28 = vsub.s32 0, %v27
  %v29 = vrot.slane %v24, %v28
  %v33 = vunpack.c.l.b16 %v18
  %v34 = vunpack.c.l.b16 %v19
  %v35 = vpack.c.b16 %v34, %v33
  %v40 = vunpack.c.l.b16 %v20
  %v41 = vunpack.c.l.b16 %v21
  %v42 = vunpack.c.l.b16 %v22
  %v43 = vunpack.c.l.b16 %v23
  %v44 = vpack.c.b16 %v41, %v40
  %v45 = vpack.c.b16 %v43, %v42
  %vm48 = vcmask 261120
  %v50 = vsel %vm48, %v35, 0
  %52 = vmatprep.subr.bf16.mxu0 0
  %53 = vmatpush1.bf16.msra.mxu0 0
  %54 = vmatprep.subr.bf16.mxu0 0
  %55 = vmatpush1.bf16.msra.mxu0 0
  %56 = vmatprep.subr.bf16.mxu0 0
  %57 = vmatpush1.bf16.msra.mxu0 0
  %58 = vmatprep.subr.bf16.mxu0 0
  %59 = vmatpush1.bf16.msra.mxu0 0
  %60 = vmatprep.subr.bf16.mxu0 0
  %61 = vmatpush1.bf16.msra.mxu0 0
  %62 = vmatprep.subr.bf16.mxu0 0
  %63 = vmatpush1.bf16.msra.mxu0 0
  %64 = vmatprep.subr.bf16.mxu0 0
  %65 = vmatpush1.bf16.msra.mxu0 %v45
  %66 = vmatprep.subr.bf16.mxu0 0
  %67 = vmatpush1.bf16.msra.mxu0 %v44
  %68 = vmatprep.subr.bf16.mxu0 0
  %69 = vmatpush2.bf16.msra.mxu0 0
  %70 = vmatprep.subr.bf16.mxu0 0
  %71 = vmatpush2.bf16.msra.mxu0 0
  %72 = vmatprep.subr.bf16.mxu0 0
  %73 = vmatpush2.bf16.msra.mxu0 0
  %74 = vmatprep.subr.bf16.mxu0 0
  %75 = vmatpush2.bf16.msra.mxu0 0
  %76 = vmatprep.subr.bf16.mxu0 0
  %77 = vmatpush2.bf16.msra.mxu0 0
  %78 = vmatprep.subr.bf16.mxu0 0
  %79 = vmatpush2.bf16.msra.mxu0 0
  %80 = vmatprep.subr.bf16.mxu0 0
  %81 = vmatpush2.bf16.msra.mxu0 0
  %82 = vmatprep.subr.bf16.mxu0 0
  %83 = vmatpush2.bf16.msra.mxu0 0
  %84 = vmatprep.mubr.bf16.mxu0 0
  %85 = vmatmul.mubr.bf16.gmra.mxu0 %v50
  %v86 = vpop.f32.mrf.mxu0
  %v87 = vadd.f32 %v29, %v86
  %v88 = vpop.f32.mrf.mxu0
  %v89 = vpop.f32.mrf.mxu0
  %v90 = vadd.f32 %v29, %v89
  %v91 = vpop.f32.mrf.mxu0
  %92 = vdwg.mxu0
  %v93 = vld [vmem:[%s3] sm:$0xff]
  %v94 = vld [vmem:[%s3 + $0x8] sm:$0xff]
  %v95 = vadd.f32 %v87, %v93
  %v96 = vadd.f32 %v90, %v94
  %97 = vst.msk [vmem:[%s4] sm:$0xff] %vm48, %v95
  %98 = vst.msk [vmem:[%s4 + $0x8] sm:$0xff] %vm48, %v96
  // Predicated region
  $region18: #{gpt_forward.11} parent=0 // pred_check
    _
  $region19: #{gpt_forward.11} parent=0 // pred_check_branch
    %100 = sbr.rel (0) target = $region21
  $region20: #{gpt_forward.11} parent=0 // pred_region
    _
  $region21: #{gpt_forward.11} parent=0 // pred_fallthru
    _
  // Predicated region
  $region22: #{gpt_forward.11} parent=0 // pred_check
    _
  $region23: #{gpt_forward.11} parent=0 // pred_check_branch
    %102 = sbr.rel (0) target = $region25
  $region24: #{gpt_forward.11} parent=0 // pred_region
    _
  $region25: #{gpt_forward.11} parent=0 // pred_fallthru
    _

// kernel: gpt_forward.9
$region0: #{gpt_forward.9}
  #allocation0 [shape = 'u32[]', space=smem, size = 0x4, offset = 0x4, fixed_abs, tag = 'smem constant byte address 0x4 - core index']
  #allocation1 [shape = 'u32[144,128]{1,0:T(1,128)}', space=vmem, size = 0x12000, scoped, tag = 'internal scratch']
  %s0 = inlined_call_operand.vmem [shape: f32[16,32], index: 0, kind: input, shape index: {}]
  %s1 = inlined_call_operand.vmem [shape: f32[1,32], index: 1, kind: input, shape index: {}]
  %s2 = inlined_call_operand.vmem [shape: f32[1,32], index: 2, kind: input, shape index: {}]
  %s3 = inlined_call_operand.vmem [shape: bf16[32,32], index: 3, kind: input, shape index: {}]
  %s4 = inlined_call_operand.vmem [shape: bf16[32,32], index: 4, kind: input, shape index: {}]
  %s5 = inlined_call_operand.vmem [shape: bf16[32,32], index: 5, kind: input, shape index: {}]
  %s6 = inlined_call_operand.vmem [shape: f32[1,32], index: 6, kind: input, shape index: {}]
  %s7 = inlined_call_operand.vmem [shape: f32[1,32], index: 7, kind: input, shape index: {}]
  %s8 = inlined_call_operand.vmem [shape: f32[1,32], index: 8, kind: input, shape index: {}]
  %s9 = inlined_call_operand.vmem [shape: bf16[16,32], index: 9, kind: output, shape index: {0}]
  %s10 = inlined_call_operand.vmem [shape: bf16[16,32], index: 10, kind: output, shape index: {1}]
  %s11 = inlined_call_operand.vmem [shape: bf16[16,32], index: 11, kind: output, shape index: {2}]
  %12 = xla_tuple %s9, %s10, %s11
  %s13 = sld [smem:[#allocation0]]
  $region62: #{gpt_forward.9} parent=0
    _
  %s15 = ssub.s32 1, %s13
  %s16 = scalar_select 0, %s15, %s13
  // Predicated region
  $region2: #{gpt_forward.9} parent=0 // pred_check
    _
  $region3: #{gpt_forward.9} parent=0 // pred_check_branch
    %18 = sbr.rel (0) target = $region5
  $region4: #{gpt_forward.9} parent=0 // pred_region
    _
  $region5: #{gpt_forward.9} parent=0 // pred_fallthru
    _
  // Predicated region
  $region6: #{gpt_forward.9} parent=0 // pred_check
    _
  $region7: #{gpt_forward.9} parent=0 // pred_check_branch
    %20 = sbr.rel (0) target = $region9
  $region8: #{gpt_forward.9} parent=0 // pred_region
    _
  $region9: #{gpt_forward.9} parent=0 // pred_fallthru
    _
  // Predicated region
  $region10: #{gpt_forward.9} parent=0 // pred_check
    _
  $region11: #{gpt_forward.9} parent=0 // pred_check_branch
    %22 = sbr.rel (0) target = $region13
  $region12: #{gpt_forward.9} parent=0 // pred_region
    _
  $region13: #{gpt_forward.9} parent=0 // pred_fallthru
    _
  // Predicated region
  $region14: #{gpt_forward.9} parent=0 // pred_check
    _
  $region15: #{gpt_forward.9} parent=0 // pred_check_branch
    %24 = sbr.rel (0) target = $region17
  $region16: #{gpt_forward.9} parent=0 // pred_region
    _
  $region17: #{gpt_forward.9} parent=0 // pred_fallthru
    _
  // Predicated region
  $region18: #{gpt_forward.9} parent=0 // pred_check
    _
  $region19: #{gpt_forward.9} parent=0 // pred_check_branch
    %26 = sbr.rel (0) target = $region21
  $region20: #{gpt_forward.9} parent=0 // pred_region
    _
  $region21: #{gpt_forward.9} parent=0 // pred_fallthru
    _
  // Predicated region
  $region22: #{gpt_forward.9} parent=0 // pred_check
    _
  $region23: #{gpt_forward.9} parent=0 // pred_check_branch
    %28 = sbr.rel (0) target = $region25
  $region24: #{gpt_forward.9} parent=0 // pred_region
    _
  $region25: #{gpt_forward.9} parent=0 // pred_fallthru
    _
  // Predicated region
  $region26: #{gpt_forward.9} parent=0 // pred_check
    _
  $region27: #{gpt_forward.9} parent=0 // pred_check_branch
    %30 = sbr.rel (0) target = $region29
  $region28: #{gpt_forward.9} parent=0 // pred_region
    _
  $region29: #{gpt_forward.9} parent=0 // pred_fallthru
    _
  // Predicated region
  $region30: #{gpt_forward.9} parent=0 // pred_check
    _
  $region31: #{gpt_forward.9} parent=0 // pred_check_branch
    %32 = sbr.rel (0) target = $region33
  $region32: #{gpt_forward.9} parent=0 // pred_region
    _
  $region33: #{gpt_forward.9} parent=0 // pred_fallthru
    _
  // Predicated region
  $region34: #{gpt_forward.9} parent=0 // pred_check
    _
  $region35: #{gpt_forward.9} parent=0 // pred_check_branch
    %34 = sbr.rel (0) target = $region37
  $region36: #{gpt_forward.9} parent=0 // pred_region
    _
  $region37: #{gpt_forward.9} parent=0 // pred_fallthru
    _
  %v36 = vld [vmem:[%s0] sm:$0xff]
  %v37 = vld [vmem:[%s0 + $0x8] sm:$0xff]
  %v38 = vld [vmem:[%s1] sm:$0x1]
  %v39 = vld [vmem:[%s2] sm:$0x1]
  %vm40 = vcmask 261120
  %v41 = vsel %vm40, %v36, 0.0
  %42 = vadd.xlane.f32.xlu0 %v41
  %v43 = vpop.xlane.xlu0 %42
  %v44 = vsel %vm40, %v37, 0.0
  %45 = vadd.xlane.f32.xlu0 %v44
  %v46 = vpop.xlane.xlu0 %45
  %v47 = vrcp.pop 32.0
  %v48 = vmul.f32 %v43, %v47
  %v49 = vmul.f32 %v46, %v47
  %v50 = vsub.f32 %v36, %v48
  %v51 = vsub.f32 %v37, %v49
  %v52 = vmul.f32 %v50, %v50
  %v53 = vmul.f32 %v51, %v51
  %v54 = vsel %vm40, %v52, 0.0
  %55 = vadd.xlane.f32.xlu0 %v54
  %v56 = vpop.xlane.xlu0 %55
  %v57 = vsel %vm40, %v53, 0.0
  %58 = vadd.xlane.f32.xlu0 %v57
  %v59 = vpop.xlane.xlu0 %58
  %v60 = vmul.f32 %v56, %v47
  %v61 = vmul.f32 %v59, %v47
  %v62 = vadd.f32 %v60, 1e-05
  %v63 = vadd.f32 %v61, 1e-05
  %v64 = vrsqrt.pop %v62
  %v65 = vrsqrt.pop %v63
  %v66 = vmul.f32 %v50, %v64
  %v67 = vmul.f32 %v51, %v65
  %v69 = vlaneseq
  %v70 = vshrl.u32 %v69, 7
  %v71 = vsub.s32 0, %v70
  %v72 = vrot.slane %v38, %v71
  %v74 = vmul.f32 %v66, %v72
  %v75 = vmul.f32 %v67, %v72
  %v77 = vlaneseq
  %v78 = vshrl.u32 %v77, 7
  %v79 = vsub.s32 0, %v78
  %v80 = vrot.slane %v39, %v79
  %v82 = vadd.f32 %v74, %v80
  %v83 = vadd.f32 %v75, %v80
  %v84 = vpack.c.bf16 %v83, %v82
  %v85 = vld [vmem:[%s3] sm:$0xf]
  %v86 = vld [vmem:[%s3 + $0x4] sm:$0xf]
  %v87 = vld [vmem:[%s3 + $0x8] sm:$0xf]
  %v88 = vld [vmem:[%s3 + $0xc] sm:$0xf]
  %v89 = vld [vmem:[%s6] sm:$0x1]
  %v91 = vlaneseq
  %v92 = vshrl.u32 %v91, 7
  %v93 = vsub.s32 0, %v92
  %v94 = vrot.slane %v89, %v93
  %v100 = vunpack.c.l.b16 %v85
  %v101 = vunpack.c.l.b16 %v86
  %v102 = vunpack.c.l.b16 %v87
  %v103 = vunpack.c.l.b16 %v88
  %v104 = vpack.c.b16 %v101, %v100
  %v105 = vpack.c.b16 %v103, %v102
  %v109 = vsel %vm40, %v84, 0
  %111 = vmatprep.subr.bf16.mxu0 0
  %112 = vmatpush1.bf16.msra.mxu0 0
  %113 = vmatprep.subr.bf16.mxu0 0
  %114 = vmatpush1.bf16.msra.mxu0 0
  %115 = vmatprep.subr.bf16.mxu0 0
  %116 = vmatpush1.bf16.msra.mxu0 0
  %117 = vmatprep.subr.bf16.mxu0 0
  %118 = vmatpush1.bf16.msra.mxu0 0
  %119 = vmatprep.subr.bf16.mxu0 0
  %120 = vmatpush1.bf16.msra.mxu0 0
  %121 = vmatprep.subr.bf16.mxu0 0
  %122 = vmatpush1.bf16.msra.mxu0 0
  %123 = vmatprep.subr.bf16.mxu0 0
  %124 = vmatpush1.bf16.msra.mxu0 %v105
  %125 = vmatprep.subr.bf16.mxu0 0
  %126 = vmatpush1.bf16.msra.mxu0 %v104
  %127 = vmatprep.subr.bf16.mxu0 0
  %128 = vmatpush2.bf16.msra.mxu0 0
  %129 = vmatprep.subr.bf16.mxu0 0
  %130 = vmatpush2.bf16.msra.mxu0 0
  %131 = vmatprep.subr.bf16.mxu0 0
  %132 = vmatpush2.bf16.msra.mxu0 0
  %133 = vmatprep.subr.bf16.mxu0 0
  %134 = vmatpush2.bf16.msra.mxu0 0
  %135 = vmatprep.subr.bf16.mxu0 0
  %136 = vmatpush2.bf16.msra.mxu0 0
  %137 = vmatprep.subr.bf16.mxu0 0
  %138 = vmatpush2.bf16.msra.mxu0 0
  %139 = vmatprep.subr.bf16.mxu0 0
  %140 = vmatpush2.bf16.msra.mxu0 0
  %141 = vmatprep.subr.bf16.mxu0 0
  %142 = vmatpush2.bf16.msra.mxu0 0
  %143 = vmatprep.mubr.bf16.mxu0 0
  %144 = vmatmul.mubr.bf16.gmra.mxu0 %v109
  %v145 = vpop.f32.mrf.mxu0
  %v146 = vadd.f32 %v94, %v145
  %v147 = vpop.f32.mrf.mxu0
  %v148 = vpop.f32.mrf.mxu0
  %v149 = vadd.f32 %v94, %v148
  %v150 = vpop.f32.mrf.mxu0
  %151 = vdwg.mxu0
  %v152 = vpack.c.bf16 %v149, %v146
  %v154 = vunpack.c.l.b16 %v152
  %v155 = vunpack.c.h.b16 %v152
  %v156 = vpack.c.b16 %v154, %v154
  %v157 = vpack.c.b16 %v155, %v155
  %vm160 = vcmask 257024
  %161 = vst.msk [vmem:[%s9] sm:$0xf] %vm160, %v156
  %162 = vst.msk [vmem:[%s9 + $0x4] sm:$0xf] %vm160, %v157
  %v163 = vld [vmem:[%s4] sm:$0xf]
  %v164 = vld [vmem:[%s4 + $0x4] sm:$0xf]
  %v165 = vld [vmem:[%s4 + $0x8] sm:$0xf]
  %v166 = vld [vmem:[%s4 + $0xc] sm:$0xf]
  %v167 = vld [vmem:[%s7] sm:$0x1]
  %v169 = vlaneseq
  %v170 = vshrl.u32 %v169, 7
  %v171 = vsub.s32 0, %v170
  %v172 = vrot.slane %v167, %v171
  %v178 = vunpack.c.l.b16 %v163
  %v179 = vunpack.c.l.b16 %v164
  %v180 = vunpack.c.l.b16 %v165
  %v181 = vunpack.c.l.b16 %v166
  %v182 = vpack.c.b16 %v179, %v178
  %v183 = vpack.c.b16 %v181, %v180
  %186 = vmatprep.subr.bf16.mxu0 0
  %187 = vmatpush1.bf16.msra.mxu0 0
  %188 = vmatprep.subr.bf16.mxu0 0
  %189 = vmatpush1.bf16.msra.mxu0 0
  %190 = vmatprep.subr.bf16.mxu0 0
  %191 = vmatpush1.bf16.msra.mxu0 0
  %192 = vmatprep.subr.bf16.mxu0 0
  %193 = vmatpush1.bf16.msra.mxu0 0
  %194 = vmatprep.subr.bf16.mxu0 0
  %195 = vmatpush1.bf16.msra.mxu0 0
  %196 = vmatprep.subr.bf16.mxu0 0
  %197 = vmatpush1.bf16.msra.mxu0 0
  %198 = vmatprep.subr.bf16.mxu0 0
  %199 = vmatpush1.bf16.msra.mxu0 %v183
  %200 = vmatprep.subr.bf16.mxu0 0
  %201 = vmatpush1.bf16.msra.mxu0 %v182
  %202 = vmatprep.subr.bf16.mxu0 0
  %203 = vmatpush2.bf16.msra.mxu0 0
  %204 = vmatprep.subr.bf16.mxu0 0
  %205 = vmatpush2.bf16.msra.mxu0 0
  %206 = vmatprep.subr.bf16.mxu0 0
  %207 = vmatpush2.bf16.msra.mxu0 0
  %208 = vmatprep.subr.bf16.mxu0 0
  %209 = vmatpush2.bf16.msra.mxu0 0
  %210 = vmatprep.subr.bf16.mxu0 0
  %211 = vmatpush2.bf16.msra.mxu0 0
  %212 = vmatprep.subr.bf16.mxu0 0
  %213 = vmatpush2.bf16.msra.mxu0 0
  %214 = vmatprep.subr.bf16.mxu0 0
  %215 = vmatpush2.bf16.msra.mxu0 0
  %216 = vmatprep.subr.bf16.mxu0 0
  %217 = vmatpush2.bf16.msra.mxu0 0
  %218 = vmatprep.mubr.bf16.mxu0 0
  %219 = vmatmul.mubr.bf16.gmra.mxu0 %v109
  %v220 = vpop.f32.mrf.mxu0
  %v221 = vadd.f32 %v172, %v220
  %v222 = vpop.f32.mrf.mxu0
  %v223 = vpop.f32.mrf.mxu0
  %v224 = vadd.f32 %v172, %v223
  %v225 = vpop.f32.mrf.mxu0
  %226 = vdwg.mxu0
  %v227 = vpack.c.bf16 %v224, %v221
  %v229 = vunpack.c.l.b16 %v227
  %v230 = vunpack.c.h.b16 %v227
  %v231 = vpack.c.b16 %v229, %v229
  %v232 = vpack.c.b16 %v230, %v230
  %235 = vst.msk [vmem:[%s10] sm:$0xf] %vm160, %v231
  %236 = vst.msk [vmem:[%s10 + $0x4] sm:$0xf] %vm160, %v232
  %v237 = vld [vmem:[%s5] sm:$0xf]
  %v238 = vld [vmem:[%s5 + $0x4] sm:$0xf]
  %v239 = vld [vmem:[%s5 + $0x8] sm:$0xf]
  %v240 = vld [vmem:[%s5 + $0xc] sm:$0xf]
  %v241 = vld [vmem:[%s8] sm:$0x1]
  %v243 = vlaneseq
  %v244 = vshrl.u32 %v243, 7
  %v245 = vsub.s32 0, %v244
  %v246 = vrot.slane %v241, %v245
  %v252 = vunpack.c.l.b16 %v237
  %v253 = vunpack.c.l.b16 %v238
  %v254 = vunpack.c.l.b16 %v239
  %v255 = vunpack.c.l.b16 %v240
  %v256 = vpack.c.b16 %v253, %v252
  %v257 = vpack.c.b16 %v255, %v254
  %260 = vmatprep.subr.bf16.mxu0 0
  %261 = vmatpush1.bf16.msra.mxu0 0
  %262 = vmatprep.subr.bf16.mxu0 0
  %263 = vmatpush1.bf16.msra.mxu0 0
  %264 = vmatprep.subr.bf16.mxu0 0
  %265 = vmatpush1.bf16.msra.mxu0 0
  %266 = vmatprep.subr.bf16.mxu0 0
  %267 = vmatpush1.bf16.msra.mxu0 0
  %268 = vmatprep.subr.bf16.mxu0 0
  %269 = vmatpush1.bf16.msra.mxu0 0
  %270 = vmatprep.subr.bf16.mxu0 0
  %271 = vmatpush1.bf16.msra.mxu0 0
  %272 = vmatprep.subr.bf16.mxu0 0
  %273 = vmatpush1.bf16.msra.mxu0 %v257
  %274 = vmatprep.subr.bf16.mxu0 0
  %275 = vmatpush1.bf16.msra.mxu0 %v256
  %276 = vmatprep.subr.bf16.mxu0 0
  %277 = vmatpush2.bf16.msra.mxu0 0
  %278 = vmatprep.subr.bf16.mxu0 0
  %279 = vmatpush2.bf16.msra.mxu0 0
  %280 = vmatprep.subr.bf16.mxu0 0
  %281 = vmatpush2.bf16.msra.mxu0 0
  %282 = vmatprep.subr.bf16.mxu0 0
  %283 = vmatpush2.bf16.msra.mxu0 0
  %284 = vmatprep.subr.bf16.mxu0 0
  %285 = vmatpush2.bf16.msra.mxu0 0
  %286 = vmatprep.subr.bf16.mxu0 0
  %287 = vmatpush2.bf16.msra.mxu0 0
  %288 = vmatprep.subr.bf16.mxu0 0
  %289 = vmatpush2.bf16.msra.mxu0 0
  %290 = vmatprep.subr.bf16.mxu0 0
  %291 = vmatpush2.bf16.msra.mxu0 0
  %292 = vmatprep.mubr.bf16.mxu0 0
  %293 = vmatmul.mubr.bf16.gmra.mxu0 %v109
  %v294 = vpop.f32.mrf.mxu0
  %v295 = vadd.f32 %v246, %v294
  %v296 = vpop.f32.mrf.mxu0
  %v297 = vpop.f32.mrf.mxu0
  %v298 = vadd.f32 %v246, %v297
  %v299 = vpop.f32.mrf.mxu0
  %300 = vdwg.mxu0
  %v301 = vpack.c.bf16 %v298, %v295
  %v303 = vunpack.c.l.b16 %v301
  %v304 = vunpack.c.h.b16 %v301
  %v305 = vpack.c.b16 %v303, %v303
  %v306 = vpack.c.b16 %v304, %v304
  %309 = vst.msk [vmem:[%s11] sm:$0xf] %vm160, %v305
  %310 = vst.msk [vmem:[%s11 + $0x4] sm:$0xf] %vm160, %v306
  // Predicated region
  $region38: #{gpt_forward.9} parent=0 // pred_check
    _
  $region39: #{gpt_forward.9} parent=0 // pred_check_branch
    %312 = sbr.rel (0) target = $region41
  $region40: #{gpt_forward.9} parent=0 // pred_region
    _
  $region41: #{gpt_forward.9} parent=0 // pred_fallthru
    _
  // Predicated region
  $region42: #{gpt_forward.9} parent=0 // pred_check
    _
  $region43: #{gpt_forward.9} parent=0 // pred_check_branch
    %314 = sbr.rel (0) target = $region45
  $region44: #{gpt_forward.9} parent=0 // pred_region
    _
  $region45: #{gpt_forward.9} parent=0 // pred_fallthru
    _
  // Predicated region
  $region46: #{gpt_forward.9} parent=0 // pred_check
    _
  $region47: #{gpt_forward.9} parent=0 // pred_check_branch
    %316 = sbr.rel (0) target = $region49
  $region48: #{gpt_forward.9} parent=0 // pred_region
    _
  $region49: #{gpt_forward.9} parent=0 // pred_fallthru
    _
  // Predicated region
  $region50: #{gpt_forward.9} parent=0 // pred_check
    _
  $region51: #{gpt_forward.9} parent=0 // pred_check_branch
    %318 = sbr.rel (0) target = $region53
  $region52: #{gpt_forward.9} parent=0 // pred_region
    _
  $region53: #{gpt_forward.9} parent=0 // pred_fallthru
    _
  // Predicated region
  $region54: #{gpt_forward.9} parent=0 // pred_check
    _
  $region55: #{gpt_forward.9} parent=0 // pred_check_branch
    %320 = sbr.rel (0) target = $region57
  $region56: #{gpt_forward.9} parent=0 // pred_region
    _
  $region57: #{gpt_forward.9} parent=0 // pred_fallthru
    _
  // Predicated region
  $region58: #{gpt_forward.9} parent=0 // pred_check
    _
  $region59: #{gpt_forward.9} parent=0 // pred_check_branch
    %322 = sbr.rel (0) target = $region61
  $region60: #{gpt_forward.9} parent=0 // pred_region
    _
  $region61: #{gpt_forward.9} parent=0 // pred_fallthru
    _

// kernel: gpt_forward.10
$region0: #{gpt_forward.10}
  #allocation0 [shape = 'u32[]', space=smem, size = 0x4, offset = 0x4, fixed_abs, tag = 'smem constant byte address 0x4 - core index']
  #allocation1 [shape = 'u32[144,128]{1,0:T(1,128)}', space=vmem, size = 0x12000, scoped, tag = 'internal scratch']
  #allocation2 [shape = 'f32[2,8,1]{2,1,0:T(8,128)}', space=vmem, size = 0x2000, scoped, tag = 'scratch operand']
  #allocation3 [shape = 'f32[2,8,1]{2,1,0:T(8,128)}', space=vmem, size = 0x2000, scoped, tag = 'scratch operand']
  #allocation4 [shape = 'f32[2,8,16]{2,1,0:T(8,128)}', space=vmem, size = 0x2000, scoped, tag = 'scratch operand']
  %s0 = inlined_call_operand.vmem [shape: bf16[16,32], index: 0, kind: input, shape index: {}]
  %s1 = inlined_call_operand.vmem [shape: bf16[16,32], index: 1, kind: input, shape index: {}]
  %s2 = inlined_call_operand.vmem [shape: bf16[16,32], index: 2, kind: input, shape index: {}]
  %s3 = inlined_call_operand.vmem [shape: bf16[16,32], index: 3, kind: output, shape index: {}]
  %s4 = sld [smem:[#allocation0]]
  $region61: #{gpt_forward.10} parent=0
    _
  %s6 = ssub.s32 1, %s4
  %s7 = scalar_select 0, %s6, %s4
  loop: start=0, step=1, limit=4
  $region2: #{gpt_forward.10} parent=0 // loop_pre_header
    _
  $region3: #{gpt_forward.10} parent=0 // loop_header
    %s9 = sphi 0, %s13
    %p10 = scmp.ge.s32.totalorder %s9, 4
    %s16 = sphi 0, %s35
    %s17 = sphi 0, %s31
    %s18 = sphi 0, %s27
    %s19 = sphi 0, %s16
    %s20 = sphi 0, %s17
    %s21 = sphi 0, %s18
    %s22 = sphi 0, %s19
    %s23 = sphi 0, %s20
    %s24 = sphi 0, %s21
    %s40 = sphi 0, %s42
    %s43 = sphi 0, %s40
    %s44 = sphi 0, %s43
    %s60 = sphi 0, %s44
    %s68 = sphi 0, %s70
    %s71 = sphi 0, %s68
    %s72 = sphi 0, %s71
    %s88 = sphi 0, %s72
    %s96 = sphi 0, %s98
    %s99 = sphi 0, %s96
    %s100 = sphi 0, %s99
    %s116 = sphi 0, %s100
    %s124 = sphi 0, %s126
    %s127 = sphi 0, %s124
    %s128 = sphi 0, %s127
    %s144 = sphi 0, %s128
  $region4: #{gpt_forward.10} parent=0 // loop_header_branch
    %12 = sbr.rel (%p10) target = $region8
  $region5: #{gpt_forward.10} parent=0 // loop_body
    %s14 = ssub.s32 %s9, 1
    %s15 = ssub.s32 %s9, 2
    %s25 = sadd.s32 1, %s18
    %p26 = scmp.ge.s32.totalorder %s25, 1
    %s27 = scalar_select %p26, 0, %s25
    %s28 = sadd.s32 1, %s17
    %s29 = scalar_select %p26, %s28, %s17
    %p30 = scmp.ge.s32.totalorder %s29, 1
    %s31 = scalar_select %p30, 0, %s29
    %s32 = sadd.s32 1, %s16
    %s33 = scalar_select %p30, %s32, %s16
    %p34 = scmp.ge.s32.totalorder %s33, 2
    %s35 = scalar_select %p34, 0, %s33
    %s36 = sadd.s32 %s16, %s17
    %s37 = sadd.s32 %s35, %s31
    %s38 = ssub.s32 %s36, %s37
    %p39 = scmp.eq.s32.totalorder %s38, 0
    %s41 = sadd.s32 %s40, 1
    %s42 = scalar_select %p39, %s40, %s41
    %p45 = pneg %p39
    %p46 = scmp.eq.s32.totalorder %s9, 1
    %p47 = por %p45, %p46
    %p48 = scmp.ne.s32.totalorder %s40, %s43
    %p49 = scmp.eq.s32.totalorder %s9, 0
    %p50 = por %p48, %p49
    %p51 = scmp.ne.s32.totalorder %s40, %s43
    %p52 = scmp.eq.s32.totalorder %s14, 1
    %p53 = por %p51, %p52
    %p54 = scmp.ne.s32.totalorder %s43, %s44
    %p55 = scmp.eq.s32.totalorder %s14, 0
    %p56 = por %p54, %p55
    %p57 = scmp.ne.s32.totalorder %s43, %s44
    %p58 = scmp.eq.s32.totalorder %s15, 1
    %p59 = por %p57, %p58
    %p61 = scmp.ne.s32.totalorder %s44, %s60
    %p62 = scmp.eq.s32.totalorder %s15, 0
    %p63 = por %p61, %p62
    %s64 = sadd.s32 %s16, %s18
    %s65 = sadd.s32 %s35, %s27
    %s66 = ssub.s32 %s64, %s65
    %p67 = scmp.eq.s32.totalorder %s66, 0
    %s69 = sadd.s32 %s68, 1
    %s70 = scalar_select %p67, %s68, %s69
    %p73 = pneg %p67
    %p74 = scmp.eq.s32.totalorder %s9, 1
    %p75 = por %p73, %p74
    %p76 = scmp.ne.s32.totalorder %s68, %s71
    %p77 = scmp.eq.s32.totalorder %s9, 0
    %p78 = por %p76, %p77
    %p79 = scmp.ne.s32.totalorder %s68, %s71
    %p80 = scmp.eq.s32.totalorder %s14, 1
    %p81 = por %p79, %p80
    %p82 = scmp.ne.s32.totalorder %s71, %s72
    %p83 = scmp.eq.s32.totalorder %s14, 0
    %p84 = por %p82, %p83
    %p85 = scmp.ne.s32.totalorder %s71, %s72
    %p86 = scmp.eq.s32.totalorder %s15, 1
    %p87 = por %p85, %p86
    %p89 = scmp.ne.s32.totalorder %s72, %s88
    %p90 = scmp.eq.s32.totalorder %s15, 0
    %p91 = por %p89, %p90
    %s92 = sadd.s32 %s16, %s18
    %s93 = sadd.s32 %s35, %s27
    %s94 = ssub.s32 %s92, %s93
    %p95 = scmp.eq.s32.totalorder %s94, 0
    %s97 = sadd.s32 %s96, 1
    %s98 = scalar_select %p95, %s96, %s97
    %p101 = pneg %p95
    %p102 = scmp.eq.s32.totalorder %s9, 1
    %p103 = por %p101, %p102
    %p104 = scmp.ne.s32.totalorder %s96, %s99
    %p105 = scmp.eq.s32.totalorder %s9, 0
    %p106 = por %p104, %p105
    %p107 = scmp.ne.s32.totalorder %s96, %s99
    %p108 = scmp.eq.s32.totalorder %s14, 1
    %p109 = por %p107, %p108
    %p110 = scmp.ne.s32.totalorder %s99, %s100
    %p111 = scmp.eq.s32.totalorder %s14, 0
    %p112 = por %p110, %p111
    %p113 = scmp.ne.s32.totalorder %s99, %s100
    %p114 = scmp.eq.s32.totalorder %s15, 1
    %p115 = por %p113, %p114
    %p117 = scmp.ne.s32.totalorder %s100, %s116
    %p118 = scmp.eq.s32.totalorder %s15, 0
    %p119 = por %p117, %p118
    %s120 = sadd.s32 %s16, %s17
    %s121 = sadd.s32 %s35, %s31
    %s122 = ssub.s32 %s120, %s121
    %p123 = scmp.eq.s32.totalorder %s122, 0
    %s125 = sadd.s32 %s124, 1
    %s126 = scalar_select %p123, %s124, %s125
    %p129 = pneg %p123
    %p130 = scmp.eq.s32.totalorder %s9, 1
    %p131 = por %p129, %p130
    %p132 = scmp.ne.s32.totalorder %s124, %s127
    %p133 = scmp.eq.s32.totalorder %s9, 0
    %p134 = por %p132, %p133
    %p135 = scmp.ne.s32.totalorder %s124, %s127
    %p136 = scmp.eq.s32.totalorder %s14, 1
    %p137 = por %p135, %p136
    %p138 = scmp.ne.s32.totalorder %s127, %s128
    %p139 = scmp.eq.s32.totalorder %s14, 0
    %p140 = por %p138, %p139
    %p141 = scmp.ne.s32.totalorder %s127, %s128
    %p142 = scmp.eq.s32.totalorder %s15, 1
    %p143 = por %p141, %p142
    %p145 = scmp.ne.s32.totalorder %s128, %s144
    %p146 = scmp.eq.s32.totalorder %s15, 0
    %p147 = por %p145, %p146
    %p148 = scmp.le.s32.totalorder 1, %s9
    %p149 = scmp.lt.s32.totalorder %s9, 3
    %p150 = pnand %p148, %p149
    %p151 = pneg %p150
    // Predicated region
    $region9: #{gpt_forward.10} parent=5 // pred_check
      _
    $region10: #{gpt_forward.10} parent=5 // pred_check_branch
      %153 = sbr.rel (%p150) target = $region12
    $region11: #{gpt_forward.10} parent=5 // pred_region
      %s154 = ssub.s32 %s9, 1
    $region12: #{gpt_forward.10} parent=5 // pred_fallthru
      _
    %p155 = scmp.lt.s32.totalorder %s9, 2
    // Predicated region
    $region13: #{gpt_forward.10} parent=5 // pred_check
      %p156 = pneg %p155
    $region14: #{gpt_forward.10} parent=5 // pred_check_branch
      %158 = sbr.rel (%p156) target = $region16
    $region15: #{gpt_forward.10} parent=5 // pred_region
      // Predicated region
      $region17: #{gpt_forward.10} parent=15 // pred_check
        %p159 = pneg %p50
      $region18: #{gpt_forward.10} parent=15 // pred_check_branch
        %161 = sbr.rel (%p159) target = $region20
      $region19: #{gpt_forward.10} parent=15 // pred_region
        %s162 = sadd.s32 %s16, %s17
        %p163 = scmp.lt.s32.totalorder %s162, 1
        %s164 = scalar_select %p163, %s162, 1
        %s165 = smul.addr %s164, 4
        %s166 = scalar_lea.vmem %s0, %s165
        %s167 = sadd.s32 %s16, %s17
      $region20: #{gpt_forward.10} parent=15 // pred_fallthru
        _
      // Predicated region
      $region21: #{gpt_forward.10} parent=15 // pred_check
        %p168 = pneg %p78
      $region22: #{gpt_forward.10} parent=15 // pred_check_branch
        %170 = sbr.rel (%p168) target = $region24
      $region23: #{gpt_forward.10} parent=15 // pred_region
        %s171 = sadd.s32 %s16, %s18
        %p172 = scmp.lt.s32.totalorder %s171, 1
        %s173 = scalar_select %p172, %s171, 1
        %s174 = smul.addr %s173, 4
        %s175 = scalar_lea.vmem %s1, %s174
        %s176 = sadd.s32 %s16, %s18
      $region24: #{gpt_forward.10} parent=15 // pred_fallthru
        _
      // Predicated region
      $region25: #{gpt_forward.10} parent=15 // pred_check
        %p177 = pneg %p106
      $region26: #{gpt_forward.10} parent=15 // pred_check_branch
        %179 = sbr.rel (%p177) target = $region28
      $region27: #{gpt_forward.10} parent=15 // pred_region
        %s180 = sadd.s32 %s16, %s18
        %p181 = scmp.lt.s32.totalorder %s180, 1
        %s182 = scalar_select %p181, %s180, 1
        %s183 = smul.addr %s182, 4
        %s184 = scalar_lea.vmem %s2, %s183
        %s185 = sadd.s32 %s16, %s18
      $region28: #{gpt_forward.10} parent=15 // pred_fallthru
        _
    $region16: #{gpt_forward.10} parent=5 // pred_fallthru
      _
    %p186 = scmp.le.s32.totalorder 1, %s9
    %p187 = scmp.lt.s32.totalorder %s9, 3
    %p188 = pnand %p186, %p187
    %p189 = pneg %p188
    // Predicated region
    $region29: #{gpt_forward.10} parent=5 // pred_check
      _
    $region30: #{gpt_forward.10} parent=5 // pred_check_branch
      %191 = sbr.rel (%p188) target = $region32
    $region31: #{gpt_forward.10} parent=5 // pred_region
      %s192 = ssub.s32 %s9, 1
      %s193 = sadd.s32 %s19, %s20
      %p194 = scmp.lt.s32.totalorder %s193, 1
      %s195 = scalar_select %p194, %s193, 1
      %s196 = smul.addr %s195, 4
      %s197 = scalar_lea.vmem %s0, %s196
      %p198 = pneg %p56
      %p199 = pneg %p53
      %s200 = sadd.s32 %s19, %s21
      %p201 = scmp.lt.s32.totalorder %s200, 1
      %s202 = scalar_select %p201, %s200, 1
      %s203 = smul.addr %s202, 4
      %s204 = scalar_lea.vmem %s1, %s203
      %p205 = pneg %p84
      %p206 = pneg %p81
      %s207 = sadd.s32 %s19, %s21
      %p208 = scmp.lt.s32.totalorder %s207, 1
      %s209 = scalar_select %p208, %s207, 1
      %s210 = smul.addr %s209, 4
      %s211 = scalar_lea.vmem %s2, %s210
      %p212 = pneg %p112
      %p213 = pneg %p109
      %p214 = pneg %p140
      %p215 = pneg %p137
      %s216 = sadd.s32 %s19, %s20
      %p217 = scmp.lt.s32.totalorder %s216, 1
      %s218 = scalar_select %p217, %s216, 1
      %s219 = smul.addr %s218, 4
      %s220 = scalar_lea.vmem %s3, %s219
      %s221 = sadd.s32 %s19, %s20
      %p222 = scmp.lt.s32.totalorder %s221, 1
      %s223 = scalar_select %p222, %s221, 1
      %s224 = smul.addr %s223, 4
      %s225 = scalar_lea.vmem %s0, %s224
      %s226 = sadd.s32 %s19, %s20
      %s227 = sadd.s32 %s19, %s21
      %p228 = scmp.lt.s32.totalorder %s227, 1
      %s229 = scalar_select %p228, %s227, 1
      %s230 = smul.addr %s229, 4
      %s231 = scalar_lea.vmem %s1, %s230
      %s232 = sadd.s32 %s19, %s21
      %s233 = sadd.s32 %s19, %s21
      %p234 = scmp.lt.s32.totalorder %s233, 1
      %s235 = scalar_select %p234, %s233, 1
      %s236 = smul.addr %s235, 4
      %s237 = scalar_lea.vmem %s2, %s236
      %s238 = sadd.s32 %s19, %s21
      %s239 = sadd.s32 %s19, %s20
      %p240 = scmp.lt.s32.totalorder %s239, 1
      %s241 = scalar_select %p240, %s239, 1
      %s242 = smul.addr %s241, 4
      %s243 = scalar_lea.vmem %s3, %s242
      %s244 = sadd.s32 %s19, %s20
      %p246 = scmp.eq.s32.totalorder %s21, 0
      // Predicated region
      $region33: #{gpt_forward.10} parent=31 // pred_check
        %p247 = pneg %p246
      $region34: #{gpt_forward.10} parent=31 // pred_check_branch
        %249 = sbr.rel (%p247) target = $region36
      $region35: #{gpt_forward.10} parent=31 // pred_region
        %vm250 = vcmask 7168
        %251 = vst.msk [vmem:[#allocation2] sm:$0xff] %vm250, -1e+30
        %252 = vst.msk [vmem:[#allocation2 + $0x8] sm:$0xff] %vm250, -1e+30
        %253 = vst.msk [vmem:[#allocation3] sm:$0xff] %vm250, 0.0
        %254 = vst.msk [vmem:[#allocation3 + $0x8] sm:$0xff] %vm250, 0.0
        %vm255 = vcmask 130048
        %256 = vst.msk [vmem:[#allocation4] sm:$0xff] %vm255, 0.0
        %257 = vst.msk [vmem:[#allocation4 + $0x8] sm:$0xff] %vm255, 0.0
      $region36: #{gpt_forward.10} parent=31 // pred_fallthru
        _
      %p258 = scmp.lt.s32.totalorder %s21, %s20
      // Predicated region
      $region37: #{gpt_forward.10} parent=31 // pred_check
        %p259 = pneg %p258
      $region38: #{gpt_forward.10} parent=31 // pred_check_branch
        %261 = sbr.rel (%p259) target = $region40
      $region39: #{gpt_forward.10} parent=31 // pred_region
        %v262 = vld [vmem:[%s225] sm:$0xf]
        %v263 = vld [vmem:[%s231] sm:$0xf]
        %vm264 = vcmask 130048
        %v266 = vsel %vm264, %v262, 0
        %v269 = vsel %vm264, %v263, 0
        %271 = vmatprep.subr.bf16.mxu0 0
        %272 = vmatpush1.bf16.xpose.msra.mxu0 0
        %273 = vmatprep.subr.bf16.mxu0 0
        %274 = vmatpush1.bf16.xpose.msra.mxu0 0
        %275 = vmatprep.subr.bf16.mxu0 0
        %276 = vmatpush1.bf16.xpose.msra.mxu0 0
        %277 = vmatprep.subr.bf16.mxu0 0
        %278 = vmatpush1.bf16.xpose.msra.mxu0 0
        %279 = vmatprep.subr.bf16.mxu0 0
        %280 = vmatpush1.bf16.xpose.msra.mxu0 0
        %281 = vmatprep.subr.bf16.mxu0 0
        %282 = vmatpush1.bf16.xpose.msra.mxu0 0
        %283 = vmatprep.subr.bf16.mxu0 0
        %284 = vmatpush1.bf16.xpose.msra.mxu0 0
        %285 = vmatprep.subr.bf16.mxu0 0
        %286 = vmatpush1.bf16.xpose.msra.mxu0 %v269
        %287 = vmatprep.subr.bf16.mxu0 0
        %288 = vmatpush2.bf16.xpose.msra.mxu0 0
        %289 = vmatprep.subr.bf16.mxu0 0
        %290 = vmatpush2.bf16.xpose.msra.mxu0 0
        %291 = vmatprep.subr.bf16.mxu0 0
        %292 = vmatpush2.bf16.xpose.msra.mxu0 0
        %293 = vmatprep.subr.bf16.mxu0 0
        %294 = vmatpush2.bf16.xpose.msra.mxu0 0
        %295 = vmatprep.subr.bf16.mxu0 0
        %296 = vmatpush2.bf16.xpose.msra.mxu0 0
        %297 = vmatprep.subr.bf16.mxu0 0
        %298 = vmatpush2.bf16.xpose.msra.mxu0 0
        %299 = vmatprep.subr.bf16.mxu0 0
        %300 = vmatpush2.bf16.xpose.msra.mxu0 0
        %301 = vmatprep.subr.bf16.mxu0 0
        %302 = vmatpush2.bf16.xpose.msra.mxu0 0
        %303 = vmatprep.mubr.bf16.mxu0 0
        %304 = vmatmul.mubr.bf16.gmra.mxu0 %v266
        %v305 = vpop.f32.mrf.mxu0
        %v306 = vadd.f32 0.0, %v305
        %v307 = vpop.f32.mrf.mxu0
        %v308 = vpop.f32.mrf.mxu0
        %v309 = vpop.f32.mrf.mxu0
        %310 = vdwg.mxu0
        %v311 = vmul.f32 %v306, 0.25
        %v312 = vld [vmem:[#allocation2] sm:$0xff]
        %vm313 = vcmask 64512
        %v314 = vsel %vm313, %v311, -inf
        %315 = vmax.xlane.f32.xlu0 %v314
        %v316 = vpop.xlane.xlu0 %315
        %v317 = vmax.f32 %v312, %v316
        %v318 = vsub.f32 %v312, %v317
        %v319 = vmul.f32 %v318, 1.442695
        %v320 = vpow.pop %v319
        %322 = vset.pattern.permute.xlu0 0
        %323 = vperm.xlu0 %322, %v317
        %v324 = vpop.permute.xlu0 %323
        %v326 = vsub.f32 %v311, %v324
        %v327 = vmul.f32 %v326, 1.442695
        %v328 = vpow.pop %v327
        %v329 = vld [vmem:[#allocation3] sm:$0xff]
        %v330 = vmul.f32 %v320, %v329
        %v331 = vsel %vm313, %v328, 0.0
        %332 = vadd.xlane.f32.xlu0 %v331
        %v333 = vpop.xlane.xlu0 %332
        %v334 = vadd.f32 %v330, %v333
        %vm335 = vcmask 7168
        %336 = vst.msk [vmem:[#allocation3] sm:$0xff] %vm335, %v334
        %v337 = vld [vmem:[#allocation4] sm:$0xff]
        %339 = vset.pattern.permute.xlu0 0
        %340 = vperm.xlu0 %339, %v320
        %v341 = vpop.permute.xlu0 %340
        %v343 = vmul.f32 %v341, %v337
        %v344 = vpack.c.bf16 %v328, %v328
        %v345 = vld [vmem:[%s237] sm:$0xf]
        %v347 = vsel %vm313, %v344, 0
        %vm349 = vcmask 1043456
        %v351 = vsel %vm349, %v345, 0
        %353 = vmatprep.subr.bf16.mxu0 0
        %354 = vmatpush1.bf16.msra.mxu0 0
        %355 = vmatprep.subr.bf16.mxu0 0
        %356 = vmatpush1.bf16.msra.mxu0 0
        %357 = vmatprep.subr.bf16.mxu0 0
        %358 = vmatpush1.bf16.msra.mxu0 0
        %359 = vmatprep.subr.bf16.mxu0 0
        %360 = vmatpush1.bf16.msra.mxu0 0
        %361 = vmatprep.subr.bf16.mxu0 0
        %362 = vmatpush1.bf16.msra.mxu0 0
        %363 = vmatprep.subr.bf16.mxu0 0
        %364 = vmatpush1.bf16.msra.mxu0 0
        %365 = vmatprep.subr.bf16.mxu0 0
        %366 = vmatpush1.bf16.msra.mxu0 0
        %367 = vmatprep.subr.bf16.mxu0 0
        %368 = vmatpush1.bf16.msra.mxu0 %v351
        %369 = vmatprep.subr.bf16.mxu0 0
        %370 = vmatpush2.bf16.msra.mxu0 0
        %371 = vmatprep.subr.bf16.mxu0 0
        %372 = vmatpush2.bf16.msra.mxu0 0
        %373 = vmatprep.subr.bf16.mxu0 0
        %374 = vmatpush2.bf16.msra.mxu0 0
        %375 = vmatprep.subr.bf16.mxu0 0
        %376 = vmatpush2.bf16.msra.mxu0 0
        %377 = vmatprep.subr.bf16.mxu0 0
        %378 = vmatpush2.bf16.msra.mxu0 0
        %379 = vmatprep.subr.bf16.mxu0 0
        %380 = vmatpush2.bf16.msra.mxu0 0
        %381 = vmatprep.subr.bf16.mxu0 0
        %382 = vmatpush2.bf16.msra.mxu0 0
        %383 = vmatprep.subr.bf16.mxu0 0
        %384 = vmatpush2.bf16.msra.mxu0 0
        %385 = vmatprep.mubr.bf16.mxu0 0
        %386 = vmatmul.mubr.bf16.gmra.mxu0 %v347
        %v387 = vpop.f32.mrf.mxu0
        %v388 = vadd.f32 0.0, %v387
        %v389 = vpop.f32.mrf.mxu0
        %v390 = vpop.f32.mrf.mxu0
        %v391 = vpop.f32.mrf.mxu0
        %392 = vdwg.mxu0
        %v393 = vadd.f32 %v343, %v388
        %394 = vst.msk [vmem:[#allocation4] sm:$0xff] %vm264, %v393
        %395 = vst.msk [vmem:[#allocation2] sm:$0xff] %vm335, %v317
        %v396 = vld [vmem:[%s225] sm:$0xf]
        %v397 = vld [vmem:[%s231] sm:$0xf]
        %v399 = vunpack.c.l.b16 %v396
        %v400 = vpack.c.b16 %v399, %v399
        %401 = vrot.lane.b32.xlu0 %v400, 112
        %v402 = vpop.permute.xlu0 %401
        %v404 = vunpack.c.l.b16 %v397
        %v405 = vpack.c.b16 %v404, %v404
        %406 = vrot.lane.b32.xlu0 %v405, 112
        %v407 = vpop.permute.xlu0 %406
        %v409 = vsel %vm264, %v402, 0
        %v412 = vsel %vm264, %v407, 0
        %414 = vmatprep.subr.bf16.mxu0 0
        %415 = vmatpush1.bf16.xpose.msra.mxu0 0
        %416 = vmatprep.subr.bf16.mxu0 0
        %417 = vmatpush1.bf16.xpose.msra.mxu0 0
        %418 = vmatprep.subr.bf16.mxu0 0
        %419 = vmatpush1.bf16.xpose.msra.mxu0 0
        %420 = vmatprep.subr.bf16.mxu0 0
        %421 = vmatpush1.bf16.xpose.msra.mxu0 0
        %422 = vmatprep.subr.bf16.mxu0 0
        %423 = vmatpush1.bf16.xpose.msra.mxu0 0
        %424 = vmatprep.subr.bf16.mxu0 0
        %425 = vmatpush1.bf16.xpose.msra.mxu0 0
        %426 = vmatprep.subr.bf16.mxu0 0
        %427 = vmatpush1.bf16.xpose.msra.mxu0 0
        %428 = vmatprep.subr.bf16.mxu0 0
        %429 = vmatpush1.bf16.xpose.msra.mxu0 %v412
        %430 = vmatprep.subr.bf16.mxu0 0
        %431 = vmatpush2.bf16.xpose.msra.mxu0 0
        %432 = vmatprep.subr.bf16.mxu0 0
        %433 = vmatpush2.bf16.xpose.msra.mxu0 0
        %434 = vmatprep.subr.bf16.mxu0 0
        %435 = vmatpush2.bf16.xpose.msra.mxu0 0
        %436 = vmatprep.subr.bf16.mxu0 0
        %437 = vmatpush2.bf16.xpose.msra.mxu0 0
        %438 = vmatprep.subr.bf16.mxu0 0
        %439 = vmatpush2.bf16.xpose.msra.mxu0 0
        %440 = vmatprep.subr.bf16.mxu0 0
        %441 = vmatpush2.bf16.xpose.msra.mxu0 0
        %442 = vmatprep.subr.bf16.mxu0 0
        %443 = vmatpush2.bf16.xpose.msra.mxu0 0
        %444 = vmatprep.subr.bf16.mxu0 0
        %445 = vmatpush2.bf16.xpose.msra.mxu0 0
        %446 = vmatprep.mubr.bf16.mxu0 0
        %447 = vmatmul.mubr.bf16.gmra.mxu0 %v409
        %v448 = vpop.f32.mrf.mxu0
        %v449 = vadd.f32 0.0, %v448
        %v450 = vpop.f32.mrf.mxu0
        %v451 = vpop.f32.mrf.mxu0
        %v452 = vpop.f32.mrf.mxu0
        %453 = vdwg.mxu0
        %v454 = vmul.f32 %v449, 0.25
        %s455 = scalar_lea.vmem [#allocation2], 8
        %v456 = vld [vmem:[%s455] sm:$0xff]
        %v457 = vsel %vm313, %v454, -inf
        %458 = vmax.xlane.f32.xlu0 %v457
        %v459 = vpop.xlane.xlu0 %458
        %v460 = vmax.f32 %v456, %v459
        %v461 = vsub.f32 %v456, %v460
        %v462 = vmul.f32 %v461, 1.442695
        %v463 = vpow.pop %v462
        %465 = vset.pattern.permute.xlu0 0
        %466 = vperm.xlu0 %465, %v460
        %v467 = vpop.permute.xlu0 %466
        %v469 = vsub.f32 %v454, %v467
        %v470 = vmul.f32 %v469, 1.442695
        %v471 = vpow.pop %v470
        %s472 = scalar_lea.vmem [#allocation3], 8
        %v473 = vld [vmem:[%s472] sm:$0xff]
        %v474 = vmul.f32 %v463, %v473
        %v475 = vsel %vm313, %v471, 0.0
        %476 = vadd.xlane.f32.xlu0 %v475
        %v477 = vpop.xlane.xlu0 %476
        %v478 = vadd.f32 %v474, %v477
        %479 = vst.msk [vmem:[%s472] sm:$0xff] %vm335, %v478
        %s480 = scalar_lea.vmem [#allocation4], 8
        %v481 = vld [vmem:[%s480] sm:$0xff]
        %483 = vset.pattern.permute.xlu0 0
        %484 = vperm.xlu0 %483, %v463
        %v485 = vpop.permute.xlu0 %484
        %v487 = vmul.f32 %v485, %v481
        %v488 = vpack.c.bf16 %v471, %v471
        %v489 = vld [vmem:[%s237] sm:$0xf]
        %v491 = vunpack.c.l.b16 %v489
        %v492 = vpack.c.b16 %v491, %v491
        %493 = vrot.lane.b32.xlu0 %v492, 112
        %v494 = vpop.permute.xlu0 %493
        %v496 = vsel %vm313, %v488, 0
        %v499 = vsel %vm349, %v494, 0
        %501 = vmatprep.subr.bf16.mxu0 0
        %502 = vmatpush1.bf16.msra.mxu0 0
        %503 = vmatprep.subr.bf16.mxu0 0
        %504 = vmatpush1.bf16.msra.mxu0 0
        %505 = vmatprep.subr.bf16.mxu0 0
        %506 = vmatpush1.bf16.msra.mxu0 0
        %507 = vmatprep.subr.bf16.mxu0 0
        %508 = vmatpush1.bf16.msra.mxu0 0
        %509 = vmatprep.subr.bf16.mxu0 0
        %510 = vmatpush1.bf16.msra.mxu0 0
        %511 = vmatprep.subr.bf16.mxu0 0
        %512 = vmatpush1.bf16.msra.mxu0 0
        %513 = vmatprep.subr.bf16.mxu0 0
        %514 = vmatpush1.bf16.msra.mxu0 0
        %515 = vmatprep.subr.bf16.mxu0 0
        %516 = vmatpush1.bf16.msra.mxu0 %v499
        %517 = vmatprep.subr.bf16.mxu0 0
        %518 = vmatpush2.bf16.msra.mxu0 0
        %519 = vmatprep.subr.bf16.mxu0 0
        %520 = vmatpush2.bf16.msra.mxu0 0
        %521 = vmatprep.subr.bf16.mxu0 0
        %522 = vmatpush2.bf16.msra.mxu0 0
        %523 = vmatprep.subr.bf16.mxu0 0
        %524 = vmatpush2.bf16.msra.mxu0 0
        %525 = vmatprep.subr.bf16.mxu0 0
        %526 = vmatpush2.bf16.msra.mxu0 0
        %527 = vmatprep.subr.bf16.mxu0 0
        %528 = vmatpush2.bf16.msra.mxu0 0
        %529 = vmatprep.subr.bf16.mxu0 0
        %530 = vmatpush2.bf16.msra.mxu0 0
        %531 = vmatprep.subr.bf16.mxu0 0
        %532 = vmatpush2.bf16.msra.mxu0 0
        %533 = vmatprep.mubr.bf16.mxu0 0
        %534 = vmatmul.mubr.bf16.gmra.mxu0 %v496
        %v535 = vpop.f32.mrf.mxu0
        %v536 = vadd.f32 0.0, %v535
        %v537 = vpop.f32.mrf.mxu0
        %v538 = vpop.f32.mrf.mxu0
        %v539 = vpop.f32.mrf.mxu0
        %540 = vdwg.mxu0
        %v541 = vadd.f32 %v487, %v536
        %542 = vst.msk [vmem:[%s480] sm:$0xff] %vm264, %v541
        %543 = vst.msk [vmem:[%s455] sm:$0xff] %vm335, %v460
      $region40: #{gpt_forward.10} parent=31 // pred_fallthru
        _
      %p544 = scmp.eq.s32.totalorder %s21, %s20
      // Predicated region
      $region41: #{gpt_forward.10} parent=31 // pred_check
        %p545 = pneg %p544
      $region42: #{gpt_forward.10} parent=31 // pred_check_branch
        %547 = sbr.rel (%p545) target = $region44
      $region43: #{gpt_forward.10} parent=31 // pred_region
        %v548 = vlaneseq
        %v549 = vshrl.u32 %v548, 7
        %v550 = vlaneseq
        %v551 = vand.u32 %v550, 127
        %vm552 = vcmp.le.s32.totalorder %v551, %v549
        %v553 = vld [vmem:[%s225] sm:$0xf]
        %v554 = vld [vmem:[%s231] sm:$0xf]
        %vm555 = vcmask 130048
        %v557 = vsel %vm555, %v553, 0
        %v560 = vsel %vm555, %v554, 0
        %562 = vmatprep.subr.bf16.mxu0 0
        %563 = vmatpush1.bf16.xpose.msra.mxu0 0
        %564 = vmatprep.subr.bf16.mxu0 0
        %565 = vmatpush1.bf16.xpose.msra.mxu0 0
        %566 = vmatprep.subr.bf16.mxu0 0
        %567 = vmatpush1.bf16.xpose.msra.mxu0 0
        %568 = vmatprep.subr.bf16.mxu0 0
        %569 = vmatpush1.bf16.xpose.msra.mxu0 0
        %570 = vmatprep.subr.bf16.mxu0 0
        %571 = vmatpush1.bf16.xpose.msra.mxu0 0
        %572 = vmatprep.subr.bf16.mxu0 0
        %573 = vmatpush1.bf16.xpose.msra.mxu0 0
        %574 = vmatprep.subr.bf16.mxu0 0
        %575 = vmatpush1.bf16.xpose.msra.mxu0 0
        %576 = vmatprep.subr.bf16.mxu0 0
        %577 = vmatpush1.bf16.xpose.msra.mxu0 %v560
        %578 = vmatprep.subr.bf16.mxu0 0
        %579 = vmatpush2.bf16.xpose.msra.mxu0 0
        %580 = vmatprep.subr.bf16.mxu0 0
        %581 = vmatpush2.bf16.xpose.msra.mxu0 0
        %582 = vmatprep.subr.bf16.mxu0 0
        %583 = vmatpush2.bf16.xpose.msra.mxu0 0
        %584 = vmatprep.subr.bf16.mxu0 0
        %585 = vmatpush2.bf16.xpose.msra.mxu0 0
        %586 = vmatprep.subr.bf16.mxu0 0
        %587 = vmatpush2.bf16.xpose.msra.mxu0 0
        %588 = vmatprep.subr.bf16.mxu0 0
        %589 = vmatpush2.bf16.xpose.msra.mxu0 0
        %590 = vmatprep.subr.bf16.mxu0 0
        %591 = vmatpush2.bf16.xpose.msra.mxu0 0
        %592 = vmatprep.subr.bf16.mxu0 0
        %593 = vmatpush2.bf16.xpose.msra.mxu0 0
        %594 = vmatprep.mubr.bf16.mxu0 0
        %595 = vmatmul.mubr.bf16.gmra.mxu0 %v557
        %v596 = vpop.f32.mrf.mxu0
        %v597 = vadd.f32 0.0, %v596
        %v598 = vpop.f32.mrf.mxu0
        %v599 = vpop.f32.mrf.mxu0
        %v600 = vpop.f32.mrf.mxu0
        %601 = vdwg.mxu0
        %v602 = vmul.f32 %v597, 0.25
        %v603 = vsel %vm552, %v602, -1e+30
        %v604 = vld [vmem:[#allocation2] sm:$0xff]
        %vm605 = vcmask 64512
        %v606 = vsel %vm605, %v603, -inf
        %607 = vmax.xlane.f32.xlu0 %v606
        %v608 = vpop.xlane.xlu0 %607
        %v609 = vmax.f32 %v604, %v608
        %v610 = vsub.f32 %v604, %v609
        %v611 = vmul.f32 %v610, 1.442695
        %v612 = vpow.pop %v611
        %614 = vset.pattern.permute.xlu0 0
        %615 = vperm.xlu0 %614, %v609
        %v616 = vpop.permute.xlu0 %615
        %v618 = vsub.f32 %v603, %v616
        %v619 = vmul.f32 %v618, 1.442695
        %v620 = vpow.pop %v619
        %v621 = vld [vmem:[#allocation3] sm:$0xff]
        %v622 = vmul.f32 %v612, %v621
        %v623 = vsel %vm605, %v620, 0.0
        %624 = vadd.xlane.f32.xlu0 %v623
        %v625 = vpop.xlane.xlu0 %624
        %v626 = vadd.f32 %v622, %v625
        %vm627 = vcmask 7168
        %628 = vst.msk [vmem:[#allocation3] sm:$0xff] %vm627, %v626
        %v629 = vld [vmem:[#allocation4] sm:$0xff]
        %631 = vset.pattern.permute.xlu0 0
        %632 = vperm.xlu0 %631, %v612
        %v633 = vpop.permute.xlu0 %632
        %v635 = vmul.f32 %v633, %v629
        %v636 = vpack.c.bf16 %v620, %v620
        %v637 = vld [vmem:[%s237] sm:$0xf]
        %v639 = vsel %vm605, %v636, 0
        %vm641 = vcmask 1043456
        %v643 = vsel %vm641, %v637, 0
        %645 = vmatprep.subr.bf16.mxu0 0
        %646 = vmatpush1.bf16.msra.mxu0 0
        %647 = vmatprep.subr.bf16.mxu0 0
        %648 = vmatpush1.bf16.msra.mxu0 0
        %649 = vmatprep.subr.bf16.mxu0 0
        %650 = vmatpush1.bf16.msra.mxu0 0
        %651 = vmatprep.subr.bf16.mxu0 0
        %652 = vmatpush1.bf16.msra.mxu0 0
        %653 = vmatprep.subr.bf16.mxu0 0
        %654 = vmatpush1.bf16.msra.mxu0 0
        %655 = vmatprep.subr.bf16.mxu0 0
        %656 = vmatpush1.bf16.msra.mxu0 0
        %657 = vmatprep.subr.bf16.mxu0 0
        %658 = vmatpush1.bf16.msra.mxu0 0
        %659 = vmatprep.subr.bf16.mxu0 0
        %660 = vmatpush1.bf16.msra.mxu0 %v643
        %661 = vmatprep.subr.bf16.mxu0 0
        %662 = vmatpush2.bf16.msra.mxu0 0
        %663 = vmatprep.subr.bf16.mxu0 0
        %664 = vmatpush2.bf16.msra.mxu0 0
        %665 = vmatprep.subr.bf16.mxu0 0
        %666 = vmatpush2.bf16.msra.mxu0 0
        %667 = vmatprep.subr.bf16.mxu0 0
        %668 = vmatpush2.bf16.msra.mxu0 0
        %669 = vmatprep.subr.bf16.mxu0 0
        %670 = vmatpush2.bf16.msra.mxu0 0
        %671 = vmatprep.subr.bf16.mxu0 0
        %672 = vmatpush2.bf16.msra.mxu0 0
        %673 = vmatprep.subr.bf16.mxu0 0
        %674 = vmatpush2.bf16.msra.mxu0 0
        %675 = vmatprep.subr.bf16.mxu0 0
        %676 = vmatpush2.bf16.msra.mxu0 0
        %677 = vmatprep.mubr.bf16.mxu0 0
        %678 = vmatmul.mubr.bf16.gmra.mxu0 %v639
        %v679 = vpop.f32.mrf.mxu0
        %v680 = vadd.f32 0.0, %v679
        %v681 = vpop.f32.mrf.mxu0
        %v682 = vpop.f32.mrf.mxu0
        %v683 = vpop.f32.mrf.mxu0
        %684 = vdwg.mxu0
        %v685 = vadd.f32 %v635, %v680
        %686 = vst.msk [vmem:[#allocation4] sm:$0xff] %vm555, %v685
        %687 = vst.msk [vmem:[#allocation2] sm:$0xff] %vm627, %v609
        %v688 = vld [vmem:[%s225] sm:$0xf]
        %v689 = vld [vmem:[%s231] sm:$0xf]
        %v691 = vunpack.c.l.b16 %v688
        %v692 = vpack.c.b16 %v691, %v691
        %693 = vrot.lane.b32.xlu0 %v692, 112
        %v694 = vpop.permute.xlu0 %693
        %v696 = vunpack.c.l.b16 %v689
        %v697 = vpack.c.b16 %v696, %v696
        %698 = vrot.lane.b32.xlu0 %v697, 112
        %v699 = vpop.permute.xlu0 %698
        %v701 = vsel %vm555, %v694, 0
        %v704 = vsel %vm555, %v699, 0
        %706 = vmatprep.subr.bf16.mxu0 0
        %707 = vmatpush1.bf16.xpose.msra.mxu0 0
        %708 = vmatprep.subr.bf16.mxu0 0
        %709 = vmatpush1.bf16.xpose.msra.mxu0 0
        %710 = vmatprep.subr.bf16.mxu0 0
        %711 = vmatpush1.bf16.xpose.msra.mxu0 0
        %712 = vmatprep.subr.bf16.mxu0 0
        %713 = vmatpush1.bf16.xpose.msra.mxu0 0
        %714 = vmatprep.subr.bf16.mxu0 0
        %715 = vmatpush1.bf16.xpose.msra.mxu0 0
        %716 = vmatprep.subr.bf16.mxu0 0
        %717 = vmatpush1.bf16.xpose.msra.mxu0 0
        %718 = vmatprep.subr.bf16.mxu0 0
        %719 = vmatpush1.bf16.xpose.msra.mxu0 0
        %720 = vmatprep.subr.bf16.mxu0 0
        %721 = vmatpush1.bf16.xpose.msra.mxu0 %v704
        %722 = vmatprep.subr.bf16.mxu0 0
        %723 = vmatpush2.bf16.xpose.msra.mxu0 0
        %724 = vmatprep.subr.bf16.mxu0 0
        %725 = vmatpush2.bf16.xpose.msra.mxu0 0
        %726 = vmatprep.subr.bf16.mxu0 0
        %727 = vmatpush2.bf16.xpose.msra.mxu0 0
        %728 = vmatprep.subr.bf16.mxu0 0
        %729 = vmatpush2.bf16.xpose.msra.mxu0 0
        %730 = vmatprep.subr.bf16.mxu0 0
        %731 = vmatpush2.bf16.xpose.msra.mxu0 0
        %732 = vmatprep.subr.bf16.mxu0 0
        %733 = vmatpush2.bf16.xpose.msra.mxu0 0
        %734 = vmatprep.subr.bf16.mxu0 0
        %735 = vmatpush2.bf16.xpose.msra.mxu0 0
        %736 = vmatprep.subr.bf16.mxu0 0
        %737 = vmatpush2.bf16.xpose.msra.mxu0 0
        %738 = vmatprep.mubr.bf16.mxu0 0
        %739 = vmatmul.mubr.bf16.gmra.mxu0 %v701
        %v740 = vpop.f32.mrf.mxu0
        %v741 = vadd.f32 0.0, %v740
        %v742 = vpop.f32.mrf.mxu0
        %v743 = vpop.f32.mrf.mxu0
        %v744 = vpop.f32.mrf.mxu0
        %745 = vdwg.mxu0
        %v746 = vmul.f32 %v741, 0.25
        %v747 = vsel %vm552, %v746, -1e+30
        %s748 = scalar_lea.vmem [#allocation2], 8
        %v749 = vld [vmem:[%s748] sm:$0xff]
        %v750 = vsel %vm605, %v747, -inf
        %751 = vmax.xlane.f32.xlu0 %v750
        %v752 = vpop.xlane.xlu0 %751
        %v753 = vmax.f32 %v749, %v752
        %v754 = vsub.f32 %v749, %v753
        %v755 = vmul.f32 %v754, 1.442695
        %v756 = vpow.pop %v755
        %758 = vset.pattern.permute.xlu0 0
        %759 = vperm.xlu0 %758, %v753
        %v760 = vpop.permute.xlu0 %759
        %v762 = vsub.f32 %v747, %v760
        %v763 = vmul.f32 %v762, 1.442695
        %v764 = vpow.pop %v763
        %s765 = scalar_lea.vmem [#allocation3], 8
        %v766 = vld [vmem:[%s765] sm:$0xff]
        %v767 = vmul.f32 %v756, %v766
        %v768 = vsel %vm605, %v764, 0.0
        %769 = vadd.xlane.f32.xlu0 %v768
        %v770 = vpop.xlane.xlu0 %769
        %v771 = vadd.f32 %v767, %v770
        %772 = vst.msk [vmem:[%s765] sm:$0xff] %vm627, %v771
        %s773 = scalar_lea.vmem [#allocation4], 8
        %v774 = vld [vmem:[%s773] sm:$0xff]
        %776 = vset.pattern.permute.xlu0 0
        %777 = vperm.xlu0 %776, %v756
        %v778 = vpop.permute.xlu0 %777
        %v780 = vmul.f32 %v778, %v774
        %v781 = vpack.c.bf16 %v764, %v764
        %v782 = vld [vmem:[%s237] sm:$0xf]
        %v784 = vunpack.c.l.b16 %v782
        %v785 = vpack.c.b16 %v784, %v784
        %786 = vrot.lane.b32.xlu0 %v785, 112
        %v787 = vpop.permute.xlu0 %786
        %v789 = vsel %vm605, %v781, 0
        %v792 = vsel %vm641, %v787, 0
        %794 = vmatprep.subr.bf16.mxu0 0
        %795 = vmatpush1.bf16.msra.mxu0 0
        %796 = vmatprep.subr.bf16.mxu0 0
        %797 = vmatpush1.bf16.msra.mxu0 0
        %798 = vmatprep.subr.bf16.mxu0 0
        %799 = vmatpush1.bf16.msra.mxu0 0
        %800 = vmatprep.subr.bf16.mxu0 0
        %801 = vmatpush1.bf16.msra.mxu0 0
        %802 = vmatprep.subr.bf16.mxu0 0
        %803 = vmatpush1.bf16.msra.mxu0 0
        %804 = vmatprep.subr.bf16.mxu0 0
        %805 = vmatpush1.bf16.msra.mxu0 0
        %806 = vmatprep.subr.bf16.mxu0 0
        %807 = vmatpush1.bf16.msra.mxu0 0
        %808 = vmatprep.subr.bf16.mxu0 0
        %809 = vmatpush1.bf16.msra.mxu0 %v792
        %810 = vmatprep.subr.bf16.mxu0 0
        %811 = vmatpush2.bf16.msra.mxu0 0
        %812 = vmatprep.subr.bf16.mxu0 0
        %813 = vmatpush2.bf16.msra.mxu0 0
        %814 = vmatprep.subr.bf16.mxu0 0
        %815 = vmatpush2.bf16.msra.mxu0 0
        %816 = vmatprep.subr.bf16.mxu0 0
        %817 = vmatpush2.bf16.msra.mxu0 0
        %818 = vmatprep.subr.bf16.mxu0 0
        %819 = vmatpush2.bf16.msra.mxu0 0
        %820 = vmatprep.subr.bf16.mxu0 0
        %821 = vmatpush2.bf16.msra.mxu0 0
        %822 = vmatprep.subr.bf16.mxu0 0
        %823 = vmatpush2.bf16.msra.mxu0 0
        %824 = vmatprep.subr.bf16.mxu0 0
        %825 = vmatpush2.bf16.msra.mxu0 0
        %826 = vmatprep.mubr.bf16.mxu0 0
        %827 = vmatmul.mubr.bf16.gmra.mxu0 %v789
        %v828 = vpop.f32.mrf.mxu0
        %v829 = vadd.f32 0.0, %v828
        %v830 = vpop.f32.mrf.mxu0
        %v831 = vpop.f32.mrf.mxu0
        %v832 = vpop.f32.mrf.mxu0
        %833 = vdwg.mxu0
        %v834 = vadd.f32 %v780, %v829
        %835 = vst.msk [vmem:[%s773] sm:$0xff] %vm555, %v834
        %836 = vst.msk [vmem:[%s748] sm:$0xff] %vm627, %v753
      $region44: #{gpt_forward.10} parent=31 // pred_fallthru
        _
      // Predicated region
      $region45: #{gpt_forward.10} parent=31 // pred_check
        %p837 = pneg %p246
      $region46: #{gpt_forward.10} parent=31 // pred_check_branch
        %839 = sbr.rel (%p837) target = $region48
      $region47: #{gpt_forward.10} parent=31 // pred_region
        %v840 = vld [vmem:[#allocation4] sm:$0xff]
        %v841 = vld [vmem:[#allocation3] sm:$0xff]
        %v842 = vrcp.pop %v841
        %844 = vset.pattern.permute.xlu0 0
        %845 = vperm.xlu0 %844, %v842
        %v846 = vpop.permute.xlu0 %845
        %v848 = vmul.f32 %v840, %v846
        %s849 = scalar_lea.vmem [#allocation4], 8
        %v850 = vld [vmem:[%s849] sm:$0xff]
        %s851 = scalar_lea.vmem [#allocation3], 8
        %v852 = vld [vmem:[%s851] sm:$0xff]
        %v853 = vrcp.pop %v852
        %855 = vset.pattern.permute.xlu0 0
        %856 = vperm.xlu0 %855, %v853
        %v857 = vpop.permute.xlu0 %856
        %v859 = vmul.f32 %v850, %v857
        %861 = vrot.lane.b32.xlu0 %v859, 16
        %v862 = vpop.permute.xlu0 %861
        %vm864 = vcmask 130048
        %v865 = vsel %vm864, %v848, %v862
        %v866 = vpack.c.bf16 %v865, %v865
        %vm867 = vcmask 257024
        %868 = vst.msk [vmem:[%s243] sm:$0xf] %vm867, %v866
      $region48: #{gpt_forward.10} parent=31 // pred_fallthru
        _
      %s869 = sadd.s32 %s19, %s20
      %p870 = scmp.lt.s32.totalorder %s869, 1
      %s871 = scalar_select %p870, %s869, 1
      %s872 = smul.addr %s871, 4
      %s873 = scalar_lea.vmem %s3, %s872
      // Predicated region
      $region49: #{gpt_forward.10} parent=31 // pred_check
        %p874 = pneg %p137
      $region50: #{gpt_forward.10} parent=31 // pred_check_branch
        %876 = sbr.rel (%p874) target = $region52
      $region51: #{gpt_forward.10} parent=31 // pred_region
        %s877 = sadd.s32 %s19, %s20
      $region52: #{gpt_forward.10} parent=31 // pred_fallthru
        _
    $region32: #{gpt_forward.10} parent=5 // pred_fallthru
      _
    %p878 = scmp.le.s32.totalorder 2, %s9
    // Predicated region
    $region53: #{gpt_forward.10} parent=5 // pred_check
      %p879 = pneg %p878
    $region54: #{gpt_forward.10} parent=5 // pred_check_branch
      %881 = sbr.rel (%p879) target = $region56
    $region55: #{gpt_forward.10} parent=5 // pred_region
      %s882 = ssub.s32 %s9, 2
      // Predicated region
      $region57: #{gpt_forward.10} parent=55 // pred_check
        %p883 = pneg %p143
      $region58: #{gpt_forward.10} parent=55 // pred_check_branch
        %885 = sbr.rel (%p883) target = $region60
      $region59: #{gpt_forward.10} parent=55 // pred_region
        %s886 = sadd.s32 %s22, %s23
        %p887 = scmp.lt.s32.totalorder %s886, 1
        %s888 = scalar_select %p887, %s886, 1
        %s889 = smul.addr %s888, 4
        %s890 = scalar_lea.vmem %s3, %s889
      $region60: #{gpt_forward.10} parent=55 // pred_fallthru
        _
    $region56: #{gpt_forward.10} parent=5 // pred_fallthru
      _
  $region6: #{gpt_forward.10} parent=0 // loop_footer
    %s13 = sadd.s32 1, %s9
  $region7: #{gpt_forward.10} parent=0 // loop_footer_branch
    %8 = sbr.rel target = $region3
  $region8: #{gpt_forward.10} parent=0 // loop_exit
    _

// kernel: gpt_forward.12
$region0: #{gpt_forward.12}
  #allocation0 [shape = 'u32[]', space=smem, size = 0x4, offset = 0x4, fixed_abs, tag = 'smem constant byte address 0x4 - core index']
  #allocation1 [shape = 'u32[144,128]{1,0:T(1,128)}', space=vmem, size = 0x12000, scoped, tag = 'internal scratch']
  #allocation2 [shape = 'bf16[16,32]{1,0:T(8,128)(2,1)}', space=vmem, size = 0x1000, scoped, tag = 'scratch operand']
  #allocation3 [shape = 'f32[16,32]{1,0:T(8,128)}', space=vmem, size = 0x2000, scoped, tag = 'scratch operand']
  %s0 = inlined_call_operand.vmem [shape: f32[16,32], index: 0, kind: input, shape index: {}]
  %s1 = inlined_call_operand.vmem [shape: f32[1,32], index: 1, kind: input, shape index: {}]
  %s2 = inlined_call_operand.vmem [shape: f32[1,32], index: 2, kind: input, shape index: {}]
  %s3 = inlined_call_operand.vmem [shape: bf16[32,128], index: 3, kind: input, shape index: {}]
  %s4 = inlined_call_operand.vmem [shape: f32[1,128], index: 4, kind: input, shape index: {}]
  %s5 = inlined_call_operand.vmem [shape: bf16[128,32], index: 5, kind: input, shape index: {}]
  %s6 = inlined_call_operand.vmem [shape: f32[1,32], index: 6, kind: input, shape index: {}]
  %s7 = inlined_call_operand.vmem [shape: f32[16,32], index: 7, kind: output, shape index: {}]
  %s8 = sld [smem:[#allocation0]]
  $region46: #{gpt_forward.12} parent=0
    _
  %s10 = ssub.s32 1, %s8
  %s11 = scalar_select 0, %s10, %s8
  // Predicated region
  $region2: #{gpt_forward.12} parent=0 // pred_check
    _
  $region3: #{gpt_forward.12} parent=0 // pred_check_branch
    %13 = sbr.rel (0) target = $region5
  $region4: #{gpt_forward.12} parent=0 // pred_region
    _
  $region5: #{gpt_forward.12} parent=0 // pred_fallthru
    _
  // Predicated region
  $region6: #{gpt_forward.12} parent=0 // pred_check
    _
  $region7: #{gpt_forward.12} parent=0 // pred_check_branch
    %15 = sbr.rel (0) target = $region9
  $region8: #{gpt_forward.12} parent=0 // pred_region
    _
  $region9: #{gpt_forward.12} parent=0 // pred_fallthru
    _
  // Predicated region
  $region10: #{gpt_forward.12} parent=0 // pred_check
    _
  $region11: #{gpt_forward.12} parent=0 // pred_check_branch
    %17 = sbr.rel (0) target = $region13
  $region12: #{gpt_forward.12} parent=0 // pred_region
    _
  $region13: #{gpt_forward.12} parent=0 // pred_fallthru
    _
  // Predicated region
  $region14: #{gpt_forward.12} parent=0 // pred_check
    _
  $region15: #{gpt_forward.12} parent=0 // pred_check_branch
    %19 = sbr.rel (0) target = $region17
  $region16: #{gpt_forward.12} parent=0 // pred_region
    _
  $region17: #{gpt_forward.12} parent=0 // pred_fallthru
    _
  // Predicated region
  $region18: #{gpt_forward.12} parent=0 // pred_check
    _
  $region19: #{gpt_forward.12} parent=0 // pred_check_branch
    %21 = sbr.rel (0) target = $region21
  $region20: #{gpt_forward.12} parent=0 // pred_region
    _
  $region21: #{gpt_forward.12} parent=0 // pred_fallthru
    _
  // Predicated region
  $region22: #{gpt_forward.12} parent=0 // pred_check
    _
  $region23: #{gpt_forward.12} parent=0 // pred_check_branch
    %23 = sbr.rel (0) target = $region25
  $region24: #{gpt_forward.12} parent=0 // pred_region
    _
  $region25: #{gpt_forward.12} parent=0 // pred_fallthru
    _
  // Predicated region
  $region26: #{gpt_forward.12} parent=0 // pred_check
    _
  $region27: #{gpt_forward.12} parent=0 // pred_check_branch
    %25 = sbr.rel (0) target = $region29
  $region28: #{gpt_forward.12} parent=0 // pred_region
    _
  $region29: #{gpt_forward.12} parent=0 // pred_fallthru
    _
  %p27 = scmp.eq.s32.totalorder 0, 0
  // Predicated region
  $region30: #{gpt_forward.12} parent=0 // pred_check
    %p28 = pneg %p27
  $region31: #{gpt_forward.12} parent=0 // pred_check_branch
    %30 = sbr.rel (%p28) target = $region33
  $region32: #{gpt_forward.12} parent=0 // pred_region
    %v31 = vld [vmem:[%s0] sm:$0xff]
    %v32 = vld [vmem:[%s0 + $0x8] sm:$0xff]
    %v33 = vld [vmem:[%s1] sm:$0x1]
    %v34 = vld [vmem:[%s2] sm:$0x1]
    %vm35 = vcmask 261120
    %v36 = vsel %vm35, %v31, 0.0
    %37 = vadd.xlane.f32.xlu0 %v36
    %v38 = vpop.xlane.xlu0 %37
    %v39 = vsel %vm35, %v32, 0.0
    %40 = vadd.xlane.f32.xlu0 %v39
    %v41 = vpop.xlane.xlu0 %40
    %v42 = vrcp.pop 32.0
    %v43 = vmul.f32 %v38, %v42
    %v44 = vmul.f32 %v41, %v42
    %v45 = vsub.f32 %v31, %v43
    %v46 = vsub.f32 %v32, %v44
    %v47 = vmul.f32 %v45, %v45
    %v48 = vmul.f32 %v46, %v46
    %v49 = vsel %vm35, %v47, 0.0
    %50 = vadd.xlane.f32.xlu0 %v49
    %v51 = vpop.xlane.xlu0 %50
    %v52 = vsel %vm35, %v48, 0.0
    %53 = vadd.xlane.f32.xlu0 %v52
    %v54 = vpop.xlane.xlu0 %53
    %v55 = vmul.f32 %v51, %v42
    %v56 = vmul.f32 %v54, %v42
    %v57 = vadd.f32 %v55, 1e-05
    %v58 = vadd.f32 %v56, 1e-05
    %v59 = vrsqrt.pop %v57
    %v60 = vrsqrt.pop %v58
    %v61 = vmul.f32 %v45, %v59
    %v62 = vmul.f32 %v46, %v60
    %v64 = vlaneseq
    %v65 = vshrl.u32 %v64, 7
    %v66 = vsub.s32 0, %v65
    %v67 = vrot.slane %v33, %v66
    %v69 = vmul.f32 %v61, %v67
    %v70 = vmul.f32 %v62, %v67
    %v72 = vlaneseq
    %v73 = vshrl.u32 %v72, 7
    %v74 = vsub.s32 0, %v73
    %v75 = vrot.slane %v34, %v74
    %v77 = vadd.f32 %v69, %v75
    %v78 = vadd.f32 %v70, %v75
    %v79 = vpack.c.bf16 %v78, %v77
    %v81 = vunpack.c.l.b16 %v79
    %v82 = vunpack.c.h.b16 %v79
    %v83 = vpack.c.b16 %v81, %v81
    %v84 = vpack.c.b16 %v82, %v82
    %vm87 = vcmask 257024
    %88 = vst.msk [vmem:[#allocation2] sm:$0xf] %vm87, %v83
    %89 = vst.msk [vmem:[#allocation2 + $0x4] sm:$0xf] %vm87, %v84
    %90 = vst.msk [vmem:[#allocation3] sm:$0xff] %vm35, 0.0
    %91 = vst.msk [vmem:[#allocation3 + $0x8] sm:$0xff] %vm35, 0.0
  $region33: #{gpt_forward.12} parent=0 // pred_fallthru
    _
  %v92 = vld [vmem:[#allocation2] sm:$0xf]
  %v93 = vld [vmem:[#allocation2 + $0x4] sm:$0xf]
  %v94 = vld [vmem:[%s3] sm:$0xf]
  %v95 = vld [vmem:[%s3 + $0x4] sm:$0xf]
  %v96 = vld [vmem:[%s3 + $0x8] sm:$0xf]
  %v97 = vld [vmem:[%s3 + $0xc] sm:$0xf]
  %v98 = vld [vmem:[%s4] sm:$0x1]
  %v100 = vlaneseq
  %v101 = vshrl.u32 %v100, 7
  %v102 = vsub.s32 0, %v101
  %v103 = vrot.slane %v98, %v102
  %v107 = vunpack.c.l.b16 %v92
  %v108 = vunpack.c.l.b16 %v93
  %v109 = vpack.c.b16 %v108, %v107
  %v114 = vunpack.c.l.b16 %v94
  %v115 = vunpack.c.l.b16 %v95
  %v116 = vunpack.c.l.b16 %v96
  %v117 = vunpack.c.l.b16 %v97
  %v118 = vpack.c.b16 %v115, %v114
  %v119 = vpack.c.b16 %v117, %v116
  %vm122 = vcmask 261120
  %v124 = vsel %vm122, %v109, 0
  %126 = vmatprep.subr.bf16.mxu0 0
  %127 = vmatpush1.bf16.msra.mxu0 0
  %128 = vmatprep.subr.bf16.mxu0 0
  %129 = vmatpush1.bf16.msra.mxu0 0
  %130 = vmatprep.subr.bf16.mxu0 0
  %131 = vmatpush1.bf16.msra.mxu0 0
  %132 = vmatprep.subr.bf16.mxu0 0
  %133 = vmatpush1.bf16.msra.mxu0 0
  %134 = vmatprep.subr.bf16.mxu0 0
  %135 = vmatpush1.bf16.msra.mxu0 0
  %136 = vmatprep.subr.bf16.mxu0 0
  %137 = vmatpush1.bf16.msra.mxu0 0
  %138 = vmatprep.subr.bf16.mxu0 0
  %139 = vmatpush1.bf16.msra.mxu0 %v119
  %140 = vmatprep.subr.bf16.mxu0 0
  %141 = vmatpush1.bf16.msra.mxu0 %v118
  %142 = vmatprep.subr.bf16.mxu0 0
  %143 = vmatpush2.bf16.msra.mxu0 0
  %144 = vmatprep.subr.bf16.mxu0 0
  %145 = vmatpush2.bf16.msra.mxu0 0
  %146 = vmatprep.subr.bf16.mxu0 0
  %147 = vmatpush2.bf16.msra.mxu0 0
  %148 = vmatprep.subr.bf16.mxu0 0
  %149 = vmatpush2.bf16.msra.mxu0 0
  %150 = vmatprep.subr.bf16.mxu0 0
  %151 = vmatpush2.bf16.msra.mxu0 0
  %152 = vmatprep.subr.bf16.mxu0 0
  %153 = vmatpush2.bf16.msra.mxu0 0
  %154 = vmatprep.subr.bf16.mxu0 0
  %155 = vmatpush2.bf16.msra.mxu0 0
  %156 = vmatprep.subr.bf16.mxu0 0
  %157 = vmatpush2.bf16.msra.mxu0 0
  %158 = vmatprep.mubr.bf16.mxu0 0
  %159 = vmatmul.mubr.bf16.gmra.mxu0 %v124
  %v160 = vpop.f32.mrf.mxu0
  %v161 = vadd.f32 %v103, %v160
  %v162 = vpop.f32.mrf.mxu0
  %v163 = vpop.f32.mrf.mxu0
  %v164 = vadd.f32 %v103, %v163
  %v165 = vpop.f32.mrf.mxu0
  %166 = vdwg.mxu0
  %v167 = vmul.f32 %v161, 0.5
  %v168 = vmul.f32 %v164, 0.5
  %v169 = vmul.f32 %v161, 0.044715
  %v170 = vmul.f32 %v164, 0.044715
  %v171 = vmul.f32 %v169, %v161
  %v172 = vmul.f32 %v170, %v164
  %v173 = vmul.f32 %v171, %v161
  %v174 = vmul.f32 %v172, %v164
  %v175 = vadd.f32 %v161, %v173
  %v176 = vadd.f32 %v164, %v174
  %v177 = vmul.f32 %v175, 0.7978846
  %v178 = vmul.f32 %v176, 0.7978846
  %v179 = vtanh.pop %v177
  %v180 = vtanh.pop %v178
  %v181 = vadd.f32 %v179, 1.0
  %v182 = vadd.f32 %v180, 1.0
  %v183 = vmul.f32 %v167, %v181
  %v184 = vmul.f32 %v168, %v182
  %v185 = vld [vmem:[#allocation3] sm:$0xff]
  %v186 = vld [vmem:[#allocation3 + $0x8] sm:$0xff]
  %v187 = vpack.c.bf16 %v184, %v183
  %v188 = vld [vmem:[%s5] sm:$0xf]
  %v189 = vld [vmem:[%s5 + $0x4] sm:$0xf]
  %v190 = vld [vmem:[%s5 + $0x8] sm:$0xf]
  %v191 = vld [vmem:[%s5 + $0xc] sm:$0xf]
  %v192 = vld [vmem:[%s5 + $0x10] sm:$0xf]
  %v193 = vld [vmem:[%s5 + $0x14] sm:$0xf]
  %v194 = vld [vmem:[%s5 + $0x18] sm:$0xf]
  %v195 = vld [vmem:[%s5 + $0x1c] sm:$0xf]
  %v196 = vld [vmem:[%s5 + $0x20] sm:$0xf]
  %v197 = vld [vmem:[%s5 + $0x24] sm:$0xf]
  %v198 = vld [vmem:[%s5 + $0x28] sm:$0xf]
  %v199 = vld [vmem:[%s5 + $0x2c] sm:$0xf]
  %v200 = vld [vmem:[%s5 + $0x30] sm:$0xf]
  %v201 = vld [vmem:[%s5 + $0x34] sm:$0xf]
  %v202 = vld [vmem:[%s5 + $0x38] sm:$0xf]
  %v203 = vld [vmem:[%s5 + $0x3c] sm:$0xf]
  %v220 = vunpack.c.l.b16 %v188
  %v221 = vunpack.c.l.b16 %v189
  %v222 = vunpack.c.l.b16 %v190
  %v223 = vunpack.c.l.b16 %v191
  %v224 = vunpack.c.l.b16 %v192
  %v225 = vunpack.c.l.b16 %v193
  %v226 = vunpack.c.l.b16 %v194
  %v227 = vunpack.c.l.b16 %v195
  %v228 = vunpack.c.l.b16 %v196
  %v229 = vunpack.c.l.b16 %v197
  %v230 = vunpack.c.l.b16 %v198
  %v231 = vunpack.c.l.b16 %v199
  %v232 = vunpack.c.l.b16 %v200
  %v233 = vunpack.c.l.b16 %v201
  %v234 = vunpack.c.l.b16 %v202
  %v235 = vunpack.c.l.b16 %v203
  %v236 = vpack.c.b16 %v221, %v220
  %v237 = vpack.c.b16 %v223, %v222
  %v238 = vpack.c.b16 %v225, %v224
  %v239 = vpack.c.b16 %v227, %v226
  %v240 = vpack.c.b16 %v229, %v228
  %v241 = vpack.c.b16 %v231, %v230
  %v242 = vpack.c.b16 %v233, %v232
  %v243 = vpack.c.b16 %v235, %v234
  %252 = vmatprep.subr.bf16.mxu0 0
  %253 = vmatpush1.bf16.msra.mxu0 %v243
  %254 = vmatprep.subr.bf16.mxu0 0
  %255 = vmatpush1.bf16.msra.mxu0 %v242
  %256 = vmatprep.subr.bf16.mxu0 0
  %257 = vmatpush1.bf16.msra.mxu0 %v241
  %258 = vmatprep.subr.bf16.mxu0 0
  %259 = vmatpush1.bf16.msra.mxu0 %v240
  %260 = vmatprep.subr.bf16.mxu0 0
  %261 = vmatpush1.bf16.msra.mxu0 %v239
  %262 = vmatprep.subr.bf16.mxu0 0
  %263 = vmatpush1.bf16.msra.mxu0 %v238
  %264 = vmatprep.subr.bf16.mxu0 0
  %265 = vmatpush1.bf16.msra.mxu0 %v237
  %266 = vmatprep.subr.bf16.mxu0 0
  %267 = vmatpush1.bf16.msra.mxu0 %v236
  %268 = vmatprep.subr.bf16.mxu0 0
  %269 = vmatpush2.bf16.msra.mxu0 0
  %270 = vmatprep.subr.bf16.mxu0 0
  %271 = vmatpush2.bf16.msra.mxu0 0
  %272 = vmatprep.subr.bf16.mxu0 0
  %273 = vmatpush2.bf16.msra.mxu0 0
  %274 = vmatprep.subr.bf16.mxu0 0
  %275 = vmatpush2.bf16.msra.mxu0 0
  %276 = vmatprep.subr.bf16.mxu0 0
  %277 = vmatpush2.bf16.msra.mxu0 0
  %278 = vmatprep.subr.bf16.mxu0 0
  %279 = vmatpush2.bf16.msra.mxu0 0
  %280 = vmatprep.subr.bf16.mxu0 0
  %281 = vmatpush2.bf16.msra.mxu0 0
  %282 = vmatprep.subr.bf16.mxu0 0
  %283 = vmatpush2.bf16.msra.mxu0 0
  %284 = vmatprep.mubr.bf16.mxu0 0
  %285 = vmatmul.mubr.bf16.gmra.mxu0 %v187
  %v286 = vpop.f32.mrf.mxu0
  %v287 = vadd.f32 0.0, %v286
  %v288 = vpop.f32.mrf.mxu0
  %v289 = vpop.f32.mrf.mxu0
  %v290 = vadd.f32 0.0, %v289
  %v291 = vpop.f32.mrf.mxu0
  %292 = vdwg.mxu0
  %v293 = vadd.f32 %v185, %v287
  %v294 = vadd.f32 %v186, %v290
  %295 = vst.msk [vmem:[#allocation3] sm:$0xff] %vm122, %v293
  %296 = vst.msk [vmem:[#allocation3 + $0x8] sm:$0xff] %vm122, %v294
  // Predicated region
  $region34: #{gpt_forward.12} parent=0 // pred_check
    %p297 = pneg %p27
  $region35: #{gpt_forward.12} parent=0 // pred_check_branch
    %299 = sbr.rel (%p297) target = $region37
  $region36: #{gpt_forward.12} parent=0 // pred_region
    %v300 = vld [vmem:[%s0] sm:$0xff]
    %v301 = vld [vmem:[%s0 + $0x8] sm:$0xff]
    %v302 = vld [vmem:[#allocation3] sm:$0xff]
    %v303 = vld [vmem:[#allocation3 + $0x8] sm:$0xff]
    %v304 = vadd.f32 %v300, %v302
    %v305 = vadd.f32 %v301, %v303
    %v306 = vld [vmem:[%s6] sm:$0x1]
    %v308 = vlaneseq
    %v309 = vshrl.u32 %v308, 7
    %v310 = vsub.s32 0, %v309
    %v311 = vrot.slane %v306, %v310
    %v313 = vadd.f32 %v304, %v311
    %v314 = vadd.f32 %v305, %v311
    %315 = vst.msk [vmem:[%s7] sm:$0xff] %vm122, %v313
    %316 = vst.msk [vmem:[%s7 + $0x8] sm:$0xff] %vm122, %v314
  $region37: #{gpt_forward.12} parent=0 // pred_fallthru
    _
  // Predicated region
  $region38: #{gpt_forward.12} parent=0 // pred_check
    _
  $region39: #{gpt_forward.12} parent=0 // pred_check_branch
    %318 = sbr.rel (0) target = $region41
  $region40: #{gpt_forward.12} parent=0 // pred_region
    _
  $region41: #{gpt_forward.12} parent=0 // pred_fallthru
    _
  // Predicated region
  $region42: #{gpt_forward.12} parent=0 // pred_check
    _
  $region43: #{gpt_forward.12} parent=0 // pred_check_branch
    %320 = sbr.rel (0) target = $region45
  $region44: #{gpt_forward.12} parent=0 // pred_region
    _
  $region45: #{gpt_forward.12} parent=0 // pred_fallthru
    _

// kernel: gpt_forward.17
$region0: #{gpt_forward.17}
  #allocation0 [shape = 'u32[]', space=smem, size = 0x4, offset = 0x4, fixed_abs, tag = 'smem constant byte address 0x4 - core index']
  #allocation1 [shape = 'u32[144,128]{1,0:T(1,128)}', space=vmem, size = 0x12000, scoped, tag = 'internal scratch']
  #allocation2 [shape = 'bf16[16,32]{1,0:T(8,128)(2,1)}', space=vmem, size = 0x1000, scoped, tag = 'scratch operand']
  %s0 = inlined_call_operand.vmem [shape: f32[16,32], index: 0, kind: input, shape index: {}]
  %s1 = inlined_call_operand.vmem [shape: f32[1,32], index: 1, kind: input, shape index: {}]
  %s2 = inlined_call_operand.vmem [shape: f32[1,32], index: 2, kind: input, shape index: {}]
  %s3 = inlined_call_operand.vmem [shape: bf16[256,32], index: 3, kind: input, shape index: {}]
  %s4 = inlined_call_operand.hbm [shape: f32[16,256], index: 4, kind: output, shape index: {}]
  %s5 = sld [smem:[#allocation0]]
  $region30: #{gpt_forward.17} parent=0
    _
  %s7 = ssub.s32 1, %s5
  %s8 = scalar_select 0, %s7, %s5
  $region1: #{gpt_forward.17} parent=0
    #allocation3 [shape = 'u8[16384]{0}', space=vmem, size = 0x4000, scoped, tag = 'output window, operand 0, single buffered']
    #allocation4 [shape = 's32[1]{0}', space=sflag, size = 0x4, scoped, tag = 'scoped memory for gpt_forward.17']
    %9 = vsyncpa [#allocation4], 0
    // Predicated region
    $region2: #{gpt_forward.17} parent=1 // pred_check
      _
    $region3: #{gpt_forward.17} parent=1 // pred_check_branch
      %11 = sbr.rel (0) target = $region5
    $region4: #{gpt_forward.17} parent=1 // pred_region
      _
    $region5: #{gpt_forward.17} parent=1 // pred_fallthru
      _
    // Predicated region
    $region6: #{gpt_forward.17} parent=1 // pred_check
      _
    $region7: #{gpt_forward.17} parent=1 // pred_check_branch
      %13 = sbr.rel (0) target = $region9
    $region8: #{gpt_forward.17} parent=1 // pred_region
      _
    $region9: #{gpt_forward.17} parent=1 // pred_fallthru
      _
    // Predicated region
    $region10: #{gpt_forward.17} parent=1 // pred_check
      _
    $region11: #{gpt_forward.17} parent=1 // pred_check_branch
      %15 = sbr.rel (0) target = $region13
    $region12: #{gpt_forward.17} parent=1 // pred_region
      _
    $region13: #{gpt_forward.17} parent=1 // pred_fallthru
      _
    // Predicated region
    $region14: #{gpt_forward.17} parent=1 // pred_check
      _
    $region15: #{gpt_forward.17} parent=1 // pred_check_branch
      %17 = sbr.rel (0) target = $region17
    $region16: #{gpt_forward.17} parent=1 // pred_region
      _
    $region17: #{gpt_forward.17} parent=1 // pred_fallthru
      _
    %p19 = scmp.eq.s32.totalorder 0, 0
    // Predicated region
    $region18: #{gpt_forward.17} parent=1 // pred_check
      %p20 = pneg %p19
    $region19: #{gpt_forward.17} parent=1 // pred_check_branch
      %22 = sbr.rel (%p20) target = $region21
    $region20: #{gpt_forward.17} parent=1 // pred_region
      %v23 = vld [vmem:[%s0] sm:$0xff]
      %v24 = vld [vmem:[%s0 + $0x8] sm:$0xff]
      %v25 = vld [vmem:[%s1] sm:$0x1]
      %v26 = vld [vmem:[%s2] sm:$0x1]
      %vm27 = vcmask 261120
      %v28 = vsel %vm27, %v23, 0.0
      %29 = vadd.xlane.f32.xlu0 %v28
      %v30 = vpop.xlane.xlu0 %29
      %v31 = vsel %vm27, %v24, 0.0
      %32 = vadd.xlane.f32.xlu0 %v31
      %v33 = vpop.xlane.xlu0 %32
      %v34 = vrcp.pop 32.0
      %v35 = vmul.f32 %v30, %v34
      %v36 = vmul.f32 %v33, %v34
      %v37 = vsub.f32 %v23, %v35
      %v38 = vsub.f32 %v24, %v36
      %v39 = vmul.f32 %v37, %v37
      %v40 = vmul.f32 %v38, %v38
      %v41 = vsel %vm27, %v39, 0.0
      %42 = vadd.xlane.f32.xlu0 %v41
      %v43 = vpop.xlane.xlu0 %42
      %v44 = vsel %vm27, %v40, 0.0
      %45 = vadd.xlane.f32.xlu0 %v44
      %v46 = vpop.xlane.xlu0 %45
      %v47 = vmul.f32 %v43, %v34
      %v48 = vmul.f32 %v46, %v34
      %v49 = vadd.f32 %v47, 1e-05
      %v50 = vadd.f32 %v48, 1e-05
      %v51 = vrsqrt.pop %v49
      %v52 = vrsqrt.pop %v50
      %v53 = vmul.f32 %v37, %v51
      %v54 = vmul.f32 %v38, %v52
      %v56 = vlaneseq
      %v57 = vshrl.u32 %v56, 7
      %v58 = vsub.s32 0, %v57
      %v59 = vrot.slane %v25, %v58
      %v61 = vmul.f32 %v53, %v59
      %v62 = vmul.f32 %v54, %v59
      %v64 = vlaneseq
      %v65 = vshrl.u32 %v64, 7
      %v66 = vsub.s32 0, %v65
      %v67 = vrot.slane %v26, %v66
      %v69 = vadd.f32 %v61, %v67
      %v70 = vadd.f32 %v62, %v67
      %v71 = vpack.c.bf16 %v70, %v69
      %v73 = vunpack.c.l.b16 %v71
      %v74 = vunpack.c.h.b16 %v71
      %v75 = vpack.c.b16 %v73, %v73
      %v76 = vpack.c.b16 %v74, %v74
      %vm79 = vcmask 257024
      %80 = vst.msk [vmem:[#allocation2] sm:$0xf] %vm79, %v75
      %81 = vst.msk [vmem:[#allocation2 + $0x4] sm:$0xf] %vm79, %v76
    $region21: #{gpt_forward.17} parent=1 // pred_fallthru
      _
    %v82 = vld [vmem:[#allocation2] sm:$0xf]
    %v83 = vld [vmem:[#allocation2 + $0x4] sm:$0xf]
    %v84 = vld [vmem:[%s3] sm:$0xf]
    %v85 = vld [vmem:[%s3 + $0x4] sm:$0xf]
    %v86 = vld [vmem:[%s3 + $0x8] sm:$0xf]
    %v87 = vld [vmem:[%s3 + $0xc] sm:$0xf]
    %v88 = vld [vmem:[%s3 + $0x10] sm:$0xf]
    %v89 = vld [vmem:[%s3 + $0x14] sm:$0xf]
    %v90 = vld [vmem:[%s3 + $0x18] sm:$0xf]
    %v91 = vld [vmem:[%s3 + $0x1c] sm:$0xf]
    %v92 = vld [vmem:[%s3 + $0x20] sm:$0xf]
    %v93 = vld [vmem:[%s3 + $0x24] sm:$0xf]
    %v94 = vld [vmem:[%s3 + $0x28] sm:$0xf]
    %v95 = vld [vmem:[%s3 + $0x2c] sm:$0xf]
    %v96 = vld [vmem:[%s3 + $0x30] sm:$0xf]
    %v97 = vld [vmem:[%s3 + $0x34] sm:$0xf]
    %v98 = vld [vmem:[%s3 + $0x38] sm:$0xf]
    %v99 = vld [vmem:[%s3 + $0x3c] sm:$0xf]
    %v100 = vld [vmem:[%s3 + $0x40] sm:$0xf]
    %v101 = vld [vmem:[%s3 + $0x44] sm:$0xf]
    %v102 = vld [vmem:[%s3 + $0x48] sm:$0xf]
    %v103 = vld [vmem:[%s3 + $0x4c] sm:$0xf]
    %v104 = vld [vmem:[%s3 + $0x50] sm:$0xf]
    %v105 = vld [vmem:[%s3 + $0x54] sm:$0xf]
    %v106 = vld [vmem:[%s3 + $0x58] sm:$0xf]
    %v107 = vld [vmem:[%s3 + $0x5c] sm:$0xf]
    %v108 = vld [vmem:[%s3 + $0x60] sm:$0xf]
    %v109 = vld [vmem:[%s3 + $0x64] sm:$0xf]
    %v110 = vld [vmem:[%s3 + $0x68] sm:$0xf]
    %v111 = vld [vmem:[%s3 + $0x6c] sm:$0xf]
    %v112 = vld [vmem:[%s3 + $0x70] sm:$0xf]
    %v113 = vld [vmem:[%s3 + $0x74] sm:$0xf]
    %v114 = vld [vmem:[%s3 + $0x78] sm:$0xf]
    %v115 = vld [vmem:[%s3 + $0x7c] sm:$0xf]
    %v118 = vunpack.c.l.b16 %v82
    %v119 = vunpack.c.l.b16 %v83
    %v120 = vpack.c.b16 %v119, %v118
    %v153 = vunpack.c.l.b16 %v84
    %v154 = vunpack.c.l.b16 %v85
    %v155 = vunpack.c.l.b16 %v86
    %v156 = vunpack.c.l.b16 %v87
    %v157 = vunpack.c.l.b16 %v88
    %v158 = vunpack.c.l.b16 %v89
    %v159 = vunpack.c.l.b16 %v90
    %v160 = vunpack.c.l.b16 %v91
    %v161 = vunpack.c.l.b16 %v92
    %v162 = vunpack.c.l.b16 %v93
    %v163 = vunpack.c.l.b16 %v94
    %v164 = vunpack.c.l.b16 %v95
    %v165 = vunpack.c.l.b16 %v96
    %v166 = vunpack.c.l.b16 %v97
    %v167 = vunpack.c.l.b16 %v98
    %v168 = vunpack.c.l.b16 %v99
    %v169 = vunpack.c.l.b16 %v100
    %v170 = vunpack.c.l.b16 %v101
    %v171 = vunpack.c.l.b16 %v102
    %v172 = vunpack.c.l.b16 %v103
    %v173 = vunpack.c.l.b16 %v104
    %v174 = vunpack.c.l.b16 %v105
    %v175 = vunpack.c.l.b16 %v106
    %v176 = vunpack.c.l.b16 %v107
    %v177 = vunpack.c.l.b16 %v108
    %v178 = vunpack.c.l.b16 %v109
    %v179 = vunpack.c.l.b16 %v110
    %v180 = vunpack.c.l.b16 %v111
    %v181 = vunpack.c.l.b16 %v112
    %v182 = vunpack.c.l.b16 %v113
    %v183 = vunpack.c.l.b16 %v114
    %v184 = vunpack.c.l.b16 %v115
    %v185 = vpack.c.b16 %v154, %v153
    %v186 = vpack.c.b16 %v156, %v155
    %v187 = vpack.c.b16 %v158, %v157
    %v188 = vpack.c.b16 %v160, %v159
    %v189 = vpack.c.b16 %v162, %v161
    %v190 = vpack.c.b16 %v164, %v163
    %v191 = vpack.c.b16 %v166, %v165
    %v192 = vpack.c.b16 %v168, %v167
    %v193 = vpack.c.b16 %v170, %v169
    %v194 = vpack.c.b16 %v172, %v171
    %v195 = vpack.c.b16 %v174, %v173
    %v196 = vpack.c.b16 %v176, %v175
    %v197 = vpack.c.b16 %v178, %v177
    %v198 = vpack.c.b16 %v180, %v179
    %v199 = vpack.c.b16 %v182, %v181
    %v200 = vpack.c.b16 %v184, %v183
    %vm201 = vcmask 261120
    %v203 = vsel %vm201, %v120, 0
    %v206 = vsel %vm201, %v185, 0
    %v209 = vsel %vm201, %v186, 0
    %v212 = vsel %vm201, %v187, 0
    %v215 = vsel %vm201, %v188, 0
    %v218 = vsel %vm201, %v189, 0
    %v221 = vsel %vm201, %v190, 0
    %v224 = vsel %vm201, %v191, 0
    %v227 = vsel %vm201, %v192, 0
    %v230 = vsel %vm201, %v193, 0
    %v233 = vsel %vm201, %v194, 0
    %v236 = vsel %vm201, %v195, 0
    %v239 = vsel %vm201, %v196, 0
    %v242 = vsel %vm201, %v197, 0
    %v245 = vsel %vm201, %v198, 0
    %v248 = vsel %vm201, %v199, 0
    %v251 = vsel %vm201, %v200, 0
    %253 = vmatprep.subr.bf16.mxu0 0
    %254 = vmatpush1.bf16.xpose.msra.mxu0 %v227
    %255 = vmatprep.subr.bf16.mxu0 0
    %256 = vmatpush1.bf16.xpose.msra.mxu0 %v224
    %257 = vmatprep.subr.bf16.mxu0 0
    %258 = vmatpush1.bf16.xpose.msra.mxu0 %v221
    %259 = vmatprep.subr.bf16.mxu0 0
    %260 = vmatpush1.bf16.xpose.msra.mxu0 %v218
    %261 = vmatprep.subr.bf16.mxu0 0
    %262 = vmatpush1.bf16.xpose.msra.mxu0 %v215
    %263 = vmatprep.subr.bf16.mxu0 0
    %264 = vmatpush1.bf16.xpose.msra.mxu0 %v212
    %265 = vmatprep.subr.bf16.mxu0 0
    %266 = vmatpush1.bf16.xpose.msra.mxu0 %v209
    %267 = vmatprep.subr.bf16.mxu0 0
    %268 = vmatpush1.bf16.xpose.msra.mxu0 %v206
    %269 = vmatprep.subr.bf16.mxu0 0
    %270 = vmatpush2.bf16.xpose.msra.mxu0 %v251
    %271 = vmatprep.subr.bf16.mxu0 0
    %272 = vmatpush2.bf16.xpose.msra.mxu0 %v248
    %273 = vmatprep.subr.bf16.mxu0 0
    %274 = vmatpush2.bf16.xpose.msra.mxu0 %v245
    %275 = vmatprep.subr.bf16.mxu0 0
    %276 = vmatpush2.bf16.xpose.msra.mxu0 %v242
    %277 = vmatprep.subr.bf16.mxu0 0
    %278 = vmatpush2.bf16.xpose.msra.mxu0 %v239
    %279 = vmatprep.subr.bf16.mxu0 0
    %280 = vmatpush2.bf16.xpose.msra.mxu0 %v236
    %281 = vmatprep.subr.bf16.mxu0 0
    %282 = vmatpush2.bf16.xpose.msra.mxu0 %v233
    %283 = vmatprep.subr.bf16.mxu0 0
    %284 = vmatpush2.bf16.xpose.msra.mxu0 %v230
    %285 = vmatprep.mubr.bf16.mxu0 0
    %286 = vmatmul.mubr.bf16.gmra.mxu0 %v203
    %v287 = vpop.f32.mrf.mxu0
    %v288 = vadd.f32 0.0, %v287
    %v289 = vpop.f32.mrf.mxu0
    %v290 = vadd.f32 0.0, %v289
    %v291 = vpop.f32.mrf.mxu0
    %v292 = vadd.f32 0.0, %v291
    %v293 = vpop.f32.mrf.mxu0
    %v294 = vadd.f32 0.0, %v293
    %295 = vdwg.mxu0
    %296 = vst [vmem:[#allocation3] sm:$0xff] %v288
    %297 = vst [vmem:[#allocation3 + $0x8] sm:$0xff] %v290
    %298 = vst [vmem:[#allocation3 + $0x10] sm:$0xff] %v292
    %299 = vst [vmem:[#allocation3 + $0x18] sm:$0xff] %v294
    // Predicated region
    $region22: #{gpt_forward.17} parent=1 // pred_check
      _
    $region23: #{gpt_forward.17} parent=1 // pred_check_branch
      %301 = sbr.rel (0) target = $region25
    $region24: #{gpt_forward.17} parent=1 // pred_region
      %s303 = ssub.s32 512, 512
      %304 = vsyncadd [#allocation4], %s303
      %s305 = sshll.u32 [#allocation3], 4
      %s306 = int_to_ptr.vmem [resolvable:$true] %s305
      %311 = dma.vmem_to_hbm [thread:$0]  %s306, 512, %s4, [#allocation4], 256, 256, 16
    $region25: #{gpt_forward.17} parent=1 // pred_fallthru
      _
    // Predicated region
    $region26: #{gpt_forward.17} parent=1 // pred_check
      _
    $region27: #{gpt_forward.17} parent=1 // pred_check_branch
      %313 = sbr.rel (0) target = $region29
    $region28: #{gpt_forward.17} parent=1 // pred_region
      %314 = dma.done [#allocation4], 512
    $region29: #{gpt_forward.17} parent=1 // pred_fallthru
      _
    %315 = vsyncpa [#allocation4], 1

</llo_original>
